<compile_context>
chip_gen: v7x
topology: tpu7x:2x2x1
jax: 0.10.0
libtpu: 0.0.40
codegen_flags: <defaults>
</compile_context>

<pallas_src>
import functools
import math

import jax
import jax.numpy as jnp
from jax.experimental import pallas as pl
from jax.experimental.pallas import tpu as pltpu


_VMEM_LIMIT = 64 * 1024 * 1024  # explicit scoped-VMEM cap (<= physical on v7x)


# ----------------------------------------------------------------------------
# tiling helper
# ----------------------------------------------------------------------------
def _pick_tile(dim, preferred, align):
    """Largest multiple of `align` <= preferred that divides dim, else full dim."""
    if dim <= preferred:
        return dim
    t = (preferred // align) * align
    while t >= align:
        if dim % t == 0:
            return t
        t -= align
    return dim


# ----------------------------------------------------------------------------
# dense matmul (tiled, f32 accumulator, fused activation epilogue)
# ----------------------------------------------------------------------------
def _dense_kernel(x_ref, w_ref, b_ref, o_ref, acc_ref, *, activation):
    k = pl.program_id(2)

    @pl.when(k == 0)
    def _():
        acc_ref[...] = jnp.zeros_like(acc_ref)

    acc_ref[...] += jnp.dot(x_ref[...], w_ref[...],
                            preferred_element_type=jnp.float32)

    @pl.when(k == pl.num_programs(2) - 1)
    def _():
        y = acc_ref[...] + b_ref[...]              # epilogue in f32
        if activation == "relu":
            y = jnp.maximum(y, 0.0)
        elif activation == "gelu":                 # exact (erf) gelu, as in HF
            y = 0.5 * y * (1.0 + jax.lax.erf(y * (1.0 / math.sqrt(2.0))))
        elif activation == "tanh":
            y = jnp.tanh(y)
        o_ref[...] = y.astype(o_ref.dtype)


def dense(x, w, b, activation="none", out_dtype=jnp.bfloat16,
          tm=1024, tn=256, tk=512):
    M, K = x.shape
    _, N = w.shape
    tm = _pick_tile(M, tm, 8)
    tn = _pick_tile(N, tn, 128)
    tk = _pick_tile(K, tk, 128)
    grid = (M // tm, N // tn, K // tk)
    # TODO(synk): v5e-only pipeline_mode=pl.Buffered(3) on the weight spec and a
    # v6e int8-weight path were left out to keep one portable code path.
    return pl.pallas_call(
        functools.partial(_dense_kernel, activation=activation),
        out_shape=jax.ShapeDtypeStruct((M, N), out_dtype),
        grid=grid,
        in_specs=[
            pl.BlockSpec((tm, tk), lambda i, j, k: (i, k)),
            pl.BlockSpec((tk, tn), lambda i, j, k: (k, j)),
            pl.BlockSpec((1, tn), lambda i, j, k: (0, j)),
        ],
        out_specs=pl.BlockSpec((tm, tn), lambda i, j, k: (i, j)),
        scratch_shapes=[pltpu.VMEM((tm, tn), jnp.float32)],
        compiler_params=pltpu.CompilerParams(
            dimension_semantics=("parallel", "parallel", "arbitrary"),
            vmem_limit_bytes=_VMEM_LIMIT),
    )(x.astype(jnp.bfloat16), w.astype(jnp.bfloat16),
      b.reshape(1, N).astype(jnp.float32))


# ----------------------------------------------------------------------------
# dense + residual add + LayerNorm (fused epilogue)
# ----------------------------------------------------------------------------
def _dense_add_ln_kernel(x_ref, w_ref, b_ref, r_ref, g_ref, bt_ref,
                         o_ref, acc_ref, *, eps):
    k = pl.program_id(1)

    @pl.when(k == 0)
    def _():
        acc_ref[...] = jnp.zeros_like(acc_ref)

    acc_ref[...] += jnp.dot(x_ref[...], w_ref[...],
                            preferred_element_type=jnp.float32)

    @pl.when(k == pl.num_programs(1) - 1)
    def _():
        y = acc_ref[...] + b_ref[...] + r_ref[...].astype(jnp.float32)
        mean = jnp.mean(y, axis=-1, keepdims=True)
        var = jnp.mean(jnp.square(y - mean), axis=-1, keepdims=True)
        inv = jax.lax.rsqrt(var + eps)
        o_ref[...] = (((y - mean) * inv) * g_ref[...] + bt_ref[...]
                      ).astype(o_ref.dtype)


def dense_add_layernorm(x, w, b, residual, gamma, beta, eps=1e-12,
                        tm=512, tk=512):
    """out = LayerNorm(x @ w + b + residual)."""
    M, K = x.shape
    _, N = w.shape
    tm = _pick_tile(M, tm, 8)
    tk = _pick_tile(K, tk, 128)
    grid = (M // tm, K // tk)
    return pl.pallas_call(
        functools.partial(_dense_add_ln_kernel, eps=eps),
        out_shape=jax.ShapeDtypeStruct((M, N), jnp.bfloat16),
        grid=grid,
        in_specs=[
            pl.BlockSpec((tm, tk), lambda i, k: (i, k)),
            pl.BlockSpec((tk, N), lambda i, k: (k, 0)),
            pl.BlockSpec((1, N), lambda i, k: (0, 0)),
            pl.BlockSpec((tm, N), lambda i, k: (i, 0)),
            pl.BlockSpec((1, N), lambda i, k: (0, 0)),
            pl.BlockSpec((1, N), lambda i, k: (0, 0)),
        ],
        out_specs=pl.BlockSpec((tm, N), lambda i, k: (i, 0)),
        scratch_shapes=[pltpu.VMEM((tm, N), jnp.float32)],
        compiler_params=pltpu.CompilerParams(
            dimension_semantics=("parallel", "arbitrary"),
            vmem_limit_bytes=_VMEM_LIMIT),
    )(x.astype(jnp.bfloat16), w.astype(jnp.bfloat16),
      b.reshape(1, N).astype(jnp.float32),
      residual.astype(jnp.bfloat16),
      gamma.reshape(1, N).astype(jnp.float32),
      beta.reshape(1, N).astype(jnp.float32))


# ----------------------------------------------------------------------------
# standalone LayerNorm (embeddings)
# ----------------------------------------------------------------------------
def _layernorm_kernel(x_ref, g_ref, b_ref, o_ref, *, eps):
    x = x_ref[...].astype(jnp.float32)
    mean = jnp.mean(x, axis=-1, keepdims=True)
    var = jnp.mean(jnp.square(x - mean), axis=-1, keepdims=True)
    inv = jax.lax.rsqrt(var + eps)
    o_ref[...] = ((x - mean) * inv * g_ref[...] + b_ref[...]).astype(o_ref.dtype)


def layernorm(x, gamma, beta, eps=1e-12, tm=512):
    M, H = x.shape
    tm = _pick_tile(M, tm, 8)
    return pl.pallas_call(
        functools.partial(_layernorm_kernel, eps=eps),
        out_shape=jax.ShapeDtypeStruct((M, H), jnp.bfloat16),
        grid=(M // tm,),
        in_specs=[
            pl.BlockSpec((tm, H), lambda i: (i, 0)),
            pl.BlockSpec((1, H), lambda i: (0, 0)),
            pl.BlockSpec((1, H), lambda i: (0, 0)),
        ],
        out_specs=pl.BlockSpec((tm, H), lambda i: (i, 0)),
        compiler_params=pltpu.CompilerParams(dimension_semantics=("parallel",)),
    )(x, gamma.reshape(1, H).astype(jnp.float32),
      beta.reshape(1, H).astype(jnp.float32))


# ----------------------------------------------------------------------------
# flash-style multi-head attention: grid=(B*heads, q-tiles, kv-tiles)
# ----------------------------------------------------------------------------
def _flash_attn_kernel(q_ref, k_ref, v_ref, bias_ref, o_ref,
                       m_sc, l_sc, acc_sc, *, scale):
    ki = pl.program_id(2)

    @pl.when(ki == 0)
    def _():
        m_sc[...] = jnp.full(m_sc.shape, -jnp.inf, jnp.float32)
        l_sc[...] = jnp.zeros(l_sc.shape, jnp.float32)
        acc_sc[...] = jnp.zeros(acc_sc.shape, jnp.float32)

    q = q_ref[0]                                  # (tq, dh)  bf16
    k = k_ref[0]                                  # (tkv, dh) bf16
    v = v_ref[0]                                  # (tkv, dh) bf16
    # scores = (q @ k^T) * scale + mask_bias, all in f32
    s = jax.lax.dot_general(q, k, (((1,), (1,)), ((), ())),
                            preferred_element_type=jnp.float32)     # (tq, tkv)
    s = s * scale + bias_ref[0]                   # (1, tkv) broadcasts

    m_prev = m_sc[...]
    m_new = jnp.maximum(m_prev, jnp.max(s, axis=-1, keepdims=True))
    alpha = jnp.exp(m_prev - m_new)
    p = jnp.exp(s - m_new)
    l_sc[...] = alpha * l_sc[...] + jnp.sum(p, axis=-1, keepdims=True)
    acc_sc[...] = alpha * acc_sc[...] + jax.lax.dot_general(
        p.astype(v.dtype), v, (((1,), (0,)), ((), ())),
        preferred_element_type=jnp.float32)                          # (tq, dh)
    m_sc[...] = m_new

    @pl.when(ki == pl.num_programs(2) - 1)
    def _():
        o_ref[0] = (acc_sc[...] *
                    pl.reciprocal(l_sc[...], approx=True)).astype(o_ref.dtype)


def mha_attention(q, k, v, mask_bias, *, scale, tq=256, tkv=512):
    """q,k,v: (B*heads, S, dh) bf16; mask_bias: (B*heads, 1, S) f32."""
    BH, S, dh = q.shape
    tq = _pick_tile(S, tq, 8)
    tkv = _pick_tile(S, tkv, 128)
    grid = (BH, S // tq, S // tkv)
    return pl.pallas_call(
        functools.partial(_flash_attn_kernel, scale=scale),
        out_shape=jax.ShapeDtypeStruct((BH, S, dh), jnp.bfloat16),
        grid=grid,
        in_specs=[
            pl.BlockSpec((1, tq, dh), lambda bh, qi, ki: (bh, qi, 0)),
            pl.BlockSpec((1, tkv, dh), lambda bh, qi, ki: (bh, ki, 0)),
            pl.BlockSpec((1, tkv, dh), lambda bh, qi, ki: (bh, ki, 0)),
            pl.BlockSpec((1, 1, tkv), lambda bh, qi, ki: (bh, 0, ki)),
        ],
        out_specs=pl.BlockSpec((1, tq, dh), lambda bh, qi, ki: (bh, qi, 0)),
        scratch_shapes=[pltpu.VMEM((tq, 1), jnp.float32),
                        pltpu.VMEM((tq, 1), jnp.float32),
                        pltpu.VMEM((tq, dh), jnp.float32)],
        compiler_params=pltpu.CompilerParams(
            dimension_semantics=("parallel", "parallel", "arbitrary"),
            vmem_limit_bytes=_VMEM_LIMIT),
    )(q, k, v, mask_bias)


# ----------------------------------------------------------------------------
# fused pooler + 3-layer classification head (weights resident in VMEM)
# ----------------------------------------------------------------------------
def _head_kernel(x_ref, wp_ref, bp_ref, w1_ref, b1_ref, w2_ref, b2_ref,
                 w3_ref, b3_ref, o_ref):
    x = x_ref[...]                                                  # (B, H) bf16
    p = jnp.tanh(jnp.dot(x, wp_ref[...], preferred_element_type=jnp.float32)
                 + bp_ref[...])
    h = jnp.dot(p.astype(jnp.bfloat16), w1_ref[...],
                preferred_element_type=jnp.float32) + b1_ref[...]
    h = jnp.maximum(h, 0.0)
    h = jnp.dot(h.astype(jnp.bfloat16), w2_ref[...],
                preferred_element_type=jnp.float32) + b2_ref[...]
    h = jnp.maximum(h, 0.0)
    o_ref[...] = (jnp.dot(h.astype(jnp.bfloat16), w3_ref[...],
                          preferred_element_type=jnp.float32) + b3_ref[...])


def pooler_and_head(cls, pooler, head1, head2, head3, num_classes):
    """tanh(cls@Wp+bp) -> ReLU(.@W1+b1) -> ReLU(.@W2+b2) -> .@W3+b3, one call."""
    B, H = cls.shape
    nc_pad = ((num_classes + 127) // 128) * 128     # lane-dense final store
    w3 = jnp.pad(head3["w"].astype(jnp.bfloat16),
                 ((0, 0), (0, nc_pad - num_classes)))
    b3 = jnp.pad(head3["b"].astype(jnp.float32), (0, nc_pad - num_classes))
    logits_pad = pl.pallas_call(
        _head_kernel,
        out_shape=jax.ShapeDtypeStruct((B, nc_pad), jnp.float32),
        compiler_params=pltpu.CompilerParams(vmem_limit_bytes=_VMEM_LIMIT),
    )(cls.astype(jnp.bfloat16),
      pooler["w"].astype(jnp.bfloat16),
      pooler["b"].reshape(1, -1).astype(jnp.float32),
      head1["w"].astype(jnp.bfloat16),
      head1["b"].reshape(1, -1).astype(jnp.float32),
      head2["w"].astype(jnp.bfloat16),
      head2["b"].reshape(1, -1).astype(jnp.float32),
      w3, b3.reshape(1, -1))
    return logits_pad[:, :num_classes]


# ----------------------------------------------------------------------------
# Deterministic synthetic parameters (BERT-style shapes, small config)
# ----------------------------------------------------------------------------
def init_params(key, cfg):
    H, I, NC = cfg["hidden"], cfg["inter"], cfg["num_classes"]
    keys = iter(jax.random.split(key, 128))

    def dense_p(din, dout):
        return {"w": (jax.random.normal(next(keys), (din, dout), jnp.float32)
                      * 0.02).astype(jnp.bfloat16),
                "b": jnp.zeros((dout,), jnp.float32)}

    params = {
        "word_emb": jax.random.normal(next(keys), (cfg["vocab"], H), jnp.float32) * 0.02,
        "pos_emb": jax.random.normal(next(keys), (cfg["max_pos"], H), jnp.float32) * 0.02,
        "type_emb": jax.random.normal(next(keys), (cfg["type_vocab"], H), jnp.float32) * 0.02,
        "emb_ln_g": jnp.ones((H,), jnp.float32),
        "emb_ln_b": jnp.zeros((H,), jnp.float32),
        "layers": [],
        "pooler": dense_p(H, H),
        "head1": dense_p(H, 1024),
        "head2": dense_p(1024, 256),
        "head3": dense_p(256, NC),
    }
    for _ in range(cfg["layers"]):
        wq = jax.random.normal(next(keys), (H, H), jnp.float32) * 0.02
        wk = jax.random.normal(next(keys), (H, H), jnp.float32) * 0.02
        wv = jax.random.normal(next(keys), (H, H), jnp.float32) * 0.02
        params["layers"].append({
            # fused QKV projection (scale applied in f32 inside attention)
            "qkv": {"w": jnp.concatenate([wq, wk, wv], axis=1).astype(jnp.bfloat16),
                    "b": jnp.zeros((3 * H,), jnp.float32)},
            "ao": dense_p(H, H),
            "attn_ln_g": jnp.ones((H,), jnp.float32),
            "attn_ln_b": jnp.zeros((H,), jnp.float32),
            "inter": dense_p(H, I),
            "out": dense_p(I, H),
            "out_ln_g": jnp.ones((H,), jnp.float32),
            "out_ln_b": jnp.zeros((H,), jnp.float32),
        })
    return params


# ----------------------------------------------------------------------------
# Forward pass (glue in JAX, hot paths in Pallas)
# ----------------------------------------------------------------------------
def bert_net_forward(params, input_ids, mask, cfg):
    B, S = input_ids.shape
    H, nh = cfg["hidden"], cfg["heads"]
    dh = H // nh
    scale = 1.0 / math.sqrt(dh)

    # embeddings (gather kept in JAX glue); token_type_ids == 0
    # TODO(synk): embedding gather left in plain JAX (no rectangular-tile DMA pattern).
    emb = (jnp.take(params["word_emb"], input_ids, axis=0)
           + params["pos_emb"][:S][None, :, :]
           + params["type_emb"][0][None, None, :])
    x = layernorm(emb.astype(jnp.bfloat16).reshape(B * S, H),
                  params["emb_ln_g"], params["emb_ln_b"])

    # extended attention mask bias, broadcast per head: (B*nh, 1, S) f32
    mask_bias = ((1.0 - mask.astype(jnp.float32)) * -10000.0).reshape(B, 1, 1, S)
    mask_bias = jnp.broadcast_to(mask_bias, (B, nh, 1, S)).reshape(B * nh, 1, S)

    for layer in params["layers"]:
        qkv = dense(x, layer["qkv"]["w"], layer["qkv"]["b"])          # (B*S, 3H)
        # layout plumbing to head-major (3, B*nh, S, dh) for the flash kernel
        qkv = qkv.reshape(B, S, 3, nh, dh).transpose(2, 0, 3, 1, 4)
        qkv = qkv.reshape(3, B * nh, S, dh)
        ctx = mha_attention(qkv[0], qkv[1], qkv[2], mask_bias, scale=scale)
        ctx = ctx.reshape(B, nh, S, dh).transpose(0, 2, 1, 3).reshape(B * S, H)
        x = dense_add_layernorm(ctx, layer["ao"]["w"], layer["ao"]["b"],
                                x, layer["attn_ln_g"], layer["attn_ln_b"])
        inter = dense(x, layer["inter"]["w"], layer["inter"]["b"],
                      activation="gelu")
        x = dense_add_layernorm(inter, layer["out"]["w"], layer["out"]["b"],
                                x, layer["out_ln_g"], layer["out_ln_b"])

    cls = x.reshape(B, S, H)[:, 0, :]                                 # (B, H)
    logits = pooler_and_head(cls, params["pooler"], params["head1"],
                             params["head2"], params["head3"],
                             cfg["num_classes"])
    return logits


if __name__ == "__main__":
    cfg = dict(vocab=100, hidden=32, layers=2, heads=2, inter=64,
               max_pos=16, type_vocab=2, num_classes=4)
    B, S = 2, 8

    params = init_params(jax.random.PRNGKey(0), cfg)
    input_ids = jax.random.randint(jax.random.PRNGKey(1), (B, S), 0, cfg["vocab"])
    # attention mask: first sequence fully valid, second padded after 5 tokens
    mask = (jnp.arange(S)[None, :] < jnp.array([[S], [5]])).astype(jnp.float32)

    fwd = jax.jit(functools.partial(bert_net_forward, cfg=cfg))
    out = fwd(params, input_ids, mask)
    jax.block_until_ready(out)
    assert out.shape == (B, cfg["num_classes"])
    print("KERNEL_OK")
</pallas_src>

<mosaic_0001>
module attributes {stable_mosaic.version = 11 : i64} {
  func.func @_layernorm_kernel(%arg0: i32, %arg1: memref<16x32xbf16, #tpu.memory_space<vmem>>, %arg2: memref<1x32xf32, #tpu.memory_space<vmem>>, %arg3: memref<1x32xf32, #tpu.memory_space<vmem>>, %arg4: memref<16x32xbf16, #tpu.memory_space<vmem>>) attributes {dimension_semantics = [#tpu.dimension_semantics<parallel>], iteration_bounds = array<i64: 1>, scalar_prefetch = 0 : i64, scratch_operands = 0 : i64, tpu.core_type = #tpu.core_type<tc>, window_params = [{transform_indices = @transform_0, window_bounds = array<i64: 16, 32>}, {pipeline_mode = #tpu.pipeline_mode<synchronous>, transform_indices = @transform_1, window_bounds = array<i64: 1, 32>}, {pipeline_mode = #tpu.pipeline_mode<synchronous>, transform_indices = @transform_2, window_bounds = array<i64: 1, 32>}, {transform_indices = @transform_3, window_bounds = array<i64: 16, 32>}]} {
    %c0 = arith.constant 0 : index
    %c0_0 = arith.constant 0 : index
    %0 = vector.load %arg1[%c0, %c0_0] : memref<16x32xbf16, #tpu.memory_space<vmem>>, vector<16x32xbf16>
    %1 = arith.extf %0 : vector<16x32xbf16> to vector<16x32xf32>
    %cst = arith.constant dense<0.000000e+00> : vector<16xf32>
    %2 = vector.multi_reduction <add>, %1, %cst [1] : vector<16x32xf32> to vector<16xf32>
    %3 = vector.shape_cast %2 : vector<16xf32> to vector<16x1xf32>
    %cst_1 = arith.constant 3.200000e+01 : f32
    %4 = vector.broadcast %cst_1 : f32 to vector<16x1xf32>
    %5 = arith.divf %3, %4 : vector<16x1xf32>
    %6 = vector.broadcast %5 : vector<16x1xf32> to vector<16x32xf32>
    %7 = arith.subf %1, %6 : vector<16x32xf32>
    %8 = arith.mulf %7, %7 : vector<16x32xf32>
    %cst_2 = arith.constant dense<0.000000e+00> : vector<16xf32>
    %9 = vector.multi_reduction <add>, %8, %cst_2 [1] : vector<16x32xf32> to vector<16xf32>
    %10 = vector.shape_cast %9 : vector<16xf32> to vector<16x1xf32>
    %cst_3 = arith.constant 3.200000e+01 : f32
    %11 = vector.broadcast %cst_3 : f32 to vector<16x1xf32>
    %12 = arith.divf %10, %11 : vector<16x1xf32>
    %cst_4 = arith.constant 9.99999996E-13 : f32
    %13 = vector.broadcast %cst_4 : f32 to vector<16x1xf32>
    %14 = arith.addf %12, %13 : vector<16x1xf32>
    %15 = math.rsqrt %14 : vector<16x1xf32>
    %16 = vector.broadcast %5 : vector<16x1xf32> to vector<16x32xf32>
    %17 = arith.subf %1, %16 : vector<16x32xf32>
    %18 = vector.broadcast %15 : vector<16x1xf32> to vector<16x32xf32>
    %19 = arith.mulf %17, %18 : vector<16x32xf32>
    %c0_5 = arith.constant 0 : index
    %c0_6 = arith.constant 0 : index
    %20 = vector.load %arg2[%c0_5, %c0_6] : memref<1x32xf32, #tpu.memory_space<vmem>>, vector<1x32xf32>
    %21 = vector.broadcast %20 : vector<1x32xf32> to vector<16x32xf32>
    %22 = arith.mulf %19, %21 : vector<16x32xf32>
    %c0_7 = arith.constant 0 : index
    %c0_8 = arith.constant 0 : index
    %23 = vector.load %arg3[%c0_7, %c0_8] : memref<1x32xf32, #tpu.memory_space<vmem>>, vector<1x32xf32>
    %24 = vector.broadcast %23 : vector<1x32xf32> to vector<16x32xf32>
    %25 = arith.addf %22, %24 : vector<16x32xf32>
    %26 = arith.truncf %25 : vector<16x32xf32> to vector<16x32xbf16>
    %c0_9 = arith.constant 0 : index
    %c0_10 = arith.constant 0 : index
    %27 = vector.load %arg4[%c0_9, %c0_10] : memref<16x32xbf16, #tpu.memory_space<vmem>>, vector<16x32xbf16>
    tpu.vector_store %arg4[%c0_9, %c0_10], %26 {strides = array<i32>} : memref<16x32xbf16, #tpu.memory_space<vmem>>, vector<16x32xbf16>,
    return
  }
  func.func @transform_0(%arg0: i32) -> (i32, i32) {
    %c0_i32 = arith.constant 0 : i32
    %c0_i32_0 = arith.constant 0 : i32
    return %arg0, %c0_i32 : i32, i32
  }
  func.func @transform_1(%arg0: i32) -> (i32, i32) {
    %c0_i32 = arith.constant 0 : i32
    %c0_i32_0 = arith.constant 0 : i32
    %c0_i32_1 = arith.constant 0 : i32
    return %c0_i32, %c0_i32_0 : i32, i32
  }
  func.func @transform_2(%arg0: i32) -> (i32, i32) {
    %c0_i32 = arith.constant 0 : i32
    %c0_i32_0 = arith.constant 0 : i32
    %c0_i32_1 = arith.constant 0 : i32
    return %c0_i32, %c0_i32_0 : i32, i32
  }
  func.func @transform_3(%arg0: i32) -> (i32, i32) {
    %c0_i32 = arith.constant 0 : i32
    %c0_i32_0 = arith.constant 0 : i32
    return %arg0, %c0_i32 : i32, i32
  }
}

module attributes {stable_mosaic.version = 11 : i64} {
  func.func @_dense_kernel(%arg0: i32, %arg1: i32, %arg2: i32, %arg3: memref<16x32xbf16, #tpu.memory_space<vmem>>, %arg4: memref<32x96xbf16, #tpu.memory_space<vmem>>, %arg5: memref<1x96xf32, #tpu.memory_space<vmem>>, %arg6: memref<16x96xbf16, #tpu.memory_space<vmem>>, %arg7: memref<16x96xf32, #tpu.memory_space<vmem>>) attributes {dimension_semantics = [#tpu.dimension_semantics<parallel>, #tpu.dimension_semantics<parallel>, #tpu.dimension_semantics<arbitrary>], iteration_bounds = array<i64: 1, 1, 1>, scalar_prefetch = 0 : i64, scratch_operands = 1 : i64, tpu.core_type = #tpu.core_type<tc>, window_params = [{transform_indices = @transform_0, window_bounds = array<i64: 16, 32>}, {transform_indices = @transform_1, window_bounds = array<i64: 32, 96>}, {transform_indices = @transform_2, window_bounds = array<i64: 1, 96>}, {transform_indices = @transform_3, window_bounds = array<i64: 16, 96>}]} {
    %c0_i32 = arith.constant 0 : i32
    %0 = arith.cmpi eq, %arg2, %c0_i32 : i32
    %1 = arith.extui %0 : i1 to i32
    %c0_i32_0 = arith.constant 0 : i32
    %2 = arith.cmpi ne, %1, %c0_i32_0 : i32
    scf.if %2 {
      %cst_10 = arith.constant 0.000000e+00 : f32
      %12 = vector.broadcast %cst_10 : f32 to vector<16x96xf32>
      %c0_11 = arith.constant 0 : index
      %c0_12 = arith.constant 0 : index
      %13 = vector.load %arg7[%c0_11, %c0_12] : memref<16x96xf32, #tpu.memory_space<vmem>>, vector<16x96xf32>
      tpu.vector_store %arg7[%c0_11, %c0_12], %12 {strides = array<i32>} : memref<16x96xf32, #tpu.memory_space<vmem>>, vector<16x96xf32>,
    } else {
    }
    %c0 = arith.constant 0 : index
    %c0_1 = arith.constant 0 : index
    %3 = vector.load %arg7[%c0, %c0_1] : memref<16x96xf32, #tpu.memory_space<vmem>>, vector<16x96xf32>
    %c0_2 = arith.constant 0 : index
    %c0_3 = arith.constant 0 : index
    %4 = vector.load %arg3[%c0_2, %c0_3] : memref<16x32xbf16, #tpu.memory_space<vmem>>, vector<16x32xbf16>
    %c0_4 = arith.constant 0 : index
    %c0_5 = arith.constant 0 : index
    %5 = vector.load %arg4[%c0_4, %c0_5] : memref<32x96xbf16, #tpu.memory_space<vmem>>, vector<32x96xbf16>
    %cst = arith.constant dense<0.000000e+00> : vector<16x96xf32>
    %6 = tpu.matmul %4, %5, %cst {dimension_numbers = #tpu.dot_dimension_numbers<[1], [0], [0], [1], [0, 0, 1, 1], [], []>} : vector<16x32xbf16>, vector<32x96xbf16>, vector<16x96xf32> -> vector<16x96xf32>
    %7 = arith.addf %3, %6 : vector<16x96xf32>
    %c0_6 = arith.constant 0 : index
    %c0_7 = arith.constant 0 : index
    %8 = vector.load %arg7[%c0_6, %c0_7] : memref<16x96xf32, #tpu.memory_space<vmem>>, vector<16x96xf32>
    tpu.vector_store %arg7[%c0_6, %c0_7], %7 {strides = array<i32>} : memref<16x96xf32, #tpu.memory_space<vmem>>, vector<16x96xf32>,
    %c0_i32_8 = arith.constant 0 : i32
    %9 = arith.cmpi eq, %arg2, %c0_i32_8 : i32
    %10 = arith.extui %9 : i1 to i32
    %c0_i32_9 = arith.constant 0 : i32
    %11 = arith.cmpi ne, %10, %c0_i32_9 : i32
    scf.if %11 {
      %c0_10 = arith.constant 0 : index
      %c0_11 = arith.constant 0 : index
      %12 = vector.load %arg7[%c0_10, %c0_11] : memref<16x96xf32, #tpu.memory_space<vmem>>, vector<16x96xf32>
      %c0_12 = arith.constant 0 : index
      %c0_13 = arith.constant 0 : index
      %13 = vector.load %arg5[%c0_12, %c0_13] : memref<1x96xf32, #tpu.memory_space<vmem>>, vector<1x96xf32>
      %14 = vector.broadcast %13 : vector<1x96xf32> to vector<16x96xf32>
      %15 = arith.addf %12, %14 : vector<16x96xf32>
      %16 = arith.truncf %15 : vector<16x96xf32> to vector<16x96xbf16>
      %c0_14 = arith.constant 0 : index
      %c0_15 = arith.constant 0 : index
      %17 = vector.load %arg6[%c0_14, %c0_15] : memref<16x96xbf16, #tpu.memory_space<vmem>>, vector<16x96xbf16>
      tpu.vector_store %arg6[%c0_14, %c0_15], %16 {strides = array<i32>} : memref<16x96xbf16, #tpu.memory_space<vmem>>, vector<16x96xbf16>,
    } else {
    }
    return
  }
  func.func @transform_0(%arg0: i32, %arg1: i32, %arg2: i32) -> (i32, i32) {
    %c0_i32 = arith.constant 0 : i32
    return %arg0, %arg2 : i32, i32
  }
  func.func @transform_1(%arg0: i32, %arg1: i32, %arg2: i32) -> (i32, i32) {
    %c0_i32 = arith.constant 0 : i32
    return %arg2, %arg1 : i32, i32
  }
  func.func @transform_2(%arg0: i32, %arg1: i32, %arg2: i32) -> (i32, i32) {
    %c0_i32 = arith.constant 0 : i32
    %c0_i32_0 = arith.constant 0 : i32
    return %c0_i32, %arg1 : i32, i32
  }
  func.func @transform_3(%arg0: i32, %arg1: i32, %arg2: i32) -> (i32, i32) {
    %c0_i32 = arith.constant 0 : i32
    return %arg0, %arg1 : i32, i32
  }
}

module attributes {stable_mosaic.version = 11 : i64} {
  func.func @_flash_attn_kernel(%arg0: i32, %arg1: i32, %arg2: i32, %arg3: memref<1x8x16xbf16, #tpu.memory_space<vmem>>, %arg4: memref<1x8x16xbf16, #tpu.memory_space<vmem>>, %arg5: memref<1x8x16xbf16, #tpu.memory_space<vmem>>, %arg6: memref<1x1x8xf32, #tpu.memory_space<vmem>>, %arg7: memref<1x8x16xbf16, #tpu.memory_space<vmem>>, %arg8: memref<8x1xf32, #tpu.memory_space<vmem>>, %arg9: memref<8x1xf32, #tpu.memory_space<vmem>>, %arg10: memref<8x16xf32, #tpu.memory_space<vmem>>) attributes {dimension_semantics = [#tpu.dimension_semantics<parallel>, #tpu.dimension_semantics<parallel>, #tpu.dimension_semantics<arbitrary>], iteration_bounds = array<i64: 4, 1, 1>, scalar_prefetch = 0 : i64, scratch_operands = 3 : i64, tpu.core_type = #tpu.core_type<tc>, window_params = [{transform_indices = @transform_0, window_bounds = array<i64: 1, 8, 16>}, {transform_indices = @transform_1, window_bounds = array<i64: 1, 8, 16>}, {transform_indices = @transform_2, window_bounds = array<i64: 1, 8, 16>}, {transform_indices = @transform_3, window_bounds = array<i64: 1, 1, 8>}, {transform_indices = @transform_4, window_bounds = array<i64: 1, 8, 16>}]} {
    %c0_i32 = arith.constant 0 : i32
    %0 = arith.cmpi eq, %arg2, %c0_i32 : i32
    %1 = arith.extui %0 : i1 to i32
    %c0_i32_0 = arith.constant 0 : i32
    %2 = arith.cmpi ne, %1, %c0_i32_0 : i32
    scf.if %2 {
      %cst_30 = arith.constant 0xFF800000 : f32
      %42 = vector.broadcast %cst_30 : f32 to vector<8x1xf32>
      %c0_31 = arith.constant 0 : index
      %c0_32 = arith.constant 0 : index
      %43 = vector.load %arg8[%c0_31, %c0_32] : memref<8x1xf32, #tpu.memory_space<vmem>>, vector<8x1xf32>
      tpu.vector_store %arg8[%c0_31, %c0_32], %42 {strides = array<i32>} : memref<8x1xf32, #tpu.memory_space<vmem>>, vector<8x1xf32>,
      %cst_33 = arith.constant 0.000000e+00 : f32
      %44 = vector.broadcast %cst_33 : f32 to vector<8x1xf32>
      %c0_34 = arith.constant 0 : index
      %c0_35 = arith.constant 0 : index
      %45 = vector.load %arg9[%c0_34, %c0_35] : memref<8x1xf32, #tpu.memory_space<vmem>>, vector<8x1xf32>
      tpu.vector_store %arg9[%c0_34, %c0_35], %44 {strides = array<i32>} : memref<8x1xf32, #tpu.memory_space<vmem>>, vector<8x1xf32>,
      %cst_36 = arith.constant 0.000000e+00 : f32
      %46 = vector.broadcast %cst_36 : f32 to vector<8x16xf32>
      %c0_37 = arith.constant 0 : index
      %c0_38 = arith.constant 0 : index
      %47 = vector.load %arg10[%c0_37, %c0_38] : memref<8x16xf32, #tpu.memory_space<vmem>>, vector<8x16xf32>
      tpu.vector_store %arg10[%c0_37, %c0_38], %46 {strides = array<i32>} : memref<8x16xf32, #tpu.memory_space<vmem>>, vector<8x16xf32>,
    } else {
    }
    %c0 = arith.constant 0 : index
    %c0_1 = arith.constant 0 : index
    %c0_2 = arith.constant 0 : index
    %3 = vector.load %arg3[%c0, %c0_1, %c0_2] : memref<1x8x16xbf16, #tpu.memory_space<vmem>>, vector<1x8x16xbf16>
    %4 = vector.shape_cast %3 : vector<1x8x16xbf16> to vector<8x16xbf16>
    %c0_3 = arith.constant 0 : index
    %c0_4 = arith.constant 0 : index
    %c0_5 = arith.constant 0 : index
    %5 = vector.load %arg4[%c0_3, %c0_4, %c0_5] : memref<1x8x16xbf16, #tpu.memory_space<vmem>>, vector<1x8x16xbf16>
    %6 = vector.shape_cast %5 : vector<1x8x16xbf16> to vector<8x16xbf16>
    %c0_6 = arith.constant 0 : index
    %c0_7 = arith.constant 0 : index
    %c0_8 = arith.constant 0 : index
    %7 = vector.load %arg5[%c0_6, %c0_7, %c0_8] : memref<1x8x16xbf16, #tpu.memory_space<vmem>>, vector<1x8x16xbf16>
    %8 = vector.shape_cast %7 : vector<1x8x16xbf16> to vector<8x16xbf16>
    %cst = arith.constant dense<0.000000e+00> : vector<8x8xf32>
    %9 = tpu.matmul %4, %6, %cst {dimension_numbers = #tpu.dot_dimension_numbers<[1], [1], [0], [0], [0, 0, 1, 0], [], []>} : vector<8x16xbf16>, vector<8x16xbf16>, vector<8x8xf32> -> vector<8x8xf32>
    %cst_9 = arith.constant 2.500000e-01 : f32
    %10 = vector.broadcast %cst_9 : f32 to vector<8x8xf32>
    %11 = arith.mulf %9, %10 : vector<8x8xf32>
    %c0_10 = arith.constant 0 : index
    %c0_11 = arith.constant 0 : index
    %c0_12 = arith.constant 0 : index
    %12 = vector.load %arg6[%c0_10, %c0_11, %c0_12] : memref<1x1x8xf32, #tpu.memory_space<vmem>>, vector<1x1x8xf32>
    %13 = vector.shape_cast %12 : vector<1x1x8xf32> to vector<1x8xf32>
    %14 = vector.broadcast %13 : vector<1x8xf32> to vector<8x8xf32>
    %15 = arith.addf %11, %14 : vector<8x8xf32>
    %c0_13 = arith.constant 0 : index
    %c0_14 = arith.constant 0 : index
    %16 = vector.load %arg8[%c0_13, %c0_14] : memref<8x1xf32, #tpu.memory_space<vmem>>, vector<8x1xf32>
    %cst_15 = arith.constant dense<0xFF800000> : vector<8xf32>
    %17 = vector.multi_reduction <maximumf>, %15, %cst_15 [1] : vector<8x8xf32> to vector<8xf32>
    %18 = vector.shape_cast %17 : vector<8xf32> to vector<8x1xf32>
    %19 = arith.maximumf %16, %18 : vector<8x1xf32>
    %20 = arith.subf %16, %19 : vector<8x1xf32>
    %21 = math.exp %20 : vector<8x1xf32>
    %22 = vector.broadcast %19 : vector<8x1xf32> to vector<8x8xf32>
    %23 = arith.subf %15, %22 : vector<8x8xf32>
    %24 = math.exp %23 : vector<8x8xf32>
    %c0_16 = arith.constant 0 : index
    %c0_17 = arith.constant 0 : index
    %25 = vector.load %arg9[%c0_16, %c0_17] : memref<8x1xf32, #tpu.memory_space<vmem>>, vector<8x1xf32>
    %26 = arith.mulf %21, %25 : vector<8x1xf32>
    %cst_18 = arith.constant dense<0.000000e+00> : vector<8xf32>
    %27 = vector.multi_reduction <add>, %24, %cst_18 [1] : vector<8x8xf32> to vector<8xf32>
    %28 = vector.shape_cast %27 : vector<8xf32> to vector<8x1xf32>
    %29 = arith.addf %26, %28 : vector<8x1xf32>
    %c0_19 = arith.constant 0 : index
    %c0_20 = arith.constant 0 : index
    %30 = vector.load %arg9[%c0_19, %c0_20] : memref<8x1xf32, #tpu.memory_space<vmem>>, vector<8x1xf32>
    tpu.vector_store %arg9[%c0_19, %c0_20], %29 {strides = array<i32>} : memref<8x1xf32, #tpu.memory_space<vmem>>, vector<8x1xf32>,
    %c0_21 = arith.constant 0 : index
    %c0_22 = arith.constant 0 : index
    %31 = vector.load %arg10[%c0_21, %c0_22] : memref<8x16xf32, #tpu.memory_space<vmem>>, vector<8x16xf32>
    %32 = vector.broadcast %21 : vector<8x1xf32> to vector<8x16xf32>
    %33 = arith.mulf %32, %31 : vector<8x16xf32>
    %34 = arith.truncf %24 : vector<8x8xf32> to vector<8x8xbf16>
    %cst_23 = arith.constant dense<0.000000e+00> : vector<8x16xf32>
    %35 = tpu.matmul %34, %8, %cst_23 {dimension_numbers = #tpu.dot_dimension_numbers<[1], [0], [0], [1], [0, 0, 1, 1], [], []>} : vector<8x8xbf16>, vector<8x16xbf16>, vector<8x16xf32> -> vector<8x16xf32>
    %36 = arith.addf %33, %35 : vector<8x16xf32>
    %c0_24 = arith.constant 0 : index
    %c0_25 = arith.constant 0 : index
    %37 = vector.load %arg10[%c0_24, %c0_25] : memref<8x16xf32, #tpu.memory_space<vmem>>, vector<8x16xf32>
    tpu.vector_store %arg10[%c0_24, %c0_25], %36 {strides = array<i32>} : memref<8x16xf32, #tpu.memory_space<vmem>>, vector<8x16xf32>,
    %c0_26 = arith.constant 0 : index
    %c0_27 = arith.constant 0 : index
    %38 = vector.load %arg8[%c0_26, %c0_27] : memref<8x1xf32, #tpu.memory_space<vmem>>, vector<8x1xf32>
    tpu.vector_store %arg8[%c0_26, %c0_27], %19 {strides = array<i32>} : memref<8x1xf32, #tpu.memory_space<vmem>>, vector<8x1xf32>,
    %c0_i32_28 = arith.constant 0 : i32
    %39 = arith.cmpi eq, %arg2, %c0_i32_28 : i32
    %40 = arith.extui %39 : i1 to i32
    %c0_i32_29 = arith.constant 0 : i32
    %41 = arith.cmpi ne, %40, %c0_i32_29 : i32
    scf.if %41 {
      %c0_30 = arith.constant 0 : index
      %c0_31 = arith.constant 0 : index
      %42 = vector.load %arg10[%c0_30, %c0_31] : memref<8x16xf32, #tpu.memory_space<vmem>>, vector<8x16xf32>
      %c0_32 = arith.constant 0 : index
      %c0_33 = arith.constant 0 : index
      %43 = vector.load %arg9[%c0_32, %c0_33] : memref<8x1xf32, #tpu.memory_space<vmem>>, vector<8x1xf32>
      %44 = tpu.reciprocal %43 {approx = true} : vector<8x1xf32> -> vector<8x1xf32>
      %45 = vector.broadcast %44 : vector<8x1xf32> to vector<8x16xf32>
      %46 = arith.mulf %42, %45 : vector<8x16xf32>
      %47 = arith.truncf %46 : vector<8x16xf32> to vector<8x16xbf16>
      %c0_34 = arith.constant 0 : index
      %c0_35 = arith.constant 0 : index
      %c0_36 = arith.constant 0 : index
      %48 = vector.load %arg7[%c0_34, %c0_35, %c0_36] : memref<1x8x16xbf16, #tpu.memory_space<vmem>>, vector<1x8x16xbf16>
      %49 = vector.shape_cast %48 : vector<1x8x16xbf16> to vector<8x16xbf16>
      %50 = vector.shape_cast %47 : vector<8x16xbf16> to vector<1x8x16xbf16>
      tpu.vector_store %arg7[%c0_34, %c0_35, %c0_36], %50 {strides = array<i32>} : memref<1x8x16xbf16, #tpu.memory_space<vmem>>, vector<1x8x16xbf16>,
    } else {
    }
    return
  }
  func.func @transform_0(%arg0: i32, %arg1: i32, %arg2: i32) -> (i32, i32, i32) {
    %c0_i32 = arith.constant 0 : i32
    %c0_i32_0 = arith.constant 0 : i32
    return %arg0, %arg1, %c0_i32 : i32, i32, i32
  }
  func.func @transform_1(%arg0: i32, %arg1: i32, %arg2: i32) -> (i32, i32, i32) {
    %c0_i32 = arith.constant 0 : i32
    %c0_i32_0 = arith.constant 0 : i32
    return %arg0, %arg2, %c0_i32 : i32, i32, i32
  }
  func.func @transform_2(%arg0: i32, %arg1: i32, %arg2: i32) -> (i32, i32, i32) {
    %c0_i32 = arith.constant 0 : i32
    %c0_i32_0 = arith.constant 0 : i32
    return %arg0, %arg2, %c0_i32 : i32, i32, i32
  }
  func.func @transform_3(%arg0: i32, %arg1: i32, %arg2: i32) -> (i32, i32, i32) {
    %c0_i32 = arith.constant 0 : i32
    %c0_i32_0 = arith.constant 0 : i32
    return %arg0, %c0_i32, %arg2 : i32, i32, i32
  }
  func.func @transform_4(%arg0: i32, %arg1: i32, %arg2: i32) -> (i32, i32, i32) {
    %c0_i32 = arith.constant 0 : i32
    %c0_i32_0 = arith.constant 0 : i32
    return %arg0, %arg1, %c0_i32 : i32, i32, i32
  }
}

module attributes {stable_mosaic.version = 11 : i64} {
  func.func @_dense_add_ln_kernel(%arg0: i32, %arg1: i32, %arg2: memref<16x32xbf16, #tpu.memory_space<vmem>>, %arg3: memref<32x32xbf16, #tpu.memory_space<vmem>>, %arg4: memref<1x32xf32, #tpu.memory_space<vmem>>, %arg5: memref<16x32xbf16, #tpu.memory_space<vmem>>, %arg6: memref<1x32xf32, #tpu.memory_space<vmem>>, %arg7: memref<1x32xf32, #tpu.memory_space<vmem>>, %arg8: memref<16x32xbf16, #tpu.memory_space<vmem>>, %arg9: memref<16x32xf32, #tpu.memory_space<vmem>>) attributes {dimension_semantics = [#tpu.dimension_semantics<parallel>, #tpu.dimension_semantics<arbitrary>], iteration_bounds = array<i64: 1, 1>, scalar_prefetch = 0 : i64, scratch_operands = 1 : i64, tpu.core_type = #tpu.core_type<tc>, window_params = [{transform_indices = @transform_0, window_bounds = array<i64: 16, 32>}, {transform_indices = @transform_1, window_bounds = array<i64: 32, 32>}, {pipeline_mode = #tpu.pipeline_mode<synchronous>, transform_indices = @transform_2, window_bounds = array<i64: 1, 32>}, {transform_indices = @transform_3, window_bounds = array<i64: 16, 32>}, {pipeline_mode = #tpu.pipeline_mode<synchronous>, transform_indices = @transform_4, window_bounds = array<i64: 1, 32>}, {pipeline_mode = #tpu.pipeline_mode<synchronous>, transform_indices = @transform_5, window_bounds = array<i64: 1, 32>}, {transform_indices = @transform_6, window_bounds = array<i64: 16, 32>}]} {
    %c0_i32 = arith.constant 0 : i32
    %0 = arith.cmpi eq, %arg1, %c0_i32 : i32
    %1 = arith.extui %0 : i1 to i32
    %c0_i32_0 = arith.constant 0 : i32
    %2 = arith.cmpi ne, %1, %c0_i32_0 : i32
    scf.if %2 {
      %cst_10 = arith.constant 0.000000e+00 : f32
      %12 = vector.broadcast %cst_10 : f32 to vector<16x32xf32>
      %c0_11 = arith.constant 0 : index
      %c0_12 = arith.constant 0 : index
      %13 = vector.load %arg9[%c0_11, %c0_12] : memref<16x32xf32, #tpu.memory_space<vmem>>, vector<16x32xf32>
      tpu.vector_store %arg9[%c0_11, %c0_12], %12 {strides = array<i32>} : memref<16x32xf32, #tpu.memory_space<vmem>>, vector<16x32xf32>,
    } else {
    }
    %c0 = arith.constant 0 : index
    %c0_1 = arith.constant 0 : index
    %3 = vector.load %arg9[%c0, %c0_1] : memref<16x32xf32, #tpu.memory_space<vmem>>, vector<16x32xf32>
    %c0_2 = arith.constant 0 : index
    %c0_3 = arith.constant 0 : index
    %4 = vector.load %arg2[%c0_2, %c0_3] : memref<16x32xbf16, #tpu.memory_space<vmem>>, vector<16x32xbf16>
    %c0_4 = arith.constant 0 : index
    %c0_5 = arith.constant 0 : index
    %5 = vector.load %arg3[%c0_4, %c0_5] : memref<32x32xbf16, #tpu.memory_space<vmem>>, vector<32x32xbf16>
    %cst = arith.constant dense<0.000000e+00> : vector<16x32xf32>
    %6 = tpu.matmul %4, %5, %cst {dimension_numbers = #tpu.dot_dimension_numbers<[1], [0], [0], [1], [0, 0, 1, 1], [], []>} : vector<16x32xbf16>, vector<32x32xbf16>, vector<16x32xf32> -> vector<16x32xf32>
    %7 = arith.addf %3, %6 : vector<16x32xf32>
    %c0_6 = arith.constant 0 : index
    %c0_7 = arith.constant 0 : index
    %8 = vector.load %arg9[%c0_6, %c0_7] : memref<16x32xf32, #tpu.memory_space<vmem>>, vector<16x32xf32>
    tpu.vector_store %arg9[%c0_6, %c0_7], %7 {strides = array<i32>} : memref<16x32xf32, #tpu.memory_space<vmem>>, vector<16x32xf32>,
    %c0_i32_8 = arith.constant 0 : i32
    %9 = arith.cmpi eq, %arg1, %c0_i32_8 : i32
    %10 = arith.extui %9 : i1 to i32
    %c0_i32_9 = arith.constant 0 : i32
    %11 = arith.cmpi ne, %10, %c0_i32_9 : i32
    scf.if %11 {
      %c0_10 = arith.constant 0 : index
      %c0_11 = arith.constant 0 : index
      %12 = vector.load %arg9[%c0_10, %c0_11] : memref<16x32xf32, #tpu.memory_space<vmem>>, vector<16x32xf32>
      %c0_12 = arith.constant 0 : index
      %c0_13 = arith.constant 0 : index
      %13 = vector.load %arg4[%c0_12, %c0_13] : memref<1x32xf32, #tpu.memory_space<vmem>>, vector<1x32xf32>
      %14 = vector.broadcast %13 : vector<1x32xf32> to vector<16x32xf32>
      %15 = arith.addf %12, %14 : vector<16x32xf32>
      %c0_14 = arith.constant 0 : index
      %c0_15 = arith.constant 0 : index
      %16 = vector.load %arg5[%c0_14, %c0_15] : memref<16x32xbf16, #tpu.memory_space<vmem>>, vector<16x32xbf16>
      %17 = arith.extf %16 : vector<16x32xbf16> to vector<16x32xf32>
      %18 = arith.addf %15, %17 : vector<16x32xf32>
      %cst_16 = arith.constant dense<0.000000e+00> : vector<16xf32>
      %19 = vector.multi_reduction <add>, %18, %cst_16 [1] : vector<16x32xf32> to vector<16xf32>
      %20 = vector.shape_cast %19 : vector<16xf32> to vector<16x1xf32>
      %cst_17 = arith.constant 3.200000e+01 : f32
      %21 = vector.broadcast %cst_17 : f32 to vector<16x1xf32>
      %22 = arith.divf %20, %21 : vector<16x1xf32>
      %23 = vector.broadcast %22 : vector<16x1xf32> to vector<16x32xf32>
      %24 = arith.subf %18, %23 : vector<16x32xf32>
      %25 = arith.mulf %24, %24 : vector<16x32xf32>
      %cst_18 = arith.constant dense<0.000000e+00> : vector<16xf32>
      %26 = vector.multi_reduction <add>, %25, %cst_18 [1] : vector<16x32xf32> to vector<16xf32>
      %27 = vector.shape_cast %26 : vector<16xf32> to vector<16x1xf32>
      %cst_19 = arith.constant 3.200000e+01 : f32
      %28 = vector.broadcast %cst_19 : f32 to vector<16x1xf32>
      %29 = arith.divf %27, %28 : vector<16x1xf32>
      %cst_20 = arith.constant 9.99999996E-13 : f32
      %30 = vector.broadcast %cst_20 : f32 to vector<16x1xf32>
      %31 = arith.addf %29, %30 : vector<16x1xf32>
      %32 = math.rsqrt %31 : vector<16x1xf32>
      %33 = vector.broadcast %22 : vector<16x1xf32> to vector<16x32xf32>
      %34 = arith.subf %18, %33 : vector<16x32xf32>
      %35 = vector.broadcast %32 : vector<16x1xf32> to vector<16x32xf32>
      %36 = arith.mulf %34, %35 : vector<16x32xf32>
      %c0_21 = arith.constant 0 : index
      %c0_22 = arith.constant 0 : index
      %37 = vector.load %arg6[%c0_21, %c0_22] : memref<1x32xf32, #tpu.memory_space<vmem>>, vector<1x32xf32>
      %38 = vector.broadcast %37 : vector<1x32xf32> to vector<16x32xf32>
      %39 = arith.mulf %36, %38 : vector<16x32xf32>
      %c0_23 = arith.constant 0 : index
      %c0_24 = arith.constant 0 : index
      %40 = vector.load %arg7[%c0_23, %c0_24] : memref<1x32xf32, #tpu.memory_space<vmem>>, vector<1x32xf32>
      %41 = vector.broadcast %40 : vector<1x32xf32> to vector<16x32xf32>
      %42 = arith.addf %39, %41 : vector<16x32xf32>
      %43 = arith.truncf %42 : vector<16x32xf32> to vector<16x32xbf16>
      %c0_25 = arith.constant 0 : index
      %c0_26 = arith.constant 0 : index
      %44 = vector.load %arg8[%c0_25, %c0_26] : memref<16x32xbf16, #tpu.memory_space<vmem>>, vector<16x32xbf16>
      tpu.vector_store %arg8[%c0_25, %c0_26], %43 {strides = array<i32>} : memref<16x32xbf16, #tpu.memory_space<vmem>>, vector<16x32xbf16>,
    } else {
    }
    return
  }
  func.func @transform_0(%arg0: i32, %arg1: i32) -> (i32, i32) {
    %c0_i32 = arith.constant 0 : i32
    return %arg0, %arg1 : i32, i32
  }
  func.func @transform_1(%arg0: i32, %arg1: i32) -> (i32, i32) {
    %c0_i32 = arith.constant 0 : i32
    %c0_i32_0 = arith.constant 0 : i32
    return %arg1, %c0_i32 : i32, i32
  }
  func.func @transform_2(%arg0: i32, %arg1: i32) -> (i32, i32) {
    %c0_i32 = arith.constant 0 : i32
    %c0_i32_0 = arith.constant 0 : i32
    %c0_i32_1 = arith.constant 0 : i32
    return %c0_i32, %c0_i32_0 : i32, i32
  }
  func.func @transform_3(%arg0: i32, %arg1: i32) -> (i32, i32) {
    %c0_i32 = arith.constant 0 : i32
    %c0_i32_0 = arith.constant 0 : i32
    return %arg0, %c0_i32 : i32, i32
  }
  func.func @transform_4(%arg0: i32, %arg1: i32) -> (i32, i32) {
    %c0_i32 = arith.constant 0 : i32
    %c0_i32_0 = arith.constant 0 : i32
    %c0_i32_1 = arith.constant 0 : i32
    return %c0_i32, %c0_i32_0 : i32, i32
  }
  func.func @transform_5(%arg0: i32, %arg1: i32) -> (i32, i32) {
    %c0_i32 = arith.constant 0 : i32
    %c0_i32_0 = arith.constant 0 : i32
    %c0_i32_1 = arith.constant 0 : i32
    return %c0_i32, %c0_i32_0 : i32, i32
  }
  func.func @transform_6(%arg0: i32, %arg1: i32) -> (i32, i32) {
    %c0_i32 = arith.constant 0 : i32
    %c0_i32_0 = arith.constant 0 : i32
    return %arg0, %c0_i32 : i32, i32
  }
}

module attributes {stable_mosaic.version = 11 : i64} {
  func.func @_dense_kernel(%arg0: i32, %arg1: i32, %arg2: i32, %arg3: memref<16x32xbf16, #tpu.memory_space<vmem>>, %arg4: memref<32x64xbf16, #tpu.memory_space<vmem>>, %arg5: memref<1x64xf32, #tpu.memory_space<vmem>>, %arg6: memref<16x64xbf16, #tpu.memory_space<vmem>>, %arg7: memref<16x64xf32, #tpu.memory_space<vmem>>) attributes {dimension_semantics = [#tpu.dimension_semantics<parallel>, #tpu.dimension_semantics<parallel>, #tpu.dimension_semantics<arbitrary>], iteration_bounds = array<i64: 1, 1, 1>, scalar_prefetch = 0 : i64, scratch_operands = 1 : i64, tpu.core_type = #tpu.core_type<tc>, window_params = [{transform_indices = @transform_0, window_bounds = array<i64: 16, 32>}, {transform_indices = @transform_1, window_bounds = array<i64: 32, 64>}, {transform_indices = @transform_2, window_bounds = array<i64: 1, 64>}, {transform_indices = @transform_3, window_bounds = array<i64: 16, 64>}]} {
    %c0_i32 = arith.constant 0 : i32
    %0 = arith.cmpi eq, %arg2, %c0_i32 : i32
    %1 = arith.extui %0 : i1 to i32
    %c0_i32_0 = arith.constant 0 : i32
    %2 = arith.cmpi ne, %1, %c0_i32_0 : i32
    scf.if %2 {
      %cst_10 = arith.constant 0.000000e+00 : f32
      %12 = vector.broadcast %cst_10 : f32 to vector<16x64xf32>
      %c0_11 = arith.constant 0 : index
      %c0_12 = arith.constant 0 : index
      %13 = vector.load %arg7[%c0_11, %c0_12] : memref<16x64xf32, #tpu.memory_space<vmem>>, vector<16x64xf32>
      tpu.vector_store %arg7[%c0_11, %c0_12], %12 {strides = array<i32>} : memref<16x64xf32, #tpu.memory_space<vmem>>, vector<16x64xf32>,
    } else {
    }
    %c0 = arith.constant 0 : index
    %c0_1 = arith.constant 0 : index
    %3 = vector.load %arg7[%c0, %c0_1] : memref<16x64xf32, #tpu.memory_space<vmem>>, vector<16x64xf32>
    %c0_2 = arith.constant 0 : index
    %c0_3 = arith.constant 0 : index
    %4 = vector.load %arg3[%c0_2, %c0_3] : memref<16x32xbf16, #tpu.memory_space<vmem>>, vector<16x32xbf16>
    %c0_4 = arith.constant 0 : index
    %c0_5 = arith.constant 0 : index
    %5 = vector.load %arg4[%c0_4, %c0_5] : memref<32x64xbf16, #tpu.memory_space<vmem>>, vector<32x64xbf16>
    %cst = arith.constant dense<0.000000e+00> : vector<16x64xf32>
    %6 = tpu.matmul %4, %5, %cst {dimension_numbers = #tpu.dot_dimension_numbers<[1], [0], [0], [1], [0, 0, 1, 1], [], []>} : vector<16x32xbf16>, vector<32x64xbf16>, vector<16x64xf32> -> vector<16x64xf32>
    %7 = arith.addf %3, %6 : vector<16x64xf32>
    %c0_6 = arith.constant 0 : index
    %c0_7 = arith.constant 0 : index
    %8 = vector.load %arg7[%c0_6, %c0_7] : memref<16x64xf32, #tpu.memory_space<vmem>>, vector<16x64xf32>
    tpu.vector_store %arg7[%c0_6, %c0_7], %7 {strides = array<i32>} : memref<16x64xf32, #tpu.memory_space<vmem>>, vector<16x64xf32>,
    %c0_i32_8 = arith.constant 0 : i32
    %9 = arith.cmpi eq, %arg2, %c0_i32_8 : i32
    %10 = arith.extui %9 : i1 to i32
    %c0_i32_9 = arith.constant 0 : i32
    %11 = arith.cmpi ne, %10, %c0_i32_9 : i32
    scf.if %11 {
      %c0_10 = arith.constant 0 : index
      %c0_11 = arith.constant 0 : index
      %12 = vector.load %arg7[%c0_10, %c0_11] : memref<16x64xf32, #tpu.memory_space<vmem>>, vector<16x64xf32>
      %c0_12 = arith.constant 0 : index
      %c0_13 = arith.constant 0 : index
      %13 = vector.load %arg5[%c0_12, %c0_13] : memref<1x64xf32, #tpu.memory_space<vmem>>, vector<1x64xf32>
      %14 = vector.broadcast %13 : vector<1x64xf32> to vector<16x64xf32>
      %15 = arith.addf %12, %14 : vector<16x64xf32>
      %cst_14 = arith.constant 5.000000e-01 : f32
      %16 = vector.broadcast %cst_14 : f32 to vector<16x64xf32>
      %17 = arith.mulf %16, %15 : vector<16x64xf32>
      %cst_15 = arith.constant 0.707106769 : f32
      %18 = vector.broadcast %cst_15 : f32 to vector<16x64xf32>
      %19 = arith.mulf %15, %18 : vector<16x64xf32>
      %20 = math.erf %19 : vector<16x64xf32>
      %cst_16 = arith.constant 1.000000e+00 : f32
      %21 = vector.broadcast %cst_16 : f32 to vector<16x64xf32>
      %22 = arith.addf %21, %20 : vector<16x64xf32>
      %23 = arith.mulf %17, %22 : vector<16x64xf32>
      %24 = arith.truncf %23 : vector<16x64xf32> to vector<16x64xbf16>
      %c0_17 = arith.constant 0 : index
      %c0_18 = arith.constant 0 : index
      %25 = vector.load %arg6[%c0_17, %c0_18] : memref<16x64xbf16, #tpu.memory_space<vmem>>, vector<16x64xbf16>
      tpu.vector_store %arg6[%c0_17, %c0_18], %24 {strides = array<i32>} : memref<16x64xbf16, #tpu.memory_space<vmem>>, vector<16x64xbf16>,
    } else {
    }
    return
  }
  func.func @transform_0(%arg0: i32, %arg1: i32, %arg2: i32) -> (i32, i32) {
    %c0_i32 = arith.constant 0 : i32
    return %arg0, %arg2 : i32, i32
  }
  func.func @transform_1(%arg0: i32, %arg1: i32, %arg2: i32) -> (i32, i32) {
    %c0_i32 = arith.constant 0 : i32
    return %arg2, %arg1 : i32, i32
  }
  func.func @transform_2(%arg0: i32, %arg1: i32, %arg2: i32) -> (i32, i32) {
    %c0_i32 = arith.constant 0 : i32
    %c0_i32_0 = arith.constant 0 : i32
    return %c0_i32, %arg1 : i32, i32
  }
  func.func @transform_3(%arg0: i32, %arg1: i32, %arg2: i32) -> (i32, i32) {
    %c0_i32 = arith.constant 0 : i32
    return %arg0, %arg1 : i32, i32
  }
}

module attributes {stable_mosaic.version = 11 : i64} {
  func.func @_dense_add_ln_kernel(%arg0: i32, %arg1: i32, %arg2: memref<16x64xbf16, #tpu.memory_space<vmem>>, %arg3: memref<64x32xbf16, #tpu.memory_space<vmem>>, %arg4: memref<1x32xf32, #tpu.memory_space<vmem>>, %arg5: memref<16x32xbf16, #tpu.memory_space<vmem>>, %arg6: memref<1x32xf32, #tpu.memory_space<vmem>>, %arg7: memref<1x32xf32, #tpu.memory_space<vmem>>, %arg8: memref<16x32xbf16, #tpu.memory_space<vmem>>, %arg9: memref<16x32xf32, #tpu.memory_space<vmem>>) attributes {dimension_semantics = [#tpu.dimension_semantics<parallel>, #tpu.dimension_semantics<arbitrary>], iteration_bounds = array<i64: 1, 1>, scalar_prefetch = 0 : i64, scratch_operands = 1 : i64, tpu.core_type = #tpu.core_type<tc>, window_params = [{transform_indices = @transform_0, window_bounds = array<i64: 16, 64>}, {transform_indices = @transform_1, window_bounds = array<i64: 64, 32>}, {pipeline_mode = #tpu.pipeline_mode<synchronous>, transform_indices = @transform_2, window_bounds = array<i64: 1, 32>}, {transform_indices = @transform_3, window_bounds = array<i64: 16, 32>}, {pipeline_mode = #tpu.pipeline_mode<synchronous>, transform_indices = @transform_4, window_bounds = array<i64: 1, 32>}, {pipeline_mode = #tpu.pipeline_mode<synchronous>, transform_indices = @transform_5, window_bounds = array<i64: 1, 32>}, {transform_indices = @transform_6, window_bounds = array<i64: 16, 32>}]} {
    %c0_i32 = arith.constant 0 : i32
    %0 = arith.cmpi eq, %arg1, %c0_i32 : i32
    %1 = arith.extui %0 : i1 to i32
    %c0_i32_0 = arith.constant 0 : i32
    %2 = arith.cmpi ne, %1, %c0_i32_0 : i32
    scf.if %2 {
      %cst_10 = arith.constant 0.000000e+00 : f32
      %12 = vector.broadcast %cst_10 : f32 to vector<16x32xf32>
      %c0_11 = arith.constant 0 : index
      %c0_12 = arith.constant 0 : index
      %13 = vector.load %arg9[%c0_11, %c0_12] : memref<16x32xf32, #tpu.memory_space<vmem>>, vector<16x32xf32>
      tpu.vector_store %arg9[%c0_11, %c0_12], %12 {strides = array<i32>} : memref<16x32xf32, #tpu.memory_space<vmem>>, vector<16x32xf32>,
    } else {
    }
    %c0 = arith.constant 0 : index
    %c0_1 = arith.constant 0 : index
    %3 = vector.load %arg9[%c0, %c0_1] : memref<16x32xf32, #tpu.memory_space<vmem>>, vector<16x32xf32>
    %c0_2 = arith.constant 0 : index
    %c0_3 = arith.constant 0 : index
    %4 = vector.load %arg2[%c0_2, %c0_3] : memref<16x64xbf16, #tpu.memory_space<vmem>>, vector<16x64xbf16>
    %c0_4 = arith.constant 0 : index
    %c0_5 = arith.constant 0 : index
    %5 = vector.load %arg3[%c0_4, %c0_5] : memref<64x32xbf16, #tpu.memory_space<vmem>>, vector<64x32xbf16>
    %cst = arith.constant dense<0.000000e+00> : vector<16x32xf32>
    %6 = tpu.matmul %4, %5, %cst {dimension_numbers = #tpu.dot_dimension_numbers<[1], [0], [0], [1], [0, 0, 1, 1], [], []>} : vector<16x64xbf16>, vector<64x32xbf16>, vector<16x32xf32> -> vector<16x32xf32>
    %7 = arith.addf %3, %6 : vector<16x32xf32>
    %c0_6 = arith.constant 0 : index
    %c0_7 = arith.constant 0 : index
    %8 = vector.load %arg9[%c0_6, %c0_7] : memref<16x32xf32, #tpu.memory_space<vmem>>, vector<16x32xf32>
    tpu.vector_store %arg9[%c0_6, %c0_7], %7 {strides = array<i32>} : memref<16x32xf32, #tpu.memory_space<vmem>>, vector<16x32xf32>,
    %c0_i32_8 = arith.constant 0 : i32
    %9 = arith.cmpi eq, %arg1, %c0_i32_8 : i32
    %10 = arith.extui %9 : i1 to i32
    %c0_i32_9 = arith.constant 0 : i32
    %11 = arith.cmpi ne, %10, %c0_i32_9 : i32
    scf.if %11 {
      %c0_10 = arith.constant 0 : index
      %c0_11 = arith.constant 0 : index
      %12 = vector.load %arg9[%c0_10, %c0_11] : memref<16x32xf32, #tpu.memory_space<vmem>>, vector<16x32xf32>
      %c0_12 = arith.constant 0 : index
      %c0_13 = arith.constant 0 : index
      %13 = vector.load %arg4[%c0_12, %c0_13] : memref<1x32xf32, #tpu.memory_space<vmem>>, vector<1x32xf32>
      %14 = vector.broadcast %13 : vector<1x32xf32> to vector<16x32xf32>
      %15 = arith.addf %12, %14 : vector<16x32xf32>
      %c0_14 = arith.constant 0 : index
      %c0_15 = arith.constant 0 : index
      %16 = vector.load %arg5[%c0_14, %c0_15] : memref<16x32xbf16, #tpu.memory_space<vmem>>, vector<16x32xbf16>
      %17 = arith.extf %16 : vector<16x32xbf16> to vector<16x32xf32>
      %18 = arith.addf %15, %17 : vector<16x32xf32>
      %cst_16 = arith.constant dense<0.000000e+00> : vector<16xf32>
      %19 = vector.multi_reduction <add>, %18, %cst_16 [1] : vector<16x32xf32> to vector<16xf32>
      %20 = vector.shape_cast %19 : vector<16xf32> to vector<16x1xf32>
      %cst_17 = arith.constant 3.200000e+01 : f32
      %21 = vector.broadcast %cst_17 : f32 to vector<16x1xf32>
      %22 = arith.divf %20, %21 : vector<16x1xf32>
      %23 = vector.broadcast %22 : vector<16x1xf32> to vector<16x32xf32>
      %24 = arith.subf %18, %23 : vector<16x32xf32>
      %25 = arith.mulf %24, %24 : vector<16x32xf32>
      %cst_18 = arith.constant dense<0.000000e+00> : vector<16xf32>
      %26 = vector.multi_reduction <add>, %25, %cst_18 [1] : vector<16x32xf32> to vector<16xf32>
      %27 = vector.shape_cast %26 : vector<16xf32> to vector<16x1xf32>
      %cst_19 = arith.constant 3.200000e+01 : f32
      %28 = vector.broadcast %cst_19 : f32 to vector<16x1xf32>
      %29 = arith.divf %27, %28 : vector<16x1xf32>
      %cst_20 = arith.constant 9.99999996E-13 : f32
      %30 = vector.broadcast %cst_20 : f32 to vector<16x1xf32>
      %31 = arith.addf %29, %30 : vector<16x1xf32>
      %32 = math.rsqrt %31 : vector<16x1xf32>
      %33 = vector.broadcast %22 : vector<16x1xf32> to vector<16x32xf32>
      %34 = arith.subf %18, %33 : vector<16x32xf32>
      %35 = vector.broadcast %32 : vector<16x1xf32> to vector<16x32xf32>
      %36 = arith.mulf %34, %35 : vector<16x32xf32>
      %c0_21 = arith.constant 0 : index
      %c0_22 = arith.constant 0 : index
      %37 = vector.load %arg6[%c0_21, %c0_22] : memref<1x32xf32, #tpu.memory_space<vmem>>, vector<1x32xf32>
      %38 = vector.broadcast %37 : vector<1x32xf32> to vector<16x32xf32>
      %39 = arith.mulf %36, %38 : vector<16x32xf32>
      %c0_23 = arith.constant 0 : index
      %c0_24 = arith.constant 0 : index
      %40 = vector.load %arg7[%c0_23, %c0_24] : memref<1x32xf32, #tpu.memory_space<vmem>>, vector<1x32xf32>
      %41 = vector.broadcast %40 : vector<1x32xf32> to vector<16x32xf32>
      %42 = arith.addf %39, %41 : vector<16x32xf32>
      %43 = arith.truncf %42 : vector<16x32xf32> to vector<16x32xbf16>
      %c0_25 = arith.constant 0 : index
      %c0_26 = arith.constant 0 : index
      %44 = vector.load %arg8[%c0_25, %c0_26] : memref<16x32xbf16, #tpu.memory_space<vmem>>, vector<16x32xbf16>
      tpu.vector_store %arg8[%c0_25, %c0_26], %43 {strides = array<i32>} : memref<16x32xbf16, #tpu.memory_space<vmem>>, vector<16x32xbf16>,
    } else {
    }
    return
  }
  func.func @transform_0(%arg0: i32, %arg1: i32) -> (i32, i32) {
    %c0_i32 = arith.constant 0 : i32
    return %arg0, %arg1 : i32, i32
  }
  func.func @transform_1(%arg0: i32, %arg1: i32) -> (i32, i32) {
    %c0_i32 = arith.constant 0 : i32
    %c0_i32_0 = arith.constant 0 : i32
    return %arg1, %c0_i32 : i32, i32
  }
  func.func @transform_2(%arg0: i32, %arg1: i32) -> (i32, i32) {
    %c0_i32 = arith.constant 0 : i32
    %c0_i32_0 = arith.constant 0 : i32
    %c0_i32_1 = arith.constant 0 : i32
    return %c0_i32, %c0_i32_0 : i32, i32
  }
  func.func @transform_3(%arg0: i32, %arg1: i32) -> (i32, i32) {
    %c0_i32 = arith.constant 0 : i32
    %c0_i32_0 = arith.constant 0 : i32
    return %arg0, %c0_i32 : i32, i32
  }
  func.func @transform_4(%arg0: i32, %arg1: i32) -> (i32, i32) {
    %c0_i32 = arith.constant 0 : i32
    %c0_i32_0 = arith.constant 0 : i32
    %c0_i32_1 = arith.constant 0 : i32
    return %c0_i32, %c0_i32_0 : i32, i32
  }
  func.func @transform_5(%arg0: i32, %arg1: i32) -> (i32, i32) {
    %c0_i32 = arith.constant 0 : i32
    %c0_i32_0 = arith.constant 0 : i32
    %c0_i32_1 = arith.constant 0 : i32
    return %c0_i32, %c0_i32_0 : i32, i32
  }
  func.func @transform_6(%arg0: i32, %arg1: i32) -> (i32, i32) {
    %c0_i32 = arith.constant 0 : i32
    %c0_i32_0 = arith.constant 0 : i32
    return %arg0, %c0_i32 : i32, i32
  }
}

module attributes {stable_mosaic.version = 11 : i64} {
  func.func @_head_kernel(%arg0: memref<2x32xbf16, #tpu.memory_space<vmem>>, %arg1: memref<32x32xbf16, #tpu.memory_space<vmem>>, %arg2: memref<1x32xf32, #tpu.memory_space<vmem>>, %arg3: memref<32x1024xbf16, #tpu.memory_space<vmem>>, %arg4: memref<1x1024xf32, #tpu.memory_space<vmem>>, %arg5: memref<1024x256xbf16, #tpu.memory_space<vmem>>, %arg6: memref<1x256xf32, #tpu.memory_space<vmem>>, %arg7: memref<256x128xbf16, #tpu.memory_space<vmem>>, %arg8: memref<1x128xf32, #tpu.memory_space<vmem>>, %arg9: memref<2x128xf32, #tpu.memory_space<vmem>>) attributes {dimension_semantics = [], scalar_prefetch = 0 : i64, scratch_operands = 0 : i64, tpu.core_type = #tpu.core_type<tc>} {
    %c0 = arith.constant 0 : index
    %c0_0 = arith.constant 0 : index
    %0 = vector.load %arg0[%c0, %c0_0] : memref<2x32xbf16, #tpu.memory_space<vmem>>, vector<2x32xbf16>
    %c0_1 = arith.constant 0 : index
    %c0_2 = arith.constant 0 : index
    %1 = vector.load %arg1[%c0_1, %c0_2] : memref<32x32xbf16, #tpu.memory_space<vmem>>, vector<32x32xbf16>
    %cst = arith.constant dense<0.000000e+00> : vector<2x32xf32>
    %2 = tpu.matmul %0, %1, %cst {dimension_numbers = #tpu.dot_dimension_numbers<[1], [0], [0], [1], [0, 0, 1, 1], [], []>} : vector<2x32xbf16>, vector<32x32xbf16>, vector<2x32xf32> -> vector<2x32xf32>
    %c0_3 = arith.constant 0 : index
    %c0_4 = arith.constant 0 : index
    %3 = vector.load %arg2[%c0_3, %c0_4] : memref<1x32xf32, #tpu.memory_space<vmem>>, vector<1x32xf32>
    %4 = vector.broadcast %3 : vector<1x32xf32> to vector<2x32xf32>
    %5 = arith.addf %2, %4 : vector<2x32xf32>
    %6 = math.tanh %5 : vector<2x32xf32>
    %7 = arith.truncf %6 : vector<2x32xf32> to vector<2x32xbf16>
    %c0_5 = arith.constant 0 : index
    %c0_6 = arith.constant 0 : index
    %8 = vector.load %arg3[%c0_5, %c0_6] : memref<32x1024xbf16, #tpu.memory_space<vmem>>, vector<32x1024xbf16>
    %cst_7 = arith.constant dense<0.000000e+00> : vector<2x1024xf32>
    %9 = tpu.matmul %7, %8, %cst_7 {dimension_numbers = #tpu.dot_dimension_numbers<[1], [0], [0], [1], [0, 0, 1, 1], [], []>} : vector<2x32xbf16>, vector<32x1024xbf16>, vector<2x1024xf32> -> vector<2x1024xf32>
    %c0_8 = arith.constant 0 : index
    %c0_9 = arith.constant 0 : index
    %10 = vector.load %arg4[%c0_8, %c0_9] : memref<1x1024xf32, #tpu.memory_space<vmem>>, vector<1x1024xf32>
    %11 = vector.broadcast %10 : vector<1x1024xf32> to vector<2x1024xf32>
    %12 = arith.addf %9, %11 : vector<2x1024xf32>
    %cst_10 = arith.constant 0.000000e+00 : f32
    %13 = vector.broadcast %cst_10 : f32 to vector<2x1024xf32>
    %14 = arith.maximumf %12, %13 : vector<2x1024xf32>
    %15 = arith.truncf %14 : vector<2x1024xf32> to vector<2x1024xbf16>
    %c0_11 = arith.constant 0 : index
    %c0_12 = arith.constant 0 : index
    %16 = vector.load %arg5[%c0_11, %c0_12] : memref<1024x256xbf16, #tpu.memory_space<vmem>>, vector<1024x256xbf16>
    %cst_13 = arith.constant dense<0.000000e+00> : vector<2x256xf32>
    %17 = tpu.matmul %15, %16, %cst_13 {dimension_numbers = #tpu.dot_dimension_numbers<[1], [0], [0], [1], [0, 0, 1, 1], [], []>} : vector<2x1024xbf16>, vector<1024x256xbf16>, vector<2x256xf32> -> vector<2x256xf32>
    %c0_14 = arith.constant 0 : index
    %c0_15 = arith.constant 0 : index
    %18 = vector.load %arg6[%c0_14, %c0_15] : memref<1x256xf32, #tpu.memory_space<vmem>>, vector<1x256xf32>
    %19 = vector.broadcast %18 : vector<1x256xf32> to vector<2x256xf32>
    %20 = arith.addf %17, %19 : vector<2x256xf32>
    %cst_16 = arith.constant 0.000000e+00 : f32
    %21 = vector.broadcast %cst_16 : f32 to vector<2x256xf32>
    %22 = arith.maximumf %20, %21 : vector<2x256xf32>
    %23 = arith.truncf %22 : vector<2x256xf32> to vector<2x256xbf16>
    %c0_17 = arith.constant 0 : index
    %c0_18 = arith.constant 0 : index
    %24 = vector.load %arg7[%c0_17, %c0_18] : memref<256x128xbf16, #tpu.memory_space<vmem>>, vector<256x128xbf16>
    %cst_19 = arith.constant dense<0.000000e+00> : vector<2x128xf32>
    %25 = tpu.matmul %23, %24, %cst_19 {dimension_numbers = #tpu.dot_dimension_numbers<[1], [0], [0], [1], [0, 0, 1, 1], [], []>} : vector<2x256xbf16>, vector<256x128xbf16>, vector<2x128xf32> -> vector<2x128xf32>
    %c0_20 = arith.constant 0 : index
    %c0_21 = arith.constant 0 : index
    %26 = vector.load %arg8[%c0_20, %c0_21] : memref<1x128xf32, #tpu.memory_space<vmem>>, vector<1x128xf32>
    %27 = vector.broadcast %26 : vector<1x128xf32> to vector<2x128xf32>
    %28 = arith.addf %25, %27 : vector<2x128xf32>
    %c0_22 = arith.constant 0 : index
    %c0_23 = arith.constant 0 : index
    %29 = vector.load %arg9[%c0_22, %c0_23] : memref<2x128xf32, #tpu.memory_space<vmem>>, vector<2x128xf32>
    tpu.vector_store %arg9[%c0_22, %c0_23], %28 {strides = array<i32>} : memref<2x128xf32, #tpu.memory_space<vmem>>, vector<2x128xf32>,
    return
  }
}

</mosaic_0001>

<llo_original>
// kernel: bert_net_forward.12
$region0: #{bert_net_forward.12}
  #allocation0 [shape = 'u32[]', space=smem, size = 0x4, offset = 0x4, fixed_abs, tag = 'smem constant byte address 0x4 - core index']
  #allocation1 [shape = 'u32[144,128]{1,0:T(1,128)}', space=vmem, size = 0x12000, scoped, tag = 'internal scratch']
  %s0 = inlined_call_operand.vmem [shape: bf16[16,32], index: 0, kind: input, shape index: {}]
  %s1 = inlined_call_operand.vmem [shape: f32[1,32], index: 1, kind: input, shape index: {}]
  %s2 = inlined_call_operand.vmem [shape: f32[1,32], index: 2, kind: input, shape index: {}]
  %s3 = inlined_call_operand.hbm [shape: bf16[16,32], index: 3, kind: output, shape index: {}]
  %s4 = sld [smem:[#allocation0]]
  $region22: #{bert_net_forward.12} parent=0
    _
  %s6 = ssub.s32 1, %s4
  %s7 = scalar_select 0, %s6, %s4
  $region1: #{bert_net_forward.12} parent=0
    #allocation2 [shape = 'u8[4096]{0}', space=vmem, size = 0x1000, scoped, tag = 'output window, operand 0, single buffered']
    #allocation3 [shape = 's32[1]{0}', space=sflag, size = 0x4, scoped, tag = 'scoped memory for bert_net_forward.12']
    %8 = vsyncpa [#allocation3], 0
    // Predicated region
    $region2: #{bert_net_forward.12} parent=1 // pred_check
      _
    $region3: #{bert_net_forward.12} parent=1 // pred_check_branch
      %10 = sbr.rel (0) target = $region5
    $region4: #{bert_net_forward.12} parent=1 // pred_region
      _
    $region5: #{bert_net_forward.12} parent=1 // pred_fallthru
      _
    // Predicated region
    $region6: #{bert_net_forward.12} parent=1 // pred_check
      _
    $region7: #{bert_net_forward.12} parent=1 // pred_check_branch
      %12 = sbr.rel (0) target = $region9
    $region8: #{bert_net_forward.12} parent=1 // pred_region
      _
    $region9: #{bert_net_forward.12} parent=1 // pred_fallthru
      _
    // Predicated region
    $region10: #{bert_net_forward.12} parent=1 // pred_check
      _
    $region11: #{bert_net_forward.12} parent=1 // pred_check_branch
      %14 = sbr.rel (0) target = $region13
    $region12: #{bert_net_forward.12} parent=1 // pred_region
      _
    $region13: #{bert_net_forward.12} parent=1 // pred_fallthru
      _
    %v15 = vld [vmem:[%s0] sm:$0xf]
    %v16 = vld [vmem:[%s0 + $0x4] sm:$0xf]
    %v17 = vunpack.c.l.bf16 %v15
    %v18 = vunpack.c.l.bf16 %v16
    %vm19 = vcmask 261120
    %v20 = vsel %vm19, %v17, 0.0
    %21 = vadd.xlane.f32.xlu0 %v20
    %v22 = vpop.xlane.xlu0 %21
    %v23 = vsel %vm19, %v18, 0.0
    %24 = vadd.xlane.f32.xlu0 %v23
    %v25 = vpop.xlane.xlu0 %24
    %v26 = vrcp.pop 32.0
    %v27 = vmul.f32 %v22, %v26
    %v28 = vmul.f32 %v25, %v26
    %v29 = vsub.f32 %v17, %v27
    %v30 = vsub.f32 %v18, %v28
    %v31 = vmul.f32 %v29, %v29
    %v32 = vmul.f32 %v30, %v30
    %v33 = vsel %vm19, %v31, 0.0
    %34 = vadd.xlane.f32.xlu0 %v33
    %v35 = vpop.xlane.xlu0 %34
    %v36 = vsel %vm19, %v32, 0.0
    %37 = vadd.xlane.f32.xlu0 %v36
    %v38 = vpop.xlane.xlu0 %37
    %v39 = vmul.f32 %v35, %v26
    %v40 = vmul.f32 %v38, %v26
    %v41 = vadd.f32 %v39, 1e-12
    %v42 = vadd.f32 %v40, 1e-12
    %v43 = vrsqrt.pop %v41
    %v44 = vrsqrt.pop %v42
    %v45 = vmul.f32 %v29, %v43
    %v46 = vmul.f32 %v30, %v44
    %v47 = vld [vmem:[%s1] sm:$0x1]
    %v49 = vlaneseq
    %v50 = vshrl.u32 %v49, 7
    %v51 = vsub.s32 0, %v50
    %v52 = vrot.slane %v47, %v51
    %v54 = vmul.f32 %v45, %v52
    %v55 = vmul.f32 %v46, %v52
    %v56 = vld [vmem:[%s2] sm:$0x1]
    %v58 = vlaneseq
    %v59 = vshrl.u32 %v58, 7
    %v60 = vsub.s32 0, %v59
    %v61 = vrot.slane %v56, %v60
    %v63 = vadd.f32 %v54, %v61
    %v64 = vadd.f32 %v55, %v61
    %v65 = vpack.c.bf16 %v64, %v63
    %v67 = vunpack.c.l.b16 %v65
    %v68 = vunpack.c.h.b16 %v65
    %v69 = vpack.c.b16 %v67, %v67
    %v70 = vpack.c.b16 %v68, %v68
    %vm73 = vcmask 257024
    %74 = vst.msk [vmem:[#allocation2] sm:$0xf] %vm73, %v69
    %75 = vst.msk [vmem:[#allocation2 + $0x4] sm:$0xf] %vm73, %v70
    // Predicated region
    $region14: #{bert_net_forward.12} parent=1 // pred_check
      _
    $region15: #{bert_net_forward.12} parent=1 // pred_check_branch
      %77 = sbr.rel (0) target = $region17
    $region16: #{bert_net_forward.12} parent=1 // pred_region
      %s79 = ssub.s32 128, 128
      %80 = vsyncadd [#allocation3], %s79
      %s81 = sshll.u32 [#allocation2], 4
      %s82 = int_to_ptr.vmem [resolvable:$true] %s81
      %87 = dma.vmem_to_hbm [thread:$0]  %s82, 128, %s3, [#allocation3], 64, 64, 4
    $region17: #{bert_net_forward.12} parent=1 // pred_fallthru
      _
    // Predicated region
    $region18: #{bert_net_forward.12} parent=1 // pred_check
      _
    $region19: #{bert_net_forward.12} parent=1 // pred_check_branch
      %89 = sbr.rel (0) target = $region21
    $region20: #{bert_net_forward.12} parent=1 // pred_region
      %90 = dma.done [#allocation3], 128
    $region21: #{bert_net_forward.12} parent=1 // pred_fallthru
      _
    %91 = vsyncpa [#allocation3], 1

// kernel: bert_net_forward.13
$region0: #{bert_net_forward.13}
  #allocation0 [shape = 'u32[]', space=smem, size = 0x4, offset = 0x4, fixed_abs, tag = 'smem constant byte address 0x4 - core index']
  #allocation1 [shape = 'u32[144,128]{1,0:T(1,128)}', space=vmem, size = 0x12000, scoped, tag = 'internal scratch']
  #allocation2 [shape = 'f32[16,96]{1,0:T(8,128)}', space=vmem, size = 0x2000, scoped, tag = 'scratch operand']
  %s0 = inlined_call_operand.hbm [shape: bf16[16,32], index: 0, kind: input, shape index: {}]
  %s1 = inlined_call_operand.hbm [shape: bf16[32,96], index: 1, kind: input, shape index: {}]
  %s2 = inlined_call_operand.hbm [shape: f32[1,96], index: 2, kind: input, shape index: {}]
  %s3 = inlined_call_operand.hbm [shape: bf16[16,96], index: 3, kind: output, shape index: {}]
  %s4 = sld [smem:[#allocation0]]
  $region42: #{bert_net_forward.13} parent=0
    _
  %s6 = ssub.s32 1, %s4
  %s7 = scalar_select 0, %s6, %s4
  $region1: #{bert_net_forward.13} parent=0
    #allocation3 [shape = 'u8[4096]{0}', space=vmem, size = 0x1000, scoped, tag = 'input window, operand 0, single buffered']
    #allocation4 [shape = 's32[1]{0}', space=sflag, size = 0x4, scoped, tag = 'scoped memory for bert_net_forward.13']
    #allocation5 [shape = 's32[1]{0}', space=sflag, size = 0x4, scoped, tag = 'scoped memory for bert_net_forward.13']
    #allocation6 [shape = 'u8[8192]{0}', space=vmem, size = 0x2000, scoped, tag = 'input window, operand 1, single buffered']
    #allocation7 [shape = 's32[1]{0}', space=sflag, size = 0x4, scoped, tag = 'scoped memory for bert_net_forward.13']
    #allocation8 [shape = 'u8[512]{0}', space=vmem, size = 0x400, scoped, tag = 'input window, operand 2, single buffered']
    #allocation9 [shape = 'u8[4096]{0}', space=vmem, size = 0x1000, scoped, tag = 'output window, operand 0, single buffered']
    %8 = vsyncpa [#allocation4], 0
    %9 = vsyncpa [#allocation7], 0
    %10 = vsyncpa [#allocation5], 0
    // Predicated region
    $region2: #{bert_net_forward.13} parent=1 // pred_check
      _
    $region3: #{bert_net_forward.13} parent=1 // pred_check_branch
      %12 = sbr.rel (0) target = $region5
    $region4: #{bert_net_forward.13} parent=1 // pred_region
      %s14 = ssub.s32 128, 128
      %15 = vsyncadd [#allocation4], %s14
      %s16 = sshll.u32 [#allocation3], 4
      %s17 = int_to_ptr.vmem [resolvable:$true] %s16
      %22 = dma.hbm_to_vmem [thread:$0]  %s0, 128, %s17, [#allocation4], 64, 64, 4
    $region5: #{bert_net_forward.13} parent=1 // pred_fallthru
      _
    // Predicated region
    $region6: #{bert_net_forward.13} parent=1 // pred_check
      _
    $region7: #{bert_net_forward.13} parent=1 // pred_check_branch
      %24 = sbr.rel (0) target = $region9
    $region8: #{bert_net_forward.13} parent=1 // pred_region
      %s26 = ssub.s32 256, 256
      %27 = vsyncadd [#allocation7], %s26
      %s28 = sshll.u32 [#allocation6], 4
      %s29 = int_to_ptr.vmem [resolvable:$true] %s28
      %34 = dma.hbm_to_vmem [thread:$0]  %s1, 256, %s29, [#allocation7], 64, 64, 4
    $region9: #{bert_net_forward.13} parent=1 // pred_fallthru
      _
    // Predicated region
    $region10: #{bert_net_forward.13} parent=1 // pred_check
      _
    $region11: #{bert_net_forward.13} parent=1 // pred_check_branch
      %36 = sbr.rel (0) target = $region13
    $region12: #{bert_net_forward.13} parent=1 // pred_region
      %s38 = ssub.s32 16, 16
      %39 = vsyncadd [#allocation7], %s38
      %s41 = sshll.u32 [#allocation8], 4
      %s42 = int_to_ptr.vmem [resolvable:$true] %s41
      %44 = dma.hbm_to_vmem [thread:$0]  %s2, 16, %s42, [#allocation7]
    $region13: #{bert_net_forward.13} parent=1 // pred_fallthru
      _
    // Predicated region
    $region14: #{bert_net_forward.13} parent=1 // pred_check
      _
    $region15: #{bert_net_forward.13} parent=1 // pred_check_branch
      %46 = sbr.rel (0) target = $region17
    $region16: #{bert_net_forward.13} parent=1 // pred_region
      %47 = dma.done [#allocation4], 128
    $region17: #{bert_net_forward.13} parent=1 // pred_fallthru
      _
    // Predicated region
    $region18: #{bert_net_forward.13} parent=1 // pred_check
      _
    $region19: #{bert_net_forward.13} parent=1 // pred_check_branch
      %49 = sbr.rel (0) target = $region21
    $region20: #{bert_net_forward.13} parent=1 // pred_region
      %50 = dma.done [#allocation7], 256
    $region21: #{bert_net_forward.13} parent=1 // pred_fallthru
      _
    // Predicated region
    $region22: #{bert_net_forward.13} parent=1 // pred_check
      _
    $region23: #{bert_net_forward.13} parent=1 // pred_check_branch
      %52 = sbr.rel (0) target = $region25
    $region24: #{bert_net_forward.13} parent=1 // pred_region
      %53 = dma.done [#allocation7], 16
    $region25: #{bert_net_forward.13} parent=1 // pred_fallthru
      _
    %p55 = scmp.eq.s32.totalorder 0, 0
    // Predicated region
    $region26: #{bert_net_forward.13} parent=1 // pred_check
      %p56 = pneg %p55
    $region27: #{bert_net_forward.13} parent=1 // pred_check_branch
      %58 = sbr.rel (%p56) target = $region29
    $region28: #{bert_net_forward.13} parent=1 // pred_region
      %vm59 = vcmask 785408
      %60 = vst.msk [vmem:[#allocation2] sm:$0xff] %vm59, 0.0
      %61 = vst.msk [vmem:[#allocation2 + $0x8] sm:$0xff] %vm59, 0.0
    $region29: #{bert_net_forward.13} parent=1 // pred_fallthru
      _
    %v62 = vld [vmem:[#allocation2] sm:$0xff]
    %v63 = vld [vmem:[#allocation2 + $0x8] sm:$0xff]
    %v64 = vld [vmem:[#allocation3] sm:$0xf]
    %v65 = vld [vmem:[#allocation3 + $0x4] sm:$0xf]
    %v66 = vld [vmem:[#allocation6] sm:$0xf]
    %v67 = vld [vmem:[#allocation6 + $0x4] sm:$0xf]
    %v68 = vld [vmem:[#allocation6 + $0x8] sm:$0xf]
    %v69 = vld [vmem:[#allocation6 + $0xc] sm:$0xf]
    %v72 = vunpack.c.l.b16 %v64
    %v73 = vunpack.c.l.b16 %v65
    %v74 = vpack.c.b16 %v73, %v72
    %v79 = vunpack.c.l.b16 %v66
    %v80 = vunpack.c.l.b16 %v67
    %v81 = vunpack.c.l.b16 %v68
    %v82 = vunpack.c.l.b16 %v69
    %v83 = vpack.c.b16 %v80, %v79
    %v84 = vpack.c.b16 %v82, %v81
    %vm87 = vcmask 261120
    %v89 = vsel %vm87, %v74, 0
    %91 = vmatprep.subr.bf16.mxu0 0
    %92 = vmatpush1.bf16.msra.mxu0 %v83
    %93 = vmatprep.subr.bf16.mxu0 0
    %94 = vmatpush1.bf16.msra.mxu0 %v84
    %95 = vmatprep.subr.bf16.mxu0 0
    %96 = vmatpush1.bf16.msra.mxu0 0
    %97 = vmatprep.subr.bf16.mxu0 0
    %98 = vmatpush1.bf16.msra.mxu0 0
    %99 = vmatprep.subr.bf16.mxu0 0
    %100 = vmatpush1.bf16.msra.mxu0 0
    %101 = vmatprep.subr.bf16.mxu0 0
    %102 = vmatpush1.bf16.msra.mxu0 0
    %103 = vmatprep.subr.bf16.mxu0 0
    %104 = vmatpush1.bf16.msra.mxu0 0
    %105 = vmatprep.subr.bf16.mxu0 0
    %106 = vmatpush1.bf16.msra.mxu0 0
    %107 = vmatprep.subr.bf16.mxu0 0
    %108 = vmatpush1.bf16.msra.mxu0 0
    %109 = vmatprep.subr.bf16.mxu0 0
    %110 = vmatpush1.bf16.msra.mxu0 0
    %111 = vmatprep.subr.bf16.mxu0 0
    %112 = vmatpush1.bf16.msra.mxu0 0
    %113 = vmatprep.subr.bf16.mxu0 0
    %114 = vmatpush1.bf16.msra.mxu0 0
    %115 = vmatprep.subr.bf16.mxu0 0
    %116 = vmatpush1.bf16.msra.mxu0 0
    %117 = vmatprep.subr.bf16.mxu0 0
    %118 = vmatpush1.bf16.msra.mxu0 0
    %119 = vmatprep.subr.bf16.mxu0 0
    %120 = vmatpush1.bf16.msra.mxu0 0
    %121 = vmatprep.subr.bf16.mxu0 0
    %122 = vmatpush1.bf16.msra.mxu0 0
    %123 = vmatprep.mubr.bf16.mxu0 0
    %124 = vmatmul.mubr.bf16.gmra.mrb[0].mxu0 %v89
    %v125 = vpop.f32.mrb[0].mxu0
    %v126 = vadd.f32 0.0, %v125
    %v127 = vpop.f32.mrb[0].mxu0
    %v128 = vpop.f32.mrb[0].mxu0
    %v129 = vadd.f32 0.0, %v128
    %v130 = vpop.f32.mrb[0].mxu0
    %131 = vdwg.mxu0
    %v132 = vadd.f32 %v62, %v126
    %v133 = vadd.f32 %v63, %v129
    %vm134 = vcmask 785408
    %135 = vst.msk [vmem:[#allocation2] sm:$0xff] %vm134, %v132
    %136 = vst.msk [vmem:[#allocation2 + $0x8] sm:$0xff] %vm134, %v133
    // Predicated region
    $region30: #{bert_net_forward.13} parent=1 // pred_check
      %p137 = pneg %p55
    $region31: #{bert_net_forward.13} parent=1 // pred_check_branch
      %139 = sbr.rel (%p137) target = $region33
    $region32: #{bert_net_forward.13} parent=1 // pred_region
      %v140 = vld [vmem:[#allocation2] sm:$0xff]
      %v141 = vld [vmem:[#allocation2 + $0x8] sm:$0xff]
      %v142 = vld [vmem:[#allocation8] sm:$0x1]
      %v144 = vlaneseq
      %v145 = vshrl.u32 %v144, 7
      %v146 = vsub.s32 0, %v145
      %v147 = vrot.slane %v142, %v146
      %v149 = vadd.f32 %v140, %v147
      %v150 = vadd.f32 %v141, %v147
      %v151 = vpack.c.bf16 %v150, %v149
      %v153 = vunpack.c.l.b16 %v151
      %v154 = vunpack.c.h.b16 %v151
      %v155 = vpack.c.b16 %v153, %v153
      %v156 = vpack.c.b16 %v154, %v154
      %vm159 = vcmask 781312
      %160 = vst.msk [vmem:[#allocation9] sm:$0xf] %vm159, %v155
      %161 = vst.msk [vmem:[#allocation9 + $0x4] sm:$0xf] %vm159, %v156
    $region33: #{bert_net_forward.13} parent=1 // pred_fallthru
      _
    // Predicated region
    $region34: #{bert_net_forward.13} parent=1 // pred_check
      _
    $region35: #{bert_net_forward.13} parent=1 // pred_check_branch
      %163 = sbr.rel (0) target = $region37
    $region36: #{bert_net_forward.13} parent=1 // pred_region
      %s165 = ssub.s32 128, 128
      %166 = vsyncadd [#allocation5], %s165
      %s167 = sshll.u32 [#allocation9], 4
      %s168 = int_to_ptr.vmem [resolvable:$true] %s167
      %173 = dma.vmem_to_hbm [thread:$0]  %s168, 128, %s3, [#allocation5], 64, 64, 4
    $region37: #{bert_net_forward.13} parent=1 // pred_fallthru
      _
    // Predicated region
    $region38: #{bert_net_forward.13} parent=1 // pred_check
      _
    $region39: #{bert_net_forward.13} parent=1 // pred_check_branch
      %175 = sbr.rel (0) target = $region41
    $region40: #{bert_net_forward.13} parent=1 // pred_region
      %176 = dma.done [#allocation5], 128
    $region41: #{bert_net_forward.13} parent=1 // pred_fallthru
      _
    %177 = vsyncpa [#allocation4], 1
    %178 = vsyncpa [#allocation7], 1
    %179 = vsyncpa [#allocation5], 1

// kernel: bert_net_forward.14
$region0: #{bert_net_forward.14}
  #allocation0 [shape = 'u32[]', space=smem, size = 0x4, offset = 0x4, fixed_abs, tag = 'smem constant byte address 0x4 - core index']
  #allocation1 [shape = 'u32[144,128]{1,0:T(1,128)}', space=vmem, size = 0x12000, scoped, tag = 'internal scratch']
  #allocation2 [shape = 'f32[8,1]{1,0:T(8,128)}', space=vmem, size = 0x1000, scoped, tag = 'scratch operand']
  #allocation3 [shape = 'f32[8,1]{1,0:T(8,128)}', space=vmem, size = 0x1000, scoped, tag = 'scratch operand']
  #allocation4 [shape = 'f32[8,16]{1,0:T(8,128)}', space=vmem, size = 0x1000, scoped, tag = 'scratch operand']
  %s0 = inlined_call_operand.hbm [shape: bf16[4,8,16], index: 0, kind: input, shape index: {}]
  %s1 = inlined_call_operand.hbm [shape: bf16[4,8,16], index: 1, kind: input, shape index: {}]
  %s2 = inlined_call_operand.hbm [shape: bf16[4,8,16], index: 2, kind: input, shape index: {}]
  %s3 = inlined_call_operand.hbm [shape: f32[4,1,8], index: 3, kind: input, shape index: {}]
  %s4 = inlined_call_operand.hbm [shape: bf16[4,8,16], index: 4, kind: output, shape index: {}]
  %s5 = sld [smem:[#allocation0]]
  $region73: #{bert_net_forward.14} parent=0
    _
  %s7 = ssub.s32 1, %s5
  %s8 = scalar_select 0, %s7, %s5
  $region1: #{bert_net_forward.14} parent=0
    #allocation5 [shape = 'u8[4096]{0}', space=vmem, size = 0x1000, scoped, tag = 'input window, operand 0']
    #allocation6 [shape = 's32[2]{0}', space=sflag, size = 0x8, scoped, tag = 'scoped memory for bert_net_forward.14']
    #allocation7 [shape = 's32[2]{0}', space=sflag, size = 0x8, scoped, tag = 'scoped memory for bert_net_forward.14']
    #allocation8 [shape = 'u8[4096]{0}', space=vmem, size = 0x1000, scoped, tag = 'input window, operand 1']
    #allocation9 [shape = 's32[2]{0}', space=sflag, size = 0x8, scoped, tag = 'scoped memory for bert_net_forward.14']
    #allocation10 [shape = 'u8[4096]{0}', space=vmem, size = 0x1000, scoped, tag = 'input window, operand 2']
    #allocation11 [shape = 'u8[1024]{0}', space=vmem, size = 0x400, scoped, tag = 'input window, operand 3']
    #allocation12 [shape = 's32[2]{0}', space=sflag, size = 0x8, scoped, tag = 'scoped memory for bert_net_forward.14']
    #allocation13 [shape = 'u8[4096]{0}', space=vmem, size = 0x1000, scoped, tag = 'output window, operand 0']
    %9 = vsyncpa [#allocation6], 0
    %s10 = scalar_lea.sflag [#allocation6], 1
    %11 = vsyncpa %s10, 0
    %12 = vsyncpa [#allocation9], 0
    %s13 = scalar_lea.sflag [#allocation9], 1
    %14 = vsyncpa %s13, 0
    %15 = vsyncpa [#allocation12], 0
    %s16 = scalar_lea.sflag [#allocation12], 1
    %17 = vsyncpa %s16, 0
    %18 = vsyncpa [#allocation7], 0
    %s19 = scalar_lea.sflag [#allocation7], 1
    %20 = vsyncpa %s19, 0
    loop: start=0, step=1, limit=6
    $region2: #{bert_net_forward.14} parent=1 // loop_pre_header
      _
    $region3: #{bert_net_forward.14} parent=1 // loop_header
      %s22 = sphi 0, %s26
      %p23 = scmp.ge.s32.totalorder %s22, 6
      %s29 = sphi 0, %s48
      %s30 = sphi 0, %s44
      %s31 = sphi 0, %s40
      %s32 = sphi 0, %s29
      %s33 = sphi 0, %s30
      %s34 = sphi 0, %s31
      %s35 = sphi 0, %s32
      %s36 = sphi 0, %s33
      %s37 = sphi 0, %s34
      %s53 = sphi 0, %s55
      %s56 = sphi 0, %s53
      %s57 = sphi 0, %s56
      %s73 = sphi 0, %s57
      %s81 = sphi 0, %s83
      %s84 = sphi 0, %s81
      %s85 = sphi 0, %s84
      %s101 = sphi 0, %s85
      %s109 = sphi 0, %s111
      %s112 = sphi 0, %s109
      %s113 = sphi 0, %s112
      %s129 = sphi 0, %s113
      %s137 = sphi 0, %s139
      %s140 = sphi 0, %s137
      %s141 = sphi 0, %s140
      %s157 = sphi 0, %s141
      %s165 = sphi 0, %s167
      %s168 = sphi 0, %s165
      %s169 = sphi 0, %s168
      %s185 = sphi 0, %s169
    $region4: #{bert_net_forward.14} parent=1 // loop_header_branch
      %25 = sbr.rel (%p23) target = $region8
    $region5: #{bert_net_forward.14} parent=1 // loop_body
      %s27 = ssub.s32 %s22, 1
      %s28 = ssub.s32 %s22, 2
      %s38 = sadd.s32 1, %s31
      %p39 = scmp.ge.s32.totalorder %s38, 1
      %s40 = scalar_select %p39, 0, %s38
      %s41 = sadd.s32 1, %s30
      %s42 = scalar_select %p39, %s41, %s30
      %p43 = scmp.ge.s32.totalorder %s42, 1
      %s44 = scalar_select %p43, 0, %s42
      %s45 = sadd.s32 1, %s29
      %s46 = scalar_select %p43, %s45, %s29
      %p47 = scmp.ge.s32.totalorder %s46, 4
      %s48 = scalar_select %p47, 0, %s46
      %s49 = ssub.s32 %s29, %s48
      %s50 = ssub.s32 %s30, %s44
      %s51 = sor.u32 %s49, %s50
      %p52 = scmp.eq.s32.totalorder %s51, 0
      %s54 = sadd.s32 %s53, 1
      %s55 = scalar_select %p52, %s53, %s54
      %p58 = pneg %p52
      %p59 = scmp.eq.s32.totalorder %s22, 3
      %p60 = por %p58, %p59
      %p61 = scmp.ne.s32.totalorder %s53, %s56
      %p62 = scmp.eq.s32.totalorder %s22, 0
      %p63 = por %p61, %p62
      %p64 = scmp.ne.s32.totalorder %s53, %s56
      %p65 = scmp.eq.s32.totalorder %s27, 3
      %p66 = por %p64, %p65
      %p67 = scmp.ne.s32.totalorder %s56, %s57
      %p68 = scmp.eq.s32.totalorder %s27, 0
      %p69 = por %p67, %p68
      %p70 = scmp.ne.s32.totalorder %s56, %s57
      %p71 = scmp.eq.s32.totalorder %s28, 3
      %p72 = por %p70, %p71
      %p74 = scmp.ne.s32.totalorder %s57, %s73
      %p75 = scmp.eq.s32.totalorder %s28, 0
      %p76 = por %p74, %p75
      %s77 = ssub.s32 %s29, %s48
      %s78 = ssub.s32 %s31, %s40
      %s79 = sor.u32 %s77, %s78
      %p80 = scmp.eq.s32.totalorder %s79, 0
      %s82 = sadd.s32 %s81, 1
      %s83 = scalar_select %p80, %s81, %s82
      %p86 = pneg %p80
      %p87 = scmp.eq.s32.totalorder %s22, 3
      %p88 = por %p86, %p87
      %p89 = scmp.ne.s32.totalorder %s81, %s84
      %p90 = scmp.eq.s32.totalorder %s22, 0
      %p91 = por %p89, %p90
      %p92 = scmp.ne.s32.totalorder %s81, %s84
      %p93 = scmp.eq.s32.totalorder %s27, 3
      %p94 = por %p92, %p93
      %p95 = scmp.ne.s32.totalorder %s84, %s85
      %p96 = scmp.eq.s32.totalorder %s27, 0
      %p97 = por %p95, %p96
      %p98 = scmp.ne.s32.totalorder %s84, %s85
      %p99 = scmp.eq.s32.totalorder %s28, 3
      %p100 = por %p98, %p99
      %p102 = scmp.ne.s32.totalorder %s85, %s101
      %p103 = scmp.eq.s32.totalorder %s28, 0
      %p104 = por %p102, %p103
      %s105 = ssub.s32 %s29, %s48
      %s106 = ssub.s32 %s31, %s40
      %s107 = sor.u32 %s105, %s106
      %p108 = scmp.eq.s32.totalorder %s107, 0
      %s110 = sadd.s32 %s109, 1
      %s111 = scalar_select %p108, %s109, %s110
      %p114 = pneg %p108
      %p115 = scmp.eq.s32.totalorder %s22, 3
      %p116 = por %p114, %p115
      %p117 = scmp.ne.s32.totalorder %s109, %s112
      %p118 = scmp.eq.s32.totalorder %s22, 0
      %p119 = por %p117, %p118
      %p120 = scmp.ne.s32.totalorder %s109, %s112
      %p121 = scmp.eq.s32.totalorder %s27, 3
      %p122 = por %p120, %p121
      %p123 = scmp.ne.s32.totalorder %s112, %s113
      %p124 = scmp.eq.s32.totalorder %s27, 0
      %p125 = por %p123, %p124
      %p126 = scmp.ne.s32.totalorder %s112, %s113
      %p127 = scmp.eq.s32.totalorder %s28, 3
      %p128 = por %p126, %p127
      %p130 = scmp.ne.s32.totalorder %s113, %s129
      %p131 = scmp.eq.s32.totalorder %s28, 0
      %p132 = por %p130, %p131
      %s133 = ssub.s32 %s29, %s48
      %s134 = ssub.s32 %s31, %s40
      %s135 = sor.u32 %s133, %s134
      %p136 = scmp.eq.s32.totalorder %s135, 0
      %s138 = sadd.s32 %s137, 1
      %s139 = scalar_select %p136, %s137, %s138
      %p142 = pneg %p136
      %p143 = scmp.eq.s32.totalorder %s22, 3
      %p144 = por %p142, %p143
      %p145 = scmp.ne.s32.totalorder %s137, %s140
      %p146 = scmp.eq.s32.totalorder %s22, 0
      %p147 = por %p145, %p146
      %p148 = scmp.ne.s32.totalorder %s137, %s140
      %p149 = scmp.eq.s32.totalorder %s27, 3
      %p150 = por %p148, %p149
      %p151 = scmp.ne.s32.totalorder %s140, %s141
      %p152 = scmp.eq.s32.totalorder %s27, 0
      %p153 = por %p151, %p152
      %p154 = scmp.ne.s32.totalorder %s140, %s141
      %p155 = scmp.eq.s32.totalorder %s28, 3
      %p156 = por %p154, %p155
      %p158 = scmp.ne.s32.totalorder %s141, %s157
      %p159 = scmp.eq.s32.totalorder %s28, 0
      %p160 = por %p158, %p159
      %s161 = ssub.s32 %s29, %s48
      %s162 = ssub.s32 %s30, %s44
      %s163 = sor.u32 %s161, %s162
      %p164 = scmp.eq.s32.totalorder %s163, 0
      %s166 = sadd.s32 %s165, 1
      %s167 = scalar_select %p164, %s165, %s166
      %p170 = pneg %p164
      %p171 = scmp.eq.s32.totalorder %s22, 3
      %p172 = por %p170, %p171
      %p173 = scmp.ne.s32.totalorder %s165, %s168
      %p174 = scmp.eq.s32.totalorder %s22, 0
      %p175 = por %p173, %p174
      %p176 = scmp.ne.s32.totalorder %s165, %s168
      %p177 = scmp.eq.s32.totalorder %s27, 3
      %p178 = por %p176, %p177
      %p179 = scmp.ne.s32.totalorder %s168, %s169
      %p180 = scmp.eq.s32.totalorder %s27, 0
      %p181 = por %p179, %p180
      %p182 = scmp.ne.s32.totalorder %s168, %s169
      %p183 = scmp.eq.s32.totalorder %s28, 3
      %p184 = por %p182, %p183
      %p186 = scmp.ne.s32.totalorder %s169, %s185
      %p187 = scmp.eq.s32.totalorder %s28, 0
      %p188 = por %p186, %p187
      %p189 = scmp.le.s32.totalorder 1, %s22
      %p190 = scmp.lt.s32.totalorder %s22, 5
      %p191 = pnand %p189, %p190
      %p192 = pneg %p191
      // Predicated region
      $region9: #{bert_net_forward.14} parent=5 // pred_check
        _
      $region10: #{bert_net_forward.14} parent=5 // pred_check_branch
        %194 = sbr.rel (%p191) target = $region12
      $region11: #{bert_net_forward.14} parent=5 // pred_region
        %s195 = ssub.s32 %s22, 1
      $region12: #{bert_net_forward.14} parent=5 // pred_fallthru
        _
      %p196 = scmp.lt.s32.totalorder %s22, 4
      // Predicated region
      $region13: #{bert_net_forward.14} parent=5 // pred_check
        %p197 = pneg %p196
      $region14: #{bert_net_forward.14} parent=5 // pred_check_branch
        %199 = sbr.rel (%p197) target = $region16
      $region15: #{bert_net_forward.14} parent=5 // pred_region
        // Predicated region
        $region17: #{bert_net_forward.14} parent=15 // pred_check
          %p200 = pneg %p63
        $region18: #{bert_net_forward.14} parent=15 // pred_check_branch
          %202 = sbr.rel (%p200) target = $region20
        $region19: #{bert_net_forward.14} parent=15 // pred_region
          %s203 = sand.u32 %s53, 1
          %s204 = scalar_lea.sflag [#allocation6], %s203
          %s205 = sand.u32 %s53, 1
          %s206 = smul.addr %s205, 4
          %s207 = scalar_lea.vmem [#allocation5], %s206
          %s209 = ssub.s32 64, 64
          %210 = vsyncadd %s204, %s209
          %s211 = sadd.s32 %s30, %s29
          %s212 = smul.addr %s211, 64
          %s213 = scalar_lea.hbm %s0, %s212
          %s215 = sshll.u32 %s207, 4
          %s216 = int_to_ptr.vmem [resolvable:$true] %s215
          %218 = dma.hbm_to_vmem [thread:$0]  %s213, 64, %s216, %s204
        $region20: #{bert_net_forward.14} parent=15 // pred_fallthru
          _
        // Predicated region
        $region21: #{bert_net_forward.14} parent=15 // pred_check
          %p219 = pneg %p91
        $region22: #{bert_net_forward.14} parent=15 // pred_check_branch
          %221 = sbr.rel (%p219) target = $region24
        $region23: #{bert_net_forward.14} parent=15 // pred_region
          %s222 = sand.u32 %s22, 1
          %s223 = scalar_lea.sflag [#allocation9], %s222
          %s224 = sand.u32 %s81, 1
          %s225 = smul.addr %s224, 4
          %s226 = scalar_lea.vmem [#allocation8], %s225
          %s228 = ssub.s32 64, 64
          %229 = vsyncadd %s223, %s228
          %s230 = sadd.s32 %s31, %s29
          %s231 = smul.addr %s230, 64
          %s232 = scalar_lea.hbm %s1, %s231
          %s234 = sshll.u32 %s226, 4
          %s235 = int_to_ptr.vmem [resolvable:$true] %s234
          %237 = dma.hbm_to_vmem [thread:$0]  %s232, 64, %s235, %s223
        $region24: #{bert_net_forward.14} parent=15 // pred_fallthru
          _
        // Predicated region
        $region25: #{bert_net_forward.14} parent=15 // pred_check
          %p238 = pneg %p119
        $region26: #{bert_net_forward.14} parent=15 // pred_check_branch
          %240 = sbr.rel (%p238) target = $region28
        $region27: #{bert_net_forward.14} parent=15 // pred_region
          %s241 = sand.u32 %s22, 1
          %s242 = scalar_lea.sflag [#allocation9], %s241
          %s243 = sand.u32 %s109, 1
          %s244 = smul.addr %s243, 4
          %s245 = scalar_lea.vmem [#allocation10], %s244
          %s247 = ssub.s32 64, 64
          %248 = vsyncadd %s242, %s247
          %s249 = sadd.s32 %s31, %s29
          %s250 = smul.addr %s249, 64
          %s251 = scalar_lea.hbm %s2, %s250
          %s253 = sshll.u32 %s245, 4
          %s254 = int_to_ptr.vmem [resolvable:$true] %s253
          %256 = dma.hbm_to_vmem [thread:$0]  %s251, 64, %s254, %s242
        $region28: #{bert_net_forward.14} parent=15 // pred_fallthru
          _
        // Predicated region
        $region29: #{bert_net_forward.14} parent=15 // pred_check
          %p257 = pneg %p147
        $region30: #{bert_net_forward.14} parent=15 // pred_check_branch
          %259 = sbr.rel (%p257) target = $region32
        $region31: #{bert_net_forward.14} parent=15 // pred_region
          %s260 = sand.u32 %s137, 1
          %s261 = scalar_lea.sflag [#allocation12], %s260
          %s262 = sand.u32 %s137, 1
          %s263 = scalar_lea.vmem [#allocation11], %s262
          %s265 = ssub.s32 16, 16
          %266 = vsyncadd %s261, %s265
          %s267 = sadd.s32 %s31, %s29
          %s268 = smul.addr %s267, 16
          %s269 = scalar_lea.hbm %s3, %s268
          %s271 = sshll.u32 %s263, 4
          %s272 = int_to_ptr.vmem [resolvable:$true] %s271
          %274 = dma.hbm_to_vmem [thread:$0]  %s269, 16, %s272, %s261
        $region32: #{bert_net_forward.14} parent=15 // pred_fallthru
          _
      $region16: #{bert_net_forward.14} parent=5 // pred_fallthru
        _
      %p275 = scmp.le.s32.totalorder 1, %s22
      %p276 = scmp.lt.s32.totalorder %s22, 5
      %p277 = pnand %p275, %p276
      %p278 = pneg %p277
      // Predicated region
      $region33: #{bert_net_forward.14} parent=5 // pred_check
        _
      $region34: #{bert_net_forward.14} parent=5 // pred_check_branch
        %280 = sbr.rel (%p277) target = $region36
      $region35: #{bert_net_forward.14} parent=5 // pred_region
        %s281 = ssub.s32 %s22, 1
        %s282 = sand.u32 %s56, 1
        %s283 = scalar_lea.sflag [#allocation6], %s282
        %s284 = sand.u32 %s56, 1
        %s285 = smul.addr %s284, 4
        %s286 = scalar_lea.vmem [#allocation5], %s285
        // Predicated region
        $region37: #{bert_net_forward.14} parent=35 // pred_check
          %p287 = pneg %p69
        $region38: #{bert_net_forward.14} parent=35 // pred_check_branch
          %289 = sbr.rel (%p287) target = $region40
        $region39: #{bert_net_forward.14} parent=35 // pred_region
          %290 = dma.done %s283, 64
        $region40: #{bert_net_forward.14} parent=35 // pred_fallthru
          _
        %s291 = sand.u32 %s27, 1
        %s292 = scalar_lea.sflag [#allocation9], %s291
        %s293 = sand.u32 %s84, 1
        %s294 = smul.addr %s293, 4
        %s295 = scalar_lea.vmem [#allocation8], %s294
        // Predicated region
        $region41: #{bert_net_forward.14} parent=35 // pred_check
          %p296 = pneg %p97
        $region42: #{bert_net_forward.14} parent=35 // pred_check_branch
          %298 = sbr.rel (%p296) target = $region44
        $region43: #{bert_net_forward.14} parent=35 // pred_region
          %299 = dma.done %s292, 64
        $region44: #{bert_net_forward.14} parent=35 // pred_fallthru
          _
        %s300 = sand.u32 %s27, 1
        %s301 = scalar_lea.sflag [#allocation9], %s300
        %s302 = sand.u32 %s112, 1
        %s303 = smul.addr %s302, 4
        %s304 = scalar_lea.vmem [#allocation10], %s303
        // Predicated region
        $region45: #{bert_net_forward.14} parent=35 // pred_check
          %p305 = pneg %p125
        $region46: #{bert_net_forward.14} parent=35 // pred_check_branch
          %307 = sbr.rel (%p305) target = $region48
        $region47: #{bert_net_forward.14} parent=35 // pred_region
          %308 = dma.done %s301, 64
        $region48: #{bert_net_forward.14} parent=35 // pred_fallthru
          _
        %s309 = sand.u32 %s140, 1
        %s310 = scalar_lea.sflag [#allocation12], %s309
        %s311 = sand.u32 %s140, 1
        %s312 = scalar_lea.vmem [#allocation11], %s311
        // Predicated region
        $region49: #{bert_net_forward.14} parent=35 // pred_check
          %p313 = pneg %p153
        $region50: #{bert_net_forward.14} parent=35 // pred_check_branch
          %315 = sbr.rel (%p313) target = $region52
        $region51: #{bert_net_forward.14} parent=35 // pred_region
          %316 = dma.done %s310, 16
        $region52: #{bert_net_forward.14} parent=35 // pred_fallthru
          _
        %s317 = sand.u32 %s56, 1
        %s318 = scalar_lea.sflag [#allocation6], %s317
        %s319 = sand.u32 %s56, 1
        %s320 = smul.addr %s319, 4
        %s321 = scalar_lea.vmem [#allocation5], %s320
        %p322 = pneg %p69
        %p323 = pneg %p66
        %s324 = sand.u32 %s27, 1
        %s325 = scalar_lea.sflag [#allocation9], %s324
        %s326 = sand.u32 %s84, 1
        %s327 = smul.addr %s326, 4
        %s328 = scalar_lea.vmem [#allocation8], %s327
        %p329 = pneg %p97
        %p330 = pneg %p94
        %s331 = sand.u32 %s27, 1
        %s332 = scalar_lea.sflag [#allocation9], %s331
        %s333 = sand.u32 %s112, 1
        %s334 = smul.addr %s333, 4
        %s335 = scalar_lea.vmem [#allocation10], %s334
        %p336 = pneg %p125
        %p337 = pneg %p122
        %s338 = sand.u32 %s140, 1
        %s339 = scalar_lea.sflag [#allocation12], %s338
        %s340 = sand.u32 %s140, 1
        %s341 = scalar_lea.vmem [#allocation11], %s340
        %p342 = pneg %p153
        %p343 = pneg %p150
        %p344 = pneg %p181
        %p345 = pneg %p178
        %s346 = sand.u32 %s168, 1
        %s347 = scalar_lea.sflag [#allocation7], %s346
        %s348 = sand.u32 %s168, 1
        %s349 = smul.addr %s348, 4
        %s350 = scalar_lea.vmem [#allocation13], %s349
        %p352 = scmp.eq.s32.totalorder %s34, 0
        // Predicated region
        $region53: #{bert_net_forward.14} parent=35 // pred_check
          %p353 = pneg %p352
        $region54: #{bert_net_forward.14} parent=35 // pred_check_branch
          %355 = sbr.rel (%p353) target = $region56
        $region55: #{bert_net_forward.14} parent=35 // pred_region
          %vm356 = vcmask 7168
          %357 = vst.msk [vmem:[#allocation2] sm:$0xff] %vm356, -inf
          %358 = vst.msk [vmem:[#allocation3] sm:$0xff] %vm356, 0.0
          %vm359 = vcmask 130048
          %360 = vst.msk [vmem:[#allocation4] sm:$0xff] %vm359, 0.0
        $region56: #{bert_net_forward.14} parent=35 // pred_fallthru
          _
        %v361 = vld [vmem:[%s286] sm:$0xf]
        %v362 = vld [vmem:[%s295] sm:$0xf]
        %v363 = vld [vmem:[%s304] sm:$0xf]
        %vm364 = vcmask 130048
        %v366 = vsel %vm364, %v361, 0
        %v369 = vsel %vm364, %v362, 0
        %371 = vmatprep.subr.bf16.mxu0 0
        %372 = vmatpush1.bf16.xpose.msra.mxu0 %v369
        %373 = vmatprep.subr.bf16.mxu0 0
        %374 = vmatpush1.bf16.xpose.msra.mxu0 0
        %375 = vmatprep.subr.bf16.mxu0 0
        %376 = vmatpush1.bf16.xpose.msra.mxu0 0
        %377 = vmatprep.subr.bf16.mxu0 0
        %378 = vmatpush1.bf16.xpose.msra.mxu0 0
        %379 = vmatprep.subr.bf16.mxu0 0
        %380 = vmatpush1.bf16.xpose.msra.mxu0 0
        %381 = vmatprep.subr.bf16.mxu0 0
        %382 = vmatpush1.bf16.xpose.msra.mxu0 0
        %383 = vmatprep.subr.bf16.mxu0 0
        %384 = vmatpush1.bf16.xpose.msra.mxu0 0
        %385 = vmatprep.subr.bf16.mxu0 0
        %386 = vmatpush1.bf16.xpose.msra.mxu0 0
        %387 = vmatprep.subr.bf16.mxu0 0
        %388 = vmatpush1.bf16.xpose.msra.mxu0 0
        %389 = vmatprep.subr.bf16.mxu0 0
        %390 = vmatpush1.bf16.xpose.msra.mxu0 0
        %391 = vmatprep.subr.bf16.mxu0 0
        %392 = vmatpush1.bf16.xpose.msra.mxu0 0
        %393 = vmatprep.subr.bf16.mxu0 0
        %394 = vmatpush1.bf16.xpose.msra.mxu0 0
        %395 = vmatprep.subr.bf16.mxu0 0
        %396 = vmatpush1.bf16.xpose.msra.mxu0 0
        %397 = vmatprep.subr.bf16.mxu0 0
        %398 = vmatpush1.bf16.xpose.msra.mxu0 0
        %399 = vmatprep.subr.bf16.mxu0 0
        %400 = vmatpush1.bf16.xpose.msra.mxu0 0
        %401 = vmatprep.subr.bf16.mxu0 0
        %402 = vmatpush1.bf16.xpose.msra.mxu0 0
        %403 = vmatprep.mubr.bf16.mxu0 0
        %404 = vmatmul.mubr.bf16.gmra.mrb[0].mxu0 %v366
        %v405 = vpop.f32.mrb[0].mxu0
        %v406 = vadd.f32 0.0, %v405
        %v407 = vpop.f32.mrb[0].mxu0
        %v408 = vpop.f32.mrb[0].mxu0
        %v409 = vpop.f32.mrb[0].mxu0
        %410 = vdwg.mxu0
        %v411 = vmul.f32 %v406, 0.25
        %v412 = vld [vmem:[%s312] sm:$0x1]
        %v414 = vlaneseq
        %v415 = vshrl.u32 %v414, 7
        %v416 = vsub.s32 0, %v415
        %v417 = vrot.slane %v412, %v416
        %v419 = vadd.f32 %v411, %v417
        %v420 = vld [vmem:[#allocation2] sm:$0xff]
        %vm421 = vcmask 64512
        %v422 = vsel %vm421, %v419, -inf
        %423 = vmax.xlane.f32.xlu0 %v422
        %v424 = vpop.xlane.xlu0 %423
        %v425 = vmax.f32 %v420, %v424
        %v426 = vsub.f32 %v420, %v425
        %v427 = vmul.f32 %v426, 1.442695
        %v428 = vpow.pop %v427
        %430 = vset.pattern.permute.xlu0 0
        %431 = vperm.xlu0 %430, %v425
        %v432 = vpop.permute.xlu0 %431
        %v434 = vsub.f32 %v419, %v432
        %v435 = vmul.f32 %v434, 1.442695
        %v436 = vpow.pop %v435
        %v437 = vld [vmem:[#allocation3] sm:$0xff]
        %v438 = vmul.f32 %v428, %v437
        %v439 = vsel %vm421, %v436, 0.0
        %440 = vadd.xlane.f32.xlu0 %v439
        %v441 = vpop.xlane.xlu0 %440
        %v442 = vadd.f32 %v438, %v441
        %vm443 = vcmask 7168
        %444 = vst.msk [vmem:[#allocation3] sm:$0xff] %vm443, %v442
        %v445 = vld [vmem:[#allocation4] sm:$0xff]
        %447 = vset.pattern.permute.xlu0 0
        %448 = vperm.xlu0 %447, %v428
        %v449 = vpop.permute.xlu0 %448
        %v451 = vmul.f32 %v449, %v445
        %v452 = vpack.c.bf16 %v436, %v436
        %v454 = vsel %vm421, %v452, 0
        %vm456 = vcmask 1043456
        %v458 = vsel %vm456, %v363, 0
        %460 = vmatprep.subr.bf16.mxu0 0
        %461 = vmatpush1.bf16.msra.mxu0 %v458
        %462 = vmatprep.subr.bf16.mxu0 0
        %463 = vmatpush1.bf16.msra.mxu0 0
        %464 = vmatprep.subr.bf16.mxu0 0
        %465 = vmatpush1.bf16.msra.mxu0 0
        %466 = vmatprep.subr.bf16.mxu0 0
        %467 = vmatpush1.bf16.msra.mxu0 0
        %468 = vmatprep.subr.bf16.mxu0 0
        %469 = vmatpush1.bf16.msra.mxu0 0
        %470 = vmatprep.subr.bf16.mxu0 0
        %471 = vmatpush1.bf16.msra.mxu0 0
        %472 = vmatprep.subr.bf16.mxu0 0
        %473 = vmatpush1.bf16.msra.mxu0 0
        %474 = vmatprep.subr.bf16.mxu0 0
        %475 = vmatpush1.bf16.msra.mxu0 0
        %476 = vmatprep.subr.bf16.mxu0 0
        %477 = vmatpush1.bf16.msra.mxu0 0
        %478 = vmatprep.subr.bf16.mxu0 0
        %479 = vmatpush1.bf16.msra.mxu0 0
        %480 = vmatprep.subr.bf16.mxu0 0
        %481 = vmatpush1.bf16.msra.mxu0 0
        %482 = vmatprep.subr.bf16.mxu0 0
        %483 = vmatpush1.bf16.msra.mxu0 0
        %484 = vmatprep.subr.bf16.mxu0 0
        %485 = vmatpush1.bf16.msra.mxu0 0
        %486 = vmatprep.subr.bf16.mxu0 0
        %487 = vmatpush1.bf16.msra.mxu0 0
        %488 = vmatprep.subr.bf16.mxu0 0
        %489 = vmatpush1.bf16.msra.mxu0 0
        %490 = vmatprep.subr.bf16.mxu0 0
        %491 = vmatpush1.bf16.msra.mxu0 0
        %492 = vmatprep.mubr.bf16.mxu0 0
        %493 = vmatmul.mubr.bf16.gmra.mrb[0].mxu0 %v454
        %v494 = vpop.f32.mrb[0].mxu0
        %v495 = vadd.f32 0.0, %v494
        %v496 = vpop.f32.mrb[0].mxu0
        %v497 = vpop.f32.mrb[0].mxu0
        %v498 = vpop.f32.mrb[0].mxu0
        %499 = vdwg.mxu0
        %v500 = vadd.f32 %v451, %v495
        %501 = vst.msk [vmem:[#allocation4] sm:$0xff] %vm364, %v500
        %502 = vst.msk [vmem:[#allocation2] sm:$0xff] %vm443, %v425
        // Predicated region
        $region57: #{bert_net_forward.14} parent=35 // pred_check
          %p503 = pneg %p352
        $region58: #{bert_net_forward.14} parent=35 // pred_check_branch
          %505 = sbr.rel (%p503) target = $region60
        $region59: #{bert_net_forward.14} parent=35 // pred_region
          %v506 = vld [vmem:[#allocation4] sm:$0xff]
          %v507 = vld [vmem:[#allocation3] sm:$0xff]
          %v508 = vrcp.pop %v507
          %510 = vset.pattern.permute.xlu0 0
          %511 = vperm.xlu0 %510, %v508
          %v512 = vpop.permute.xlu0 %511
          %v514 = vmul.f32 %v506, %v512
          %v515 = vpack.c.bf16 %v514, %v514
          %vm516 = vcmask 125952
          %517 = vst.msk [vmem:[%s350] sm:$0xf] %vm516, %v515
        $region60: #{bert_net_forward.14} parent=35 // pred_fallthru
          _
        %s518 = sand.u32 %s168, 1
        %s519 = scalar_lea.sflag [#allocation7], %s518
        %s520 = sand.u32 %s168, 1
        %s521 = smul.addr %s520, 4
        %s522 = scalar_lea.vmem [#allocation13], %s521
        // Predicated region
        $region61: #{bert_net_forward.14} parent=35 // pred_check
          %p523 = pneg %p178
        $region62: #{bert_net_forward.14} parent=35 // pred_check_branch
          %525 = sbr.rel (%p523) target = $region64
        $region63: #{bert_net_forward.14} parent=35 // pred_region
          %s527 = ssub.s32 64, 64
          %528 = vsyncadd %s519, %s527
          %s529 = sadd.s32 %s33, %s32
          %s530 = smul.addr %s529, 64
          %s531 = scalar_lea.hbm %s4, %s530
          %s533 = sshll.u32 %s522, 4
          %s534 = int_to_ptr.vmem [resolvable:$true] %s533
          %536 = dma.vmem_to_hbm [thread:$0]  %s534, 64, %s531, %s519
        $region64: #{bert_net_forward.14} parent=35 // pred_fallthru
          _
      $region36: #{bert_net_forward.14} parent=5 // pred_fallthru
        _
      %p537 = scmp.le.s32.totalorder 2, %s22
      // Predicated region
      $region65: #{bert_net_forward.14} parent=5 // pred_check
        %p538 = pneg %p537
      $region66: #{bert_net_forward.14} parent=5 // pred_check_branch
        %540 = sbr.rel (%p538) target = $region68
      $region67: #{bert_net_forward.14} parent=5 // pred_region
        %s541 = ssub.s32 %s22, 2
        // Predicated region
        $region69: #{bert_net_forward.14} parent=67 // pred_check
          %p542 = pneg %p184
        $region70: #{bert_net_forward.14} parent=67 // pred_check_branch
          %544 = sbr.rel (%p542) target = $region72
        $region71: #{bert_net_forward.14} parent=67 // pred_region
          %s545 = sand.u32 %s169, 1
          %s546 = scalar_lea.sflag [#allocation7], %s545
          %s547 = sand.u32 %s169, 1
          %s548 = smul.addr %s547, 4
          %s549 = scalar_lea.vmem [#allocation13], %s548
          %550 = dma.done %s546, 64
        $region72: #{bert_net_forward.14} parent=67 // pred_fallthru
          _
      $region68: #{bert_net_forward.14} parent=5 // pred_fallthru
        _
    $region6: #{bert_net_forward.14} parent=1 // loop_footer
      %s26 = sadd.s32 1, %s22
    $region7: #{bert_net_forward.14} parent=1 // loop_footer_branch
      %21 = sbr.rel target = $region3
    $region8: #{bert_net_forward.14} parent=1 // loop_exit
      _
    %551 = vsyncpa [#allocation6], 1
    %s552 = scalar_lea.sflag [#allocation6], 1
    %553 = vsyncpa %s552, 1
    %554 = vsyncpa [#allocation9], 1
    %s555 = scalar_lea.sflag [#allocation9], 1
    %556 = vsyncpa %s555, 1
    %557 = vsyncpa [#allocation12], 1
    %s558 = scalar_lea.sflag [#allocation12], 1
    %559 = vsyncpa %s558, 1
    %560 = vsyncpa [#allocation7], 1
    %s561 = scalar_lea.sflag [#allocation7], 1
    %562 = vsyncpa %s561, 1

// kernel: bert_net_forward.15
$region0: #{bert_net_forward.15}
  #allocation0 [shape = 'u32[]', space=smem, size = 0x4, offset = 0x4, fixed_abs, tag = 'smem constant byte address 0x4 - core index']
  #allocation1 [shape = 'u32[144,128]{1,0:T(1,128)}', space=vmem, size = 0x12000, scoped, tag = 'internal scratch']
  #allocation2 [shape = 'f32[16,32]{1,0:T(8,128)}', space=vmem, size = 0x2000, scoped, tag = 'scratch operand']
  %s0 = inlined_call_operand.hbm [shape: bf16[16,32], index: 0, kind: input, shape index: {}]
  %s1 = inlined_call_operand.hbm [shape: bf16[32,32], index: 1, kind: input, shape index: {}]
  %s2 = inlined_call_operand.hbm [shape: f32[1,32], index: 2, kind: input, shape index: {}]
  %s3 = inlined_call_operand.hbm [shape: bf16[16,32], index: 3, kind: input, shape index: {}]
  %s4 = inlined_call_operand.hbm [shape: f32[1,32], index: 4, kind: input, shape index: {}]
  %s5 = inlined_call_operand.hbm [shape: f32[1,32], index: 5, kind: input, shape index: {}]
  %s6 = inlined_call_operand.hbm [shape: bf16[16,32], index: 6, kind: output, shape index: {}]
  %s7 = sld [smem:[#allocation0]]
  $region66: #{bert_net_forward.15} parent=0
    _
  %s9 = ssub.s32 1, %s7
  %s10 = scalar_select 0, %s9, %s7
  $region1: #{bert_net_forward.15} parent=0
    #allocation3 [shape = 'u8[4096]{0}', space=vmem, size = 0x1000, scoped, tag = 'input window, operand 0, single buffered']
    #allocation4 [shape = 's32[1]{0}', space=sflag, size = 0x4, scoped, tag = 'scoped memory for bert_net_forward.15']
    #allocation5 [shape = 's32[1]{0}', space=sflag, size = 0x4, scoped, tag = 'scoped memory for bert_net_forward.15']
    #allocation6 [shape = 'u8[8192]{0}', space=vmem, size = 0x2000, scoped, tag = 'input window, operand 1, single buffered']
    #allocation7 [shape = 's32[1]{0}', space=sflag, size = 0x4, scoped, tag = 'scoped memory for bert_net_forward.15']
    #allocation8 [shape = 'u8[512]{0}', space=vmem, size = 0x400, scoped, tag = 'input window, operand 2, single buffered']
    #allocation9 [shape = 'u8[4096]{0}', space=vmem, size = 0x1000, scoped, tag = 'input window, operand 3, single buffered']
    #allocation10 [shape = 's32[1]{0}', space=sflag, size = 0x4, scoped, tag = 'scoped memory for bert_net_forward.15']
    #allocation11 [shape = 'u8[512]{0}', space=vmem, size = 0x400, scoped, tag = 'input window, operand 4, single buffered']
    #allocation12 [shape = 'u8[512]{0}', space=vmem, size = 0x400, scoped, tag = 'input window, operand 5, single buffered']
    #allocation13 [shape = 's32[1]{0}', space=sflag, size = 0x4, scoped, tag = 'scoped memory for bert_net_forward.15']
    #allocation14 [shape = 'u8[4096]{0}', space=vmem, size = 0x1000, scoped, tag = 'output window, operand 0, single buffered']
    %11 = vsyncpa [#allocation4], 0
    %12 = vsyncpa [#allocation7], 0
    %13 = vsyncpa [#allocation10], 0
    %14 = vsyncpa [#allocation13], 0
    %15 = vsyncpa [#allocation5], 0
    // Predicated region
    $region2: #{bert_net_forward.15} parent=1 // pred_check
      _
    $region3: #{bert_net_forward.15} parent=1 // pred_check_branch
      %17 = sbr.rel (0) target = $region5
    $region4: #{bert_net_forward.15} parent=1 // pred_region
      %s19 = ssub.s32 128, 128
      %20 = vsyncadd [#allocation4], %s19
      %s21 = sshll.u32 [#allocation3], 4
      %s22 = int_to_ptr.vmem [resolvable:$true] %s21
      %27 = dma.hbm_to_vmem [thread:$0]  %s0, 128, %s22, [#allocation4], 64, 64, 4
    $region5: #{bert_net_forward.15} parent=1 // pred_fallthru
      _
    // Predicated region
    $region6: #{bert_net_forward.15} parent=1 // pred_check
      _
    $region7: #{bert_net_forward.15} parent=1 // pred_check_branch
      %29 = sbr.rel (0) target = $region9
    $region8: #{bert_net_forward.15} parent=1 // pred_region
      %s31 = ssub.s32 256, 256
      %32 = vsyncadd [#allocation7], %s31
      %s33 = sshll.u32 [#allocation6], 4
      %s34 = int_to_ptr.vmem [resolvable:$true] %s33
      %39 = dma.hbm_to_vmem [thread:$0]  %s1, 256, %s34, [#allocation7], 64, 64, 4
    $region9: #{bert_net_forward.15} parent=1 // pred_fallthru
      _
    // Predicated region
    $region10: #{bert_net_forward.15} parent=1 // pred_check
      _
    $region11: #{bert_net_forward.15} parent=1 // pred_check_branch
      %41 = sbr.rel (0) target = $region13
    $region12: #{bert_net_forward.15} parent=1 // pred_region
      %s43 = ssub.s32 16, 16
      %44 = vsyncadd [#allocation7], %s43
      %s46 = sshll.u32 [#allocation8], 4
      %s47 = int_to_ptr.vmem [resolvable:$true] %s46
      %49 = dma.hbm_to_vmem [thread:$0]  %s2, 16, %s47, [#allocation7]
    $region13: #{bert_net_forward.15} parent=1 // pred_fallthru
      _
    // Predicated region
    $region14: #{bert_net_forward.15} parent=1 // pred_check
      _
    $region15: #{bert_net_forward.15} parent=1 // pred_check_branch
      %51 = sbr.rel (0) target = $region17
    $region16: #{bert_net_forward.15} parent=1 // pred_region
      %s53 = ssub.s32 128, 128
      %54 = vsyncadd [#allocation10], %s53
      %s55 = sshll.u32 [#allocation9], 4
      %s56 = int_to_ptr.vmem [resolvable:$true] %s55
      %61 = dma.hbm_to_vmem [thread:$0]  %s3, 128, %s56, [#allocation10], 64, 64, 4
    $region17: #{bert_net_forward.15} parent=1 // pred_fallthru
      _
    // Predicated region
    $region18: #{bert_net_forward.15} parent=1 // pred_check
      _
    $region19: #{bert_net_forward.15} parent=1 // pred_check_branch
      %63 = sbr.rel (0) target = $region21
    $region20: #{bert_net_forward.15} parent=1 // pred_region
      %s65 = ssub.s32 16, 16
      %66 = vsyncadd [#allocation10], %s65
      %s68 = sshll.u32 [#allocation11], 4
      %s69 = int_to_ptr.vmem [resolvable:$true] %s68
      %71 = dma.hbm_to_vmem [thread:$0]  %s4, 16, %s69, [#allocation10]
    $region21: #{bert_net_forward.15} parent=1 // pred_fallthru
      _
    // Predicated region
    $region22: #{bert_net_forward.15} parent=1 // pred_check
      _
    $region23: #{bert_net_forward.15} parent=1 // pred_check_branch
      %73 = sbr.rel (0) target = $region25
    $region24: #{bert_net_forward.15} parent=1 // pred_region
      %s75 = ssub.s32 16, 16
      %76 = vsyncadd [#allocation13], %s75
      %s78 = sshll.u32 [#allocation12], 4
      %s79 = int_to_ptr.vmem [resolvable:$true] %s78
      %81 = dma.hbm_to_vmem [thread:$0]  %s5, 16, %s79, [#allocation13]
    $region25: #{bert_net_forward.15} parent=1 // pred_fallthru
      _
    // Predicated region
    $region26: #{bert_net_forward.15} parent=1 // pred_check
      _
    $region27: #{bert_net_forward.15} parent=1 // pred_check_branch
      %83 = sbr.rel (0) target = $region29
    $region28: #{bert_net_forward.15} parent=1 // pred_region
      %84 = dma.done [#allocation4], 128
    $region29: #{bert_net_forward.15} parent=1 // pred_fallthru
      _
    // Predicated region
    $region30: #{bert_net_forward.15} parent=1 // pred_check
      _
    $region31: #{bert_net_forward.15} parent=1 // pred_check_branch
      %86 = sbr.rel (0) target = $region33
    $region32: #{bert_net_forward.15} parent=1 // pred_region
      %87 = dma.done [#allocation7], 256
    $region33: #{bert_net_forward.15} parent=1 // pred_fallthru
      _
    // Predicated region
    $region34: #{bert_net_forward.15} parent=1 // pred_check
      _
    $region35: #{bert_net_forward.15} parent=1 // pred_check_branch
      %89 = sbr.rel (0) target = $region37
    $region36: #{bert_net_forward.15} parent=1 // pred_region
      %90 = dma.done [#allocation7], 16
    $region37: #{bert_net_forward.15} parent=1 // pred_fallthru
      _
    // Predicated region
    $region38: #{bert_net_forward.15} parent=1 // pred_check
      _
    $region39: #{bert_net_forward.15} parent=1 // pred_check_branch
      %92 = sbr.rel (0) target = $region41
    $region40: #{bert_net_forward.15} parent=1 // pred_region
      %93 = dma.done [#allocation10], 128
    $region41: #{bert_net_forward.15} parent=1 // pred_fallthru
      _
    // Predicated region
    $region42: #{bert_net_forward.15} parent=1 // pred_check
      _
    $region43: #{bert_net_forward.15} parent=1 // pred_check_branch
      %95 = sbr.rel (0) target = $region45
    $region44: #{bert_net_forward.15} parent=1 // pred_region
      %96 = dma.done [#allocation10], 16
    $region45: #{bert_net_forward.15} parent=1 // pred_fallthru
      _
    // Predicated region
    $region46: #{bert_net_forward.15} parent=1 // pred_check
      _
    $region47: #{bert_net_forward.15} parent=1 // pred_check_branch
      %98 = sbr.rel (0) target = $region49
    $region48: #{bert_net_forward.15} parent=1 // pred_region
      %99 = dma.done [#allocation13], 16
    $region49: #{bert_net_forward.15} parent=1 // pred_fallthru
      _
    %p101 = scmp.eq.s32.totalorder 0, 0
    // Predicated region
    $region50: #{bert_net_forward.15} parent=1 // pred_check
      %p102 = pneg %p101
    $region51: #{bert_net_forward.15} parent=1 // pred_check_branch
      %104 = sbr.rel (%p102) target = $region53
    $region52: #{bert_net_forward.15} parent=1 // pred_region
      %vm105 = vcmask 261120
      %106 = vst.msk [vmem:[#allocation2] sm:$0xff] %vm105, 0.0
      %107 = vst.msk [vmem:[#allocation2 + $0x8] sm:$0xff] %vm105, 0.0
    $region53: #{bert_net_forward.15} parent=1 // pred_fallthru
      _
    %v108 = vld [vmem:[#allocation2] sm:$0xff]
    %v109 = vld [vmem:[#allocation2 + $0x8] sm:$0xff]
    %v110 = vld [vmem:[#allocation3] sm:$0xf]
    %v111 = vld [vmem:[#allocation3 + $0x4] sm:$0xf]
    %v112 = vld [vmem:[#allocation6] sm:$0xf]
    %v113 = vld [vmem:[#allocation6 + $0x4] sm:$0xf]
    %v114 = vld [vmem:[#allocation6 + $0x8] sm:$0xf]
    %v115 = vld [vmem:[#allocation6 + $0xc] sm:$0xf]
    %v118 = vunpack.c.l.b16 %v110
    %v119 = vunpack.c.l.b16 %v111
    %v120 = vpack.c.b16 %v119, %v118
    %v125 = vunpack.c.l.b16 %v112
    %v126 = vunpack.c.l.b16 %v113
    %v127 = vunpack.c.l.b16 %v114
    %v128 = vunpack.c.l.b16 %v115
    %v129 = vpack.c.b16 %v126, %v125
    %v130 = vpack.c.b16 %v128, %v127
    %vm133 = vcmask 261120
    %v135 = vsel %vm133, %v120, 0
    %137 = vmatprep.subr.bf16.mxu0 0
    %138 = vmatpush1.bf16.msra.mxu0 %v129
    %139 = vmatprep.subr.bf16.mxu0 0
    %140 = vmatpush1.bf16.msra.mxu0 %v130
    %141 = vmatprep.subr.bf16.mxu0 0
    %142 = vmatpush1.bf16.msra.mxu0 0
    %143 = vmatprep.subr.bf16.mxu0 0
    %144 = vmatpush1.bf16.msra.mxu0 0
    %145 = vmatprep.subr.bf16.mxu0 0
    %146 = vmatpush1.bf16.msra.mxu0 0
    %147 = vmatprep.subr.bf16.mxu0 0
    %148 = vmatpush1.bf16.msra.mxu0 0
    %149 = vmatprep.subr.bf16.mxu0 0
    %150 = vmatpush1.bf16.msra.mxu0 0
    %151 = vmatprep.subr.bf16.mxu0 0
    %152 = vmatpush1.bf16.msra.mxu0 0
    %153 = vmatprep.subr.bf16.mxu0 0
    %154 = vmatpush1.bf16.msra.mxu0 0
    %155 = vmatprep.subr.bf16.mxu0 0
    %156 = vmatpush1.bf16.msra.mxu0 0
    %157 = vmatprep.subr.bf16.mxu0 0
    %158 = vmatpush1.bf16.msra.mxu0 0
    %159 = vmatprep.subr.bf16.mxu0 0
    %160 = vmatpush1.bf16.msra.mxu0 0
    %161 = vmatprep.subr.bf16.mxu0 0
    %162 = vmatpush1.bf16.msra.mxu0 0
    %163 = vmatprep.subr.bf16.mxu0 0
    %164 = vmatpush1.bf16.msra.mxu0 0
    %165 = vmatprep.subr.bf16.mxu0 0
    %166 = vmatpush1.bf16.msra.mxu0 0
    %167 = vmatprep.subr.bf16.mxu0 0
    %168 = vmatpush1.bf16.msra.mxu0 0
    %169 = vmatprep.mubr.bf16.mxu0 0
    %170 = vmatmul.mubr.bf16.gmra.mrb[0].mxu0 %v135
    %v171 = vpop.f32.mrb[0].mxu0
    %v172 = vadd.f32 0.0, %v171
    %v173 = vpop.f32.mrb[0].mxu0
    %v174 = vpop.f32.mrb[0].mxu0
    %v175 = vadd.f32 0.0, %v174
    %v176 = vpop.f32.mrb[0].mxu0
    %177 = vdwg.mxu0
    %v178 = vadd.f32 %v108, %v172
    %v179 = vadd.f32 %v109, %v175
    %180 = vst.msk [vmem:[#allocation2] sm:$0xff] %vm133, %v178
    %181 = vst.msk [vmem:[#allocation2 + $0x8] sm:$0xff] %vm133, %v179
    // Predicated region
    $region54: #{bert_net_forward.15} parent=1 // pred_check
      %p182 = pneg %p101
    $region55: #{bert_net_forward.15} parent=1 // pred_check_branch
      %184 = sbr.rel (%p182) target = $region57
    $region56: #{bert_net_forward.15} parent=1 // pred_region
      %v185 = vld [vmem:[#allocation2] sm:$0xff]
      %v186 = vld [vmem:[#allocation2 + $0x8] sm:$0xff]
      %v187 = vld [vmem:[#allocation8] sm:$0x1]
      %v189 = vlaneseq
      %v190 = vshrl.u32 %v189, 7
      %v191 = vsub.s32 0, %v190
      %v192 = vrot.slane %v187, %v191
      %v194 = vadd.f32 %v185, %v192
      %v195 = vadd.f32 %v186, %v192
      %v196 = vld [vmem:[#allocation9] sm:$0xf]
      %v197 = vld [vmem:[#allocation9 + $0x4] sm:$0xf]
      %v198 = vunpack.c.l.bf16 %v196
      %v199 = vunpack.c.l.bf16 %v197
      %v200 = vadd.f32 %v194, %v198
      %v201 = vadd.f32 %v195, %v199
      %v202 = vsel %vm133, %v200, 0.0
      %203 = vadd.xlane.f32.xlu0 %v202
      %v204 = vpop.xlane.xlu0 %203
      %v205 = vsel %vm133, %v201, 0.0
      %206 = vadd.xlane.f32.xlu0 %v205
      %v207 = vpop.xlane.xlu0 %206
      %v208 = vrcp.pop 32.0
      %v209 = vmul.f32 %v204, %v208
      %v210 = vmul.f32 %v207, %v208
      %v211 = vsub.f32 %v200, %v209
      %v212 = vsub.f32 %v201, %v210
      %v213 = vmul.f32 %v211, %v211
      %v214 = vmul.f32 %v212, %v212
      %v215 = vsel %vm133, %v213, 0.0
      %216 = vadd.xlane.f32.xlu0 %v215
      %v217 = vpop.xlane.xlu0 %216
      %v218 = vsel %vm133, %v214, 0.0
      %219 = vadd.xlane.f32.xlu0 %v218
      %v220 = vpop.xlane.xlu0 %219
      %v221 = vmul.f32 %v217, %v208
      %v222 = vmul.f32 %v220, %v208
      %v223 = vadd.f32 %v221, 1e-12
      %v224 = vadd.f32 %v222, 1e-12
      %v225 = vrsqrt.pop %v223
      %v226 = vrsqrt.pop %v224
      %v227 = vmul.f32 %v211, %v225
      %v228 = vmul.f32 %v212, %v226
      %v229 = vld [vmem:[#allocation11] sm:$0x1]
      %v231 = vlaneseq
      %v232 = vshrl.u32 %v231, 7
      %v233 = vsub.s32 0, %v232
      %v234 = vrot.slane %v229, %v233
      %v236 = vmul.f32 %v227, %v234
      %v237 = vmul.f32 %v228, %v234
      %v238 = vld [vmem:[#allocation12] sm:$0x1]
      %v240 = vlaneseq
      %v241 = vshrl.u32 %v240, 7
      %v242 = vsub.s32 0, %v241
      %v243 = vrot.slane %v238, %v242
      %v245 = vadd.f32 %v236, %v243
      %v246 = vadd.f32 %v237, %v243
      %v247 = vpack.c.bf16 %v246, %v245
      %v249 = vunpack.c.l.b16 %v247
      %v250 = vunpack.c.h.b16 %v247
      %v251 = vpack.c.b16 %v249, %v249
      %v252 = vpack.c.b16 %v250, %v250
      %vm255 = vcmask 257024
      %256 = vst.msk [vmem:[#allocation14] sm:$0xf] %vm255, %v251
      %257 = vst.msk [vmem:[#allocation14 + $0x4] sm:$0xf] %vm255, %v252
    $region57: #{bert_net_forward.15} parent=1 // pred_fallthru
      _
    // Predicated region
    $region58: #{bert_net_forward.15} parent=1 // pred_check
      _
    $region59: #{bert_net_forward.15} parent=1 // pred_check_branch
      %259 = sbr.rel (0) target = $region61
    $region60: #{bert_net_forward.15} parent=1 // pred_region
      %s261 = ssub.s32 128, 128
      %262 = vsyncadd [#allocation5], %s261
      %s263 = sshll.u32 [#allocation14], 4
      %s264 = int_to_ptr.vmem [resolvable:$true] %s263
      %269 = dma.vmem_to_hbm [thread:$0]  %s264, 128, %s6, [#allocation5], 64, 64, 4
    $region61: #{bert_net_forward.15} parent=1 // pred_fallthru
      _
    // Predicated region
    $region62: #{bert_net_forward.15} parent=1 // pred_check
      _
    $region63: #{bert_net_forward.15} parent=1 // pred_check_branch
      %271 = sbr.rel (0) target = $region65
    $region64: #{bert_net_forward.15} parent=1 // pred_region
      %272 = dma.done [#allocation5], 128
    $region65: #{bert_net_forward.15} parent=1 // pred_fallthru
      _
    %273 = vsyncpa [#allocation4], 1
    %274 = vsyncpa [#allocation7], 1
    %275 = vsyncpa [#allocation10], 1
    %276 = vsyncpa [#allocation13], 1
    %277 = vsyncpa [#allocation5], 1

// kernel: bert_net_forward.16
$region0: #{bert_net_forward.16}
  #allocation0 [shape = 'u32[]', space=smem, size = 0x4, offset = 0x4, fixed_abs, tag = 'smem constant byte address 0x4 - core index']
  #allocation1 [shape = 'u32[144,128]{1,0:T(1,128)}', space=vmem, size = 0x12000, scoped, tag = 'internal scratch']
  #allocation2 [shape = 'f32[16,64]{1,0:T(8,128)}', space=vmem, size = 0x2000, scoped, tag = 'scratch operand']
  %s0 = inlined_call_operand.hbm [shape: bf16[16,32], index: 0, kind: input, shape index: {}]
  %s1 = inlined_call_operand.hbm [shape: bf16[32,64], index: 1, kind: input, shape index: {}]
  %s2 = inlined_call_operand.hbm [shape: f32[1,64], index: 2, kind: input, shape index: {}]
  %s3 = inlined_call_operand.hbm [shape: bf16[16,64], index: 3, kind: output, shape index: {}]
  %s4 = sld [smem:[#allocation0]]
  $region42: #{bert_net_forward.16} parent=0
    _
  %s6 = ssub.s32 1, %s4
  %s7 = scalar_select 0, %s6, %s4
  $region1: #{bert_net_forward.16} parent=0
    #allocation3 [shape = 'u8[4096]{0}', space=vmem, size = 0x1000, scoped, tag = 'input window, operand 0, single buffered']
    #allocation4 [shape = 's32[1]{0}', space=sflag, size = 0x4, scoped, tag = 'scoped memory for bert_net_forward.16']
    #allocation5 [shape = 's32[1]{0}', space=sflag, size = 0x4, scoped, tag = 'scoped memory for bert_net_forward.16']
    #allocation6 [shape = 'u8[8192]{0}', space=vmem, size = 0x2000, scoped, tag = 'input window, operand 1, single buffered']
    #allocation7 [shape = 's32[1]{0}', space=sflag, size = 0x4, scoped, tag = 'scoped memory for bert_net_forward.16']
    #allocation8 [shape = 'u8[512]{0}', space=vmem, size = 0x400, scoped, tag = 'input window, operand 2, single buffered']
    #allocation9 [shape = 'u8[4096]{0}', space=vmem, size = 0x1000, scoped, tag = 'output window, operand 0, single buffered']
    %8 = vsyncpa [#allocation4], 0
    %9 = vsyncpa [#allocation7], 0
    %10 = vsyncpa [#allocation5], 0
    // Predicated region
    $region2: #{bert_net_forward.16} parent=1 // pred_check
      _
    $region3: #{bert_net_forward.16} parent=1 // pred_check_branch
      %12 = sbr.rel (0) target = $region5
    $region4: #{bert_net_forward.16} parent=1 // pred_region
      %s14 = ssub.s32 128, 128
      %15 = vsyncadd [#allocation4], %s14
      %s16 = sshll.u32 [#allocation3], 4
      %s17 = int_to_ptr.vmem [resolvable:$true] %s16
      %22 = dma.hbm_to_vmem [thread:$0]  %s0, 128, %s17, [#allocation4], 64, 64, 4
    $region5: #{bert_net_forward.16} parent=1 // pred_fallthru
      _
    // Predicated region
    $region6: #{bert_net_forward.16} parent=1 // pred_check
      _
    $region7: #{bert_net_forward.16} parent=1 // pred_check_branch
      %24 = sbr.rel (0) target = $region9
    $region8: #{bert_net_forward.16} parent=1 // pred_region
      %s26 = ssub.s32 256, 256
      %27 = vsyncadd [#allocation7], %s26
      %s28 = sshll.u32 [#allocation6], 4
      %s29 = int_to_ptr.vmem [resolvable:$true] %s28
      %34 = dma.hbm_to_vmem [thread:$0]  %s1, 256, %s29, [#allocation7], 64, 64, 4
    $region9: #{bert_net_forward.16} parent=1 // pred_fallthru
      _
    // Predicated region
    $region10: #{bert_net_forward.16} parent=1 // pred_check
      _
    $region11: #{bert_net_forward.16} parent=1 // pred_check_branch
      %36 = sbr.rel (0) target = $region13
    $region12: #{bert_net_forward.16} parent=1 // pred_region
      %s38 = ssub.s32 16, 16
      %39 = vsyncadd [#allocation7], %s38
      %s41 = sshll.u32 [#allocation8], 4
      %s42 = int_to_ptr.vmem [resolvable:$true] %s41
      %44 = dma.hbm_to_vmem [thread:$0]  %s2, 16, %s42, [#allocation7]
    $region13: #{bert_net_forward.16} parent=1 // pred_fallthru
      _
    // Predicated region
    $region14: #{bert_net_forward.16} parent=1 // pred_check
      _
    $region15: #{bert_net_forward.16} parent=1 // pred_check_branch
      %46 = sbr.rel (0) target = $region17
    $region16: #{bert_net_forward.16} parent=1 // pred_region
      %47 = dma.done [#allocation4], 128
    $region17: #{bert_net_forward.16} parent=1 // pred_fallthru
      _
    // Predicated region
    $region18: #{bert_net_forward.16} parent=1 // pred_check
      _
    $region19: #{bert_net_forward.16} parent=1 // pred_check_branch
      %49 = sbr.rel (0) target = $region21
    $region20: #{bert_net_forward.16} parent=1 // pred_region
      %50 = dma.done [#allocation7], 256
    $region21: #{bert_net_forward.16} parent=1 // pred_fallthru
      _
    // Predicated region
    $region22: #{bert_net_forward.16} parent=1 // pred_check
      _
    $region23: #{bert_net_forward.16} parent=1 // pred_check_branch
      %52 = sbr.rel (0) target = $region25
    $region24: #{bert_net_forward.16} parent=1 // pred_region
      %53 = dma.done [#allocation7], 16
    $region25: #{bert_net_forward.16} parent=1 // pred_fallthru
      _
    %p55 = scmp.eq.s32.totalorder 0, 0
    // Predicated region
    $region26: #{bert_net_forward.16} parent=1 // pred_check
      %p56 = pneg %p55
    $region27: #{bert_net_forward.16} parent=1 // pred_check_branch
      %58 = sbr.rel (%p56) target = $region29
    $region28: #{bert_net_forward.16} parent=1 // pred_region
      %vm59 = vcmask 523264
      %60 = vst.msk [vmem:[#allocation2] sm:$0xff] %vm59, 0.0
      %61 = vst.msk [vmem:[#allocation2 + $0x8] sm:$0xff] %vm59, 0.0
    $region29: #{bert_net_forward.16} parent=1 // pred_fallthru
      _
    %v62 = vld [vmem:[#allocation2] sm:$0xff]
    %v63 = vld [vmem:[#allocation2 + $0x8] sm:$0xff]
    %v64 = vld [vmem:[#allocation3] sm:$0xf]
    %v65 = vld [vmem:[#allocation3 + $0x4] sm:$0xf]
    %v66 = vld [vmem:[#allocation6] sm:$0xf]
    %v67 = vld [vmem:[#allocation6 + $0x4] sm:$0xf]
    %v68 = vld [vmem:[#allocation6 + $0x8] sm:$0xf]
    %v69 = vld [vmem:[#allocation6 + $0xc] sm:$0xf]
    %v72 = vunpack.c.l.b16 %v64
    %v73 = vunpack.c.l.b16 %v65
    %v74 = vpack.c.b16 %v73, %v72
    %v79 = vunpack.c.l.b16 %v66
    %v80 = vunpack.c.l.b16 %v67
    %v81 = vunpack.c.l.b16 %v68
    %v82 = vunpack.c.l.b16 %v69
    %v83 = vpack.c.b16 %v80, %v79
    %v84 = vpack.c.b16 %v82, %v81
    %vm87 = vcmask 261120
    %v89 = vsel %vm87, %v74, 0
    %91 = vmatprep.subr.bf16.mxu0 0
    %92 = vmatpush1.bf16.msra.mxu0 %v83
    %93 = vmatprep.subr.bf16.mxu0 0
    %94 = vmatpush1.bf16.msra.mxu0 %v84
    %95 = vmatprep.subr.bf16.mxu0 0
    %96 = vmatpush1.bf16.msra.mxu0 0
    %97 = vmatprep.subr.bf16.mxu0 0
    %98 = vmatpush1.bf16.msra.mxu0 0
    %99 = vmatprep.subr.bf16.mxu0 0
    %100 = vmatpush1.bf16.msra.mxu0 0
    %101 = vmatprep.subr.bf16.mxu0 0
    %102 = vmatpush1.bf16.msra.mxu0 0
    %103 = vmatprep.subr.bf16.mxu0 0
    %104 = vmatpush1.bf16.msra.mxu0 0
    %105 = vmatprep.subr.bf16.mxu0 0
    %106 = vmatpush1.bf16.msra.mxu0 0
    %107 = vmatprep.subr.bf16.mxu0 0
    %108 = vmatpush1.bf16.msra.mxu0 0
    %109 = vmatprep.subr.bf16.mxu0 0
    %110 = vmatpush1.bf16.msra.mxu0 0
    %111 = vmatprep.subr.bf16.mxu0 0
    %112 = vmatpush1.bf16.msra.mxu0 0
    %113 = vmatprep.subr.bf16.mxu0 0
    %114 = vmatpush1.bf16.msra.mxu0 0
    %115 = vmatprep.subr.bf16.mxu0 0
    %116 = vmatpush1.bf16.msra.mxu0 0
    %117 = vmatprep.subr.bf16.mxu0 0
    %118 = vmatpush1.bf16.msra.mxu0 0
    %119 = vmatprep.subr.bf16.mxu0 0
    %120 = vmatpush1.bf16.msra.mxu0 0
    %121 = vmatprep.subr.bf16.mxu0 0
    %122 = vmatpush1.bf16.msra.mxu0 0
    %123 = vmatprep.mubr.bf16.mxu0 0
    %124 = vmatmul.mubr.bf16.gmra.mrb[0].mxu0 %v89
    %v125 = vpop.f32.mrb[0].mxu0
    %v126 = vadd.f32 0.0, %v125
    %v127 = vpop.f32.mrb[0].mxu0
    %v128 = vpop.f32.mrb[0].mxu0
    %v129 = vadd.f32 0.0, %v128
    %v130 = vpop.f32.mrb[0].mxu0
    %131 = vdwg.mxu0
    %v132 = vadd.f32 %v62, %v126
    %v133 = vadd.f32 %v63, %v129
    %vm134 = vcmask 523264
    %135 = vst.msk [vmem:[#allocation2] sm:$0xff] %vm134, %v132
    %136 = vst.msk [vmem:[#allocation2 + $0x8] sm:$0xff] %vm134, %v133
    // Predicated region
    $region30: #{bert_net_forward.16} parent=1 // pred_check
      %p137 = pneg %p55
    $region31: #{bert_net_forward.16} parent=1 // pred_check_branch
      %139 = sbr.rel (%p137) target = $region33
    $region32: #{bert_net_forward.16} parent=1 // pred_region
      %v140 = vld [vmem:[#allocation2] sm:$0xff]
      %v141 = vld [vmem:[#allocation2 + $0x8] sm:$0xff]
      %v142 = vld [vmem:[#allocation8] sm:$0x1]
      %v144 = vlaneseq
      %v145 = vshrl.u32 %v144, 7
      %v146 = vsub.s32 0, %v145
      %v147 = vrot.slane %v142, %v146
      %v149 = vadd.f32 %v140, %v147
      %v150 = vadd.f32 %v141, %v147
      %v151 = vmul.f32 %v149, 0.5
      %v152 = vmul.f32 %v150, 0.5
      %v153 = vmul.f32 %v149, 0.70710677
      %v154 = vmul.f32 %v150, 0.70710677
      %v155 = verf.f32.pop %v153
      %v156 = verf.f32.pop %v154
      %v157 = vadd.f32 %v155, 1.0
      %v158 = vadd.f32 %v156, 1.0
      %v159 = vmul.f32 %v151, %v157
      %v160 = vmul.f32 %v152, %v158
      %v161 = vpack.c.bf16 %v160, %v159
      %v163 = vunpack.c.l.b16 %v161
      %v164 = vunpack.c.h.b16 %v161
      %v165 = vpack.c.b16 %v163, %v163
      %v166 = vpack.c.b16 %v164, %v164
      %vm169 = vcmask 519168
      %170 = vst.msk [vmem:[#allocation9] sm:$0xf] %vm169, %v165
      %171 = vst.msk [vmem:[#allocation9 + $0x4] sm:$0xf] %vm169, %v166
    $region33: #{bert_net_forward.16} parent=1 // pred_fallthru
      _
    // Predicated region
    $region34: #{bert_net_forward.16} parent=1 // pred_check
      _
    $region35: #{bert_net_forward.16} parent=1 // pred_check_branch
      %173 = sbr.rel (0) target = $region37
    $region36: #{bert_net_forward.16} parent=1 // pred_region
      %s175 = ssub.s32 128, 128
      %176 = vsyncadd [#allocation5], %s175
      %s177 = sshll.u32 [#allocation9], 4
      %s178 = int_to_ptr.vmem [resolvable:$true] %s177
      %183 = dma.vmem_to_hbm [thread:$0]  %s178, 128, %s3, [#allocation5], 64, 64, 4
    $region37: #{bert_net_forward.16} parent=1 // pred_fallthru
      _
    // Predicated region
    $region38: #{bert_net_forward.16} parent=1 // pred_check
      _
    $region39: #{bert_net_forward.16} parent=1 // pred_check_branch
      %185 = sbr.rel (0) target = $region41
    $region40: #{bert_net_forward.16} parent=1 // pred_region
      %186 = dma.done [#allocation5], 128
    $region41: #{bert_net_forward.16} parent=1 // pred_fallthru
      _
    %187 = vsyncpa [#allocation4], 1
    %188 = vsyncpa [#allocation7], 1
    %189 = vsyncpa [#allocation5], 1

// kernel: bert_net_forward.17
$region0: #{bert_net_forward.17}
  #allocation0 [shape = 'u32[]', space=smem, size = 0x4, offset = 0x4, fixed_abs, tag = 'smem constant byte address 0x4 - core index']
  #allocation1 [shape = 'u32[144,128]{1,0:T(1,128)}', space=vmem, size = 0x12000, scoped, tag = 'internal scratch']
  #allocation2 [shape = 'f32[16,32]{1,0:T(8,128)}', space=vmem, size = 0x2000, scoped, tag = 'scratch operand']
  %s0 = inlined_call_operand.hbm [shape: bf16[16,64], index: 0, kind: input, shape index: {}]
  %s1 = inlined_call_operand.hbm [shape: bf16[64,32], index: 1, kind: input, shape index: {}]
  %s2 = inlined_call_operand.hbm [shape: f32[1,32], index: 2, kind: input, shape index: {}]
  %s3 = inlined_call_operand.hbm [shape: bf16[16,32], index: 3, kind: input, shape index: {}]
  %s4 = inlined_call_operand.hbm [shape: f32[1,32], index: 4, kind: input, shape index: {}]
  %s5 = inlined_call_operand.hbm [shape: f32[1,32], index: 5, kind: input, shape index: {}]
  %s6 = inlined_call_operand.hbm [shape: bf16[16,32], index: 6, kind: output, shape index: {}]
  %s7 = sld [smem:[#allocation0]]
  $region66: #{bert_net_forward.17} parent=0
    _
  %s9 = ssub.s32 1, %s7
  %s10 = scalar_select 0, %s9, %s7
  $region1: #{bert_net_forward.17} parent=0
    #allocation3 [shape = 'u8[4096]{0}', space=vmem, size = 0x1000, scoped, tag = 'input window, operand 0, single buffered']
    #allocation4 [shape = 's32[1]{0}', space=sflag, size = 0x4, scoped, tag = 'scoped memory for bert_net_forward.17']
    #allocation5 [shape = 's32[1]{0}', space=sflag, size = 0x4, scoped, tag = 'scoped memory for bert_net_forward.17']
    #allocation6 [shape = 'u8[16384]{0}', space=vmem, size = 0x4000, scoped, tag = 'input window, operand 1, single buffered']
    #allocation7 [shape = 's32[1]{0}', space=sflag, size = 0x4, scoped, tag = 'scoped memory for bert_net_forward.17']
    #allocation8 [shape = 'u8[512]{0}', space=vmem, size = 0x400, scoped, tag = 'input window, operand 2, single buffered']
    #allocation9 [shape = 'u8[4096]{0}', space=vmem, size = 0x1000, scoped, tag = 'input window, operand 3, single buffered']
    #allocation10 [shape = 's32[1]{0}', space=sflag, size = 0x4, scoped, tag = 'scoped memory for bert_net_forward.17']
    #allocation11 [shape = 'u8[512]{0}', space=vmem, size = 0x400, scoped, tag = 'input window, operand 4, single buffered']
    #allocation12 [shape = 'u8[512]{0}', space=vmem, size = 0x400, scoped, tag = 'input window, operand 5, single buffered']
    #allocation13 [shape = 's32[1]{0}', space=sflag, size = 0x4, scoped, tag = 'scoped memory for bert_net_forward.17']
    #allocation14 [shape = 'u8[4096]{0}', space=vmem, size = 0x1000, scoped, tag = 'output window, operand 0, single buffered']
    %11 = vsyncpa [#allocation4], 0
    %12 = vsyncpa [#allocation7], 0
    %13 = vsyncpa [#allocation10], 0
    %14 = vsyncpa [#allocation13], 0
    %15 = vsyncpa [#allocation5], 0
    // Predicated region
    $region2: #{bert_net_forward.17} parent=1 // pred_check
      _
    $region3: #{bert_net_forward.17} parent=1 // pred_check_branch
      %17 = sbr.rel (0) target = $region5
    $region4: #{bert_net_forward.17} parent=1 // pred_region
      %s19 = ssub.s32 128, 128
      %20 = vsyncadd [#allocation4], %s19
      %s21 = sshll.u32 [#allocation3], 4
      %s22 = int_to_ptr.vmem [resolvable:$true] %s21
      %27 = dma.hbm_to_vmem [thread:$0]  %s0, 128, %s22, [#allocation4], 64, 64, 4
    $region5: #{bert_net_forward.17} parent=1 // pred_fallthru
      _
    // Predicated region
    $region6: #{bert_net_forward.17} parent=1 // pred_check
      _
    $region7: #{bert_net_forward.17} parent=1 // pred_check_branch
      %29 = sbr.rel (0) target = $region9
    $region8: #{bert_net_forward.17} parent=1 // pred_region
      %s31 = ssub.s32 512, 512
      %32 = vsyncadd [#allocation7], %s31
      %s33 = sshll.u32 [#allocation6], 4
      %s34 = int_to_ptr.vmem [resolvable:$true] %s33
      %39 = dma.hbm_to_vmem [thread:$0]  %s1, 512, %s34, [#allocation7], 64, 64, 4
    $region9: #{bert_net_forward.17} parent=1 // pred_fallthru
      _
    // Predicated region
    $region10: #{bert_net_forward.17} parent=1 // pred_check
      _
    $region11: #{bert_net_forward.17} parent=1 // pred_check_branch
      %41 = sbr.rel (0) target = $region13
    $region12: #{bert_net_forward.17} parent=1 // pred_region
      %s43 = ssub.s32 16, 16
      %44 = vsyncadd [#allocation7], %s43
      %s46 = sshll.u32 [#allocation8], 4
      %s47 = int_to_ptr.vmem [resolvable:$true] %s46
      %49 = dma.hbm_to_vmem [thread:$0]  %s2, 16, %s47, [#allocation7]
    $region13: #{bert_net_forward.17} parent=1 // pred_fallthru
      _
    // Predicated region
    $region14: #{bert_net_forward.17} parent=1 // pred_check
      _
    $region15: #{bert_net_forward.17} parent=1 // pred_check_branch
      %51 = sbr.rel (0) target = $region17
    $region16: #{bert_net_forward.17} parent=1 // pred_region
      %s53 = ssub.s32 128, 128
      %54 = vsyncadd [#allocation10], %s53
      %s55 = sshll.u32 [#allocation9], 4
      %s56 = int_to_ptr.vmem [resolvable:$true] %s55
      %61 = dma.hbm_to_vmem [thread:$0]  %s3, 128, %s56, [#allocation10], 64, 64, 4
    $region17: #{bert_net_forward.17} parent=1 // pred_fallthru
      _
    // Predicated region
    $region18: #{bert_net_forward.17} parent=1 // pred_check
      _
    $region19: #{bert_net_forward.17} parent=1 // pred_check_branch
      %63 = sbr.rel (0) target = $region21
    $region20: #{bert_net_forward.17} parent=1 // pred_region
      %s65 = ssub.s32 16, 16
      %66 = vsyncadd [#allocation10], %s65
      %s68 = sshll.u32 [#allocation11], 4
      %s69 = int_to_ptr.vmem [resolvable:$true] %s68
      %71 = dma.hbm_to_vmem [thread:$0]  %s4, 16, %s69, [#allocation10]
    $region21: #{bert_net_forward.17} parent=1 // pred_fallthru
      _
    // Predicated region
    $region22: #{bert_net_forward.17} parent=1 // pred_check
      _
    $region23: #{bert_net_forward.17} parent=1 // pred_check_branch
      %73 = sbr.rel (0) target = $region25
    $region24: #{bert_net_forward.17} parent=1 // pred_region
      %s75 = ssub.s32 16, 16
      %76 = vsyncadd [#allocation13], %s75
      %s78 = sshll.u32 [#allocation12], 4
      %s79 = int_to_ptr.vmem [resolvable:$true] %s78
      %81 = dma.hbm_to_vmem [thread:$0]  %s5, 16, %s79, [#allocation13]
    $region25: #{bert_net_forward.17} parent=1 // pred_fallthru
      _
    // Predicated region
    $region26: #{bert_net_forward.17} parent=1 // pred_check
      _
    $region27: #{bert_net_forward.17} parent=1 // pred_check_branch
      %83 = sbr.rel (0) target = $region29
    $region28: #{bert_net_forward.17} parent=1 // pred_region
      %84 = dma.done [#allocation4], 128
    $region29: #{bert_net_forward.17} parent=1 // pred_fallthru
      _
    // Predicated region
    $region30: #{bert_net_forward.17} parent=1 // pred_check
      _
    $region31: #{bert_net_forward.17} parent=1 // pred_check_branch
      %86 = sbr.rel (0) target = $region33
    $region32: #{bert_net_forward.17} parent=1 // pred_region
      %87 = dma.done [#allocation7], 512
    $region33: #{bert_net_forward.17} parent=1 // pred_fallthru
      _
    // Predicated region
    $region34: #{bert_net_forward.17} parent=1 // pred_check
      _
    $region35: #{bert_net_forward.17} parent=1 // pred_check_branch
      %89 = sbr.rel (0) target = $region37
    $region36: #{bert_net_forward.17} parent=1 // pred_region
      %90 = dma.done [#allocation7], 16
    $region37: #{bert_net_forward.17} parent=1 // pred_fallthru
      _
    // Predicated region
    $region38: #{bert_net_forward.17} parent=1 // pred_check
      _
    $region39: #{bert_net_forward.17} parent=1 // pred_check_branch
      %92 = sbr.rel (0) target = $region41
    $region40: #{bert_net_forward.17} parent=1 // pred_region
      %93 = dma.done [#allocation10], 128
    $region41: #{bert_net_forward.17} parent=1 // pred_fallthru
      _
    // Predicated region
    $region42: #{bert_net_forward.17} parent=1 // pred_check
      _
    $region43: #{bert_net_forward.17} parent=1 // pred_check_branch
      %95 = sbr.rel (0) target = $region45
    $region44: #{bert_net_forward.17} parent=1 // pred_region
      %96 = dma.done [#allocation10], 16
    $region45: #{bert_net_forward.17} parent=1 // pred_fallthru
      _
    // Predicated region
    $region46: #{bert_net_forward.17} parent=1 // pred_check
      _
    $region47: #{bert_net_forward.17} parent=1 // pred_check_branch
      %98 = sbr.rel (0) target = $region49
    $region48: #{bert_net_forward.17} parent=1 // pred_region
      %99 = dma.done [#allocation13], 16
    $region49: #{bert_net_forward.17} parent=1 // pred_fallthru
      _
    %p101 = scmp.eq.s32.totalorder 0, 0
    // Predicated region
    $region50: #{bert_net_forward.17} parent=1 // pred_check
      %p102 = pneg %p101
    $region51: #{bert_net_forward.17} parent=1 // pred_check_branch
      %104 = sbr.rel (%p102) target = $region53
    $region52: #{bert_net_forward.17} parent=1 // pred_region
      %vm105 = vcmask 261120
      %106 = vst.msk [vmem:[#allocation2] sm:$0xff] %vm105, 0.0
      %107 = vst.msk [vmem:[#allocation2 + $0x8] sm:$0xff] %vm105, 0.0
    $region53: #{bert_net_forward.17} parent=1 // pred_fallthru
      _
    %v108 = vld [vmem:[#allocation2] sm:$0xff]
    %v109 = vld [vmem:[#allocation2 + $0x8] sm:$0xff]
    %v110 = vld [vmem:[#allocation3] sm:$0xf]
    %v111 = vld [vmem:[#allocation3 + $0x4] sm:$0xf]
    %v112 = vld [vmem:[#allocation6] sm:$0xf]
    %v113 = vld [vmem:[#allocation6 + $0x4] sm:$0xf]
    %v114 = vld [vmem:[#allocation6 + $0x8] sm:$0xf]
    %v115 = vld [vmem:[#allocation6 + $0xc] sm:$0xf]
    %v116 = vld [vmem:[#allocation6 + $0x10] sm:$0xf]
    %v117 = vld [vmem:[#allocation6 + $0x14] sm:$0xf]
    %v118 = vld [vmem:[#allocation6 + $0x18] sm:$0xf]
    %v119 = vld [vmem:[#allocation6 + $0x1c] sm:$0xf]
    %v122 = vunpack.c.l.b16 %v110
    %v123 = vunpack.c.l.b16 %v111
    %v124 = vpack.c.b16 %v123, %v122
    %v133 = vunpack.c.l.b16 %v112
    %v134 = vunpack.c.l.b16 %v113
    %v135 = vunpack.c.l.b16 %v114
    %v136 = vunpack.c.l.b16 %v115
    %v137 = vunpack.c.l.b16 %v116
    %v138 = vunpack.c.l.b16 %v117
    %v139 = vunpack.c.l.b16 %v118
    %v140 = vunpack.c.l.b16 %v119
    %v141 = vpack.c.b16 %v134, %v133
    %v142 = vpack.c.b16 %v136, %v135
    %v143 = vpack.c.b16 %v138, %v137
    %v144 = vpack.c.b16 %v140, %v139
    %vm149 = vcmask 523264
    %v151 = vsel %vm149, %v124, 0
    %153 = vmatprep.subr.bf16.mxu0 0
    %154 = vmatpush1.bf16.msra.mxu0 %v141
    %155 = vmatprep.subr.bf16.mxu0 0
    %156 = vmatpush1.bf16.msra.mxu0 %v142
    %157 = vmatprep.subr.bf16.mxu0 0
    %158 = vmatpush1.bf16.msra.mxu0 %v143
    %159 = vmatprep.subr.bf16.mxu0 0
    %160 = vmatpush1.bf16.msra.mxu0 %v144
    %161 = vmatprep.subr.bf16.mxu0 0
    %162 = vmatpush1.bf16.msra.mxu0 0
    %163 = vmatprep.subr.bf16.mxu0 0
    %164 = vmatpush1.bf16.msra.mxu0 0
    %165 = vmatprep.subr.bf16.mxu0 0
    %166 = vmatpush1.bf16.msra.mxu0 0
    %167 = vmatprep.subr.bf16.mxu0 0
    %168 = vmatpush1.bf16.msra.mxu0 0
    %169 = vmatprep.subr.bf16.mxu0 0
    %170 = vmatpush1.bf16.msra.mxu0 0
    %171 = vmatprep.subr.bf16.mxu0 0
    %172 = vmatpush1.bf16.msra.mxu0 0
    %173 = vmatprep.subr.bf16.mxu0 0
    %174 = vmatpush1.bf16.msra.mxu0 0
    %175 = vmatprep.subr.bf16.mxu0 0
    %176 = vmatpush1.bf16.msra.mxu0 0
    %177 = vmatprep.subr.bf16.mxu0 0
    %178 = vmatpush1.bf16.msra.mxu0 0
    %179 = vmatprep.subr.bf16.mxu0 0
    %180 = vmatpush1.bf16.msra.mxu0 0
    %181 = vmatprep.subr.bf16.mxu0 0
    %182 = vmatpush1.bf16.msra.mxu0 0
    %183 = vmatprep.subr.bf16.mxu0 0
    %184 = vmatpush1.bf16.msra.mxu0 0
    %185 = vmatprep.mubr.bf16.mxu0 0
    %186 = vmatmul.mubr.bf16.gmra.mrb[0].mxu0 %v151
    %v187 = vpop.f32.mrb[0].mxu0
    %v188 = vadd.f32 0.0, %v187
    %v189 = vpop.f32.mrb[0].mxu0
    %v190 = vpop.f32.mrb[0].mxu0
    %v191 = vadd.f32 0.0, %v190
    %v192 = vpop.f32.mrb[0].mxu0
    %193 = vdwg.mxu0
    %v194 = vadd.f32 %v108, %v188
    %v195 = vadd.f32 %v109, %v191
    %vm196 = vcmask 261120
    %197 = vst.msk [vmem:[#allocation2] sm:$0xff] %vm196, %v194
    %198 = vst.msk [vmem:[#allocation2 + $0x8] sm:$0xff] %vm196, %v195
    // Predicated region
    $region54: #{bert_net_forward.17} parent=1 // pred_check
      %p199 = pneg %p101
    $region55: #{bert_net_forward.17} parent=1 // pred_check_branch
      %201 = sbr.rel (%p199) target = $region57
    $region56: #{bert_net_forward.17} parent=1 // pred_region
      %v202 = vld [vmem:[#allocation2] sm:$0xff]
      %v203 = vld [vmem:[#allocation2 + $0x8] sm:$0xff]
      %v204 = vld [vmem:[#allocation8] sm:$0x1]
      %v206 = vlaneseq
      %v207 = vshrl.u32 %v206, 7
      %v208 = vsub.s32 0, %v207
      %v209 = vrot.slane %v204, %v208
      %v211 = vadd.f32 %v202, %v209
      %v212 = vadd.f32 %v203, %v209
      %v213 = vld [vmem:[#allocation9] sm:$0xf]
      %v214 = vld [vmem:[#allocation9 + $0x4] sm:$0xf]
      %v215 = vunpack.c.l.bf16 %v213
      %v216 = vunpack.c.l.bf16 %v214
      %v217 = vadd.f32 %v211, %v215
      %v218 = vadd.f32 %v212, %v216
      %v219 = vsel %vm196, %v217, 0.0
      %220 = vadd.xlane.f32.xlu0 %v219
      %v221 = vpop.xlane.xlu0 %220
      %v222 = vsel %vm196, %v218, 0.0
      %223 = vadd.xlane.f32.xlu0 %v222
      %v224 = vpop.xlane.xlu0 %223
      %v225 = vrcp.pop 32.0
      %v226 = vmul.f32 %v221, %v225
      %v227 = vmul.f32 %v224, %v225
      %v228 = vsub.f32 %v217, %v226
      %v229 = vsub.f32 %v218, %v227
      %v230 = vmul.f32 %v228, %v228
      %v231 = vmul.f32 %v229, %v229
      %v232 = vsel %vm196, %v230, 0.0
      %233 = vadd.xlane.f32.xlu0 %v232
      %v234 = vpop.xlane.xlu0 %233
      %v235 = vsel %vm196, %v231, 0.0
      %236 = vadd.xlane.f32.xlu0 %v235
      %v237 = vpop.xlane.xlu0 %236
      %v238 = vmul.f32 %v234, %v225
      %v239 = vmul.f32 %v237, %v225
      %v240 = vadd.f32 %v238, 1e-12
      %v241 = vadd.f32 %v239, 1e-12
      %v242 = vrsqrt.pop %v240
      %v243 = vrsqrt.pop %v241
      %v244 = vmul.f32 %v228, %v242
      %v245 = vmul.f32 %v229, %v243
      %v246 = vld [vmem:[#allocation11] sm:$0x1]
      %v248 = vlaneseq
      %v249 = vshrl.u32 %v248, 7
      %v250 = vsub.s32 0, %v249
      %v251 = vrot.slane %v246, %v250
      %v253 = vmul.f32 %v244, %v251
      %v254 = vmul.f32 %v245, %v251
      %v255 = vld [vmem:[#allocation12] sm:$0x1]
      %v257 = vlaneseq
      %v258 = vshrl.u32 %v257, 7
      %v259 = vsub.s32 0, %v258
      %v260 = vrot.slane %v255, %v259
      %v262 = vadd.f32 %v253, %v260
      %v263 = vadd.f32 %v254, %v260
      %v264 = vpack.c.bf16 %v263, %v262
      %v266 = vunpack.c.l.b16 %v264
      %v267 = vunpack.c.h.b16 %v264
      %v268 = vpack.c.b16 %v266, %v266
      %v269 = vpack.c.b16 %v267, %v267
      %vm272 = vcmask 257024
      %273 = vst.msk [vmem:[#allocation14] sm:$0xf] %vm272, %v268
      %274 = vst.msk [vmem:[#allocation14 + $0x4] sm:$0xf] %vm272, %v269
    $region57: #{bert_net_forward.17} parent=1 // pred_fallthru
      _
    // Predicated region
    $region58: #{bert_net_forward.17} parent=1 // pred_check
      _
    $region59: #{bert_net_forward.17} parent=1 // pred_check_branch
      %276 = sbr.rel (0) target = $region61
    $region60: #{bert_net_forward.17} parent=1 // pred_region
      %s278 = ssub.s32 128, 128
      %279 = vsyncadd [#allocation5], %s278
      %s280 = sshll.u32 [#allocation14], 4
      %s281 = int_to_ptr.vmem [resolvable:$true] %s280
      %286 = dma.vmem_to_hbm [thread:$0]  %s281, 128, %s6, [#allocation5], 64, 64, 4
    $region61: #{bert_net_forward.17} parent=1 // pred_fallthru
      _
    // Predicated region
    $region62: #{bert_net_forward.17} parent=1 // pred_check
      _
    $region63: #{bert_net_forward.17} parent=1 // pred_check_branch
      %288 = sbr.rel (0) target = $region65
    $region64: #{bert_net_forward.17} parent=1 // pred_region
      %289 = dma.done [#allocation5], 128
    $region65: #{bert_net_forward.17} parent=1 // pred_fallthru
      _
    %290 = vsyncpa [#allocation4], 1
    %291 = vsyncpa [#allocation7], 1
    %292 = vsyncpa [#allocation10], 1
    %293 = vsyncpa [#allocation13], 1
    %294 = vsyncpa [#allocation5], 1

// kernel: bert_net_forward.23
$region0: #{bert_net_forward.23}
  #allocation0 [shape = 'u32[]', space=smem, size = 0x4, offset = 0x4, fixed_abs, tag = 'smem constant byte address 0x4 - core index']
  #allocation1 [shape = 'u32[144,128]{1,0:T(1,128)}', space=vmem, size = 0x12000, scoped, tag = 'internal scratch']
  %s0 = inlined_call_operand.hbm [shape: bf16[2,32], index: 0, kind: input, shape index: {}]
  %s1 = inlined_call_operand.hbm [shape: bf16[32,32], index: 1, kind: input, shape index: {}]
  %s2 = inlined_call_operand.hbm [shape: f32[1,32], index: 2, kind: input, shape index: {}]
  %s3 = inlined_call_operand.hbm [shape: bf16[32,1024], index: 3, kind: input, shape index: {}]
  %s4 = inlined_call_operand.hbm [shape: f32[1,1024], index: 4, kind: input, shape index: {}]
  %s5 = inlined_call_operand.hbm [shape: bf16[1024,256], index: 5, kind: input, shape index: {}]
  %s6 = inlined_call_operand.hbm [shape: f32[1,256], index: 6, kind: input, shape index: {}]
  %s7 = inlined_call_operand.hbm [shape: bf16[256,128], index: 7, kind: input, shape index: {}]
  %s8 = inlined_call_operand.hbm [shape: f32[1,128], index: 8, kind: input, shape index: {}]
  %s9 = inlined_call_operand.hbm [shape: f32[2,128], index: 9, kind: output, shape index: {}]
  %s10 = sld [smem:[#allocation0]]
  $region82: #{bert_net_forward.23} parent=0
    _
  %s12 = ssub.s32 1, %s10
  %s13 = scalar_select 0, %s12, %s10
  $region1: #{bert_net_forward.23} parent=0
    #allocation2 [shape = 'u8[512]{0}', space=vmem, size = 0x400, scoped, tag = 'input window, operand 0, single buffered']
    #allocation3 [shape = 's32[1]{0}', space=sflag, size = 0x4, scoped, tag = 'scoped memory for bert_net_forward.23']
    #allocation4 [shape = 's32[1]{0}', space=sflag, size = 0x4, scoped, tag = 'scoped memory for bert_net_forward.23']
    #allocation5 [shape = 'u8[8192]{0}', space=vmem, size = 0x2000, scoped, tag = 'input window, operand 1, single buffered']
    #allocation6 [shape = 's32[1]{0}', space=sflag, size = 0x4, scoped, tag = 'scoped memory for bert_net_forward.23']
    #allocation7 [shape = 'u8[512]{0}', space=vmem, size = 0x400, scoped, tag = 'input window, operand 2, single buffered']
    #allocation8 [shape = 'u8[65536]{0}', space=vmem, size = 0x10000, scoped, tag = 'input window, operand 3, single buffered']
    #allocation9 [shape = 's32[1]{0}', space=sflag, size = 0x4, scoped, tag = 'scoped memory for bert_net_forward.23']
    #allocation10 [shape = 'u8[4096]{0}', space=vmem, size = 0x1000, scoped, tag = 'input window, operand 4, single buffered']
    #allocation11 [shape = 'u8[524288]{0}', space=vmem, size = 0x80000, scoped, tag = 'input window, operand 5, single buffered']
    #allocation12 [shape = 's32[1]{0}', space=sflag, size = 0x4, scoped, tag = 'scoped memory for bert_net_forward.23']
    #allocation13 [shape = 'u8[1024]{0}', space=vmem, size = 0x400, scoped, tag = 'input window, operand 6, single buffered']
    #allocation14 [shape = 'u8[65536]{0}', space=vmem, size = 0x10000, scoped, tag = 'input window, operand 7, single buffered']
    #allocation15 [shape = 's32[1]{0}', space=sflag, size = 0x4, scoped, tag = 'scoped memory for bert_net_forward.23']
    #allocation16 [shape = 'u8[512]{0}', space=vmem, size = 0x400, scoped, tag = 'input window, operand 8, single buffered']
    #allocation17 [shape = 'u8[1024]{0}', space=vmem, size = 0x400, scoped, tag = 'output window, operand 0, single buffered']
    %14 = vsyncpa [#allocation3], 0
    %15 = vsyncpa [#allocation6], 0
    %16 = vsyncpa [#allocation9], 0
    %17 = vsyncpa [#allocation12], 0
    %18 = vsyncpa [#allocation15], 0
    %19 = vsyncpa [#allocation4], 0
    // Predicated region
    $region2: #{bert_net_forward.23} parent=1 // pred_check
      _
    $region3: #{bert_net_forward.23} parent=1 // pred_check_branch
      %21 = sbr.rel (0) target = $region5
    $region4: #{bert_net_forward.23} parent=1 // pred_region
      %s23 = ssub.s32 16, 16
      %24 = vsyncadd [#allocation3], %s23
      %s26 = sshll.u32 [#allocation2], 4
      %s27 = int_to_ptr.vmem [resolvable:$true] %s26
      %29 = dma.hbm_to_vmem [thread:$0]  %s0, 16, %s27, [#allocation3]
    $region5: #{bert_net_forward.23} parent=1 // pred_fallthru
      _
    // Predicated region
    $region6: #{bert_net_forward.23} parent=1 // pred_check
      _
    $region7: #{bert_net_forward.23} parent=1 // pred_check_branch
      %31 = sbr.rel (0) target = $region9
    $region8: #{bert_net_forward.23} parent=1 // pred_region
      %s33 = ssub.s32 256, 256
      %34 = vsyncadd [#allocation6], %s33
      %s35 = sshll.u32 [#allocation5], 4
      %s36 = int_to_ptr.vmem [resolvable:$true] %s35
      %41 = dma.hbm_to_vmem [thread:$0]  %s1, 256, %s36, [#allocation6], 64, 64, 4
    $region9: #{bert_net_forward.23} parent=1 // pred_fallthru
      _
    // Predicated region
    $region10: #{bert_net_forward.23} parent=1 // pred_check
      _
    $region11: #{bert_net_forward.23} parent=1 // pred_check_branch
      %43 = sbr.rel (0) target = $region13
    $region12: #{bert_net_forward.23} parent=1 // pred_region
      %s45 = ssub.s32 16, 16
      %46 = vsyncadd [#allocation6], %s45
      %s48 = sshll.u32 [#allocation7], 4
      %s49 = int_to_ptr.vmem [resolvable:$true] %s48
      %51 = dma.hbm_to_vmem [thread:$0]  %s2, 16, %s49, [#allocation6]
    $region13: #{bert_net_forward.23} parent=1 // pred_fallthru
      _
    // Predicated region
    $region14: #{bert_net_forward.23} parent=1 // pred_check
      _
    $region15: #{bert_net_forward.23} parent=1 // pred_check_branch
      %53 = sbr.rel (0) target = $region17
    $region16: #{bert_net_forward.23} parent=1 // pred_region
      %s55 = ssub.s32 2048, 2048
      %56 = vsyncadd [#allocation9], %s55
      %s57 = sshll.u32 [#allocation8], 4
      %s58 = int_to_ptr.vmem [resolvable:$true] %s57
      %63 = dma.hbm_to_vmem [thread:$0]  %s3, 2048, %s58, [#allocation9], 512, 512, 32
    $region17: #{bert_net_forward.23} parent=1 // pred_fallthru
      _
    // Predicated region
    $region18: #{bert_net_forward.23} parent=1 // pred_check
      _
    $region19: #{bert_net_forward.23} parent=1 // pred_check_branch
      %65 = sbr.rel (0) target = $region21
    $region20: #{bert_net_forward.23} parent=1 // pred_region
      %s67 = ssub.s32 128, 128
      %68 = vsyncadd [#allocation9], %s67
      %s70 = sshll.u32 [#allocation10], 4
      %s71 = int_to_ptr.vmem [resolvable:$true] %s70
      %73 = dma.hbm_to_vmem [thread:$0]  %s4, 128, %s71, [#allocation9]
    $region21: #{bert_net_forward.23} parent=1 // pred_fallthru
      _
    // Predicated region
    $region22: #{bert_net_forward.23} parent=1 // pred_check
      _
    $region23: #{bert_net_forward.23} parent=1 // pred_check_branch
      %75 = sbr.rel (0) target = $region25
    $region24: #{bert_net_forward.23} parent=1 // pred_region
      %s77 = ssub.s32 16384, 16384
      %78 = vsyncadd [#allocation12], %s77
      %s79 = sshll.u32 [#allocation11], 4
      %s80 = int_to_ptr.vmem [resolvable:$true] %s79
      %85 = dma.hbm_to_vmem [thread:$0]  %s5, 16384, %s80, [#allocation12], 128, 128, 8
    $region25: #{bert_net_forward.23} parent=1 // pred_fallthru
      _
    // Predicated region
    $region26: #{bert_net_forward.23} parent=1 // pred_check
      _
    $region27: #{bert_net_forward.23} parent=1 // pred_check_branch
      %87 = sbr.rel (0) target = $region29
    $region28: #{bert_net_forward.23} parent=1 // pred_region
      %s89 = ssub.s32 32, 32
      %90 = vsyncadd [#allocation12], %s89
      %s92 = sshll.u32 [#allocation13], 4
      %s93 = int_to_ptr.vmem [resolvable:$true] %s92
      %95 = dma.hbm_to_vmem [thread:$0]  %s6, 32, %s93, [#allocation12]
    $region29: #{bert_net_forward.23} parent=1 // pred_fallthru
      _
    // Predicated region
    $region30: #{bert_net_forward.23} parent=1 // pred_check
      _
    $region31: #{bert_net_forward.23} parent=1 // pred_check_branch
      %97 = sbr.rel (0) target = $region33
    $region32: #{bert_net_forward.23} parent=1 // pred_region
      %s99 = ssub.s32 2048, 2048
      %100 = vsyncadd [#allocation15], %s99
      %s101 = sshll.u32 [#allocation14], 4
      %s102 = int_to_ptr.vmem [resolvable:$true] %s101
      %107 = dma.hbm_to_vmem [thread:$0]  %s7, 2048, %s102, [#allocation15], 64, 64, 4
    $region33: #{bert_net_forward.23} parent=1 // pred_fallthru
      _
    // Predicated region
    $region34: #{bert_net_forward.23} parent=1 // pred_check
      _
    $region35: #{bert_net_forward.23} parent=1 // pred_check_branch
      %109 = sbr.rel (0) target = $region37
    $region36: #{bert_net_forward.23} parent=1 // pred_region
      %s111 = ssub.s32 16, 16
      %112 = vsyncadd [#allocation15], %s111
      %s114 = sshll.u32 [#allocation16], 4
      %s115 = int_to_ptr.vmem [resolvable:$true] %s114
      %117 = dma.hbm_to_vmem [thread:$0]  %s8, 16, %s115, [#allocation15]
    $region37: #{bert_net_forward.23} parent=1 // pred_fallthru
      _
    // Predicated region
    $region38: #{bert_net_forward.23} parent=1 // pred_check
      _
    $region39: #{bert_net_forward.23} parent=1 // pred_check_branch
      %119 = sbr.rel (0) target = $region41
    $region40: #{bert_net_forward.23} parent=1 // pred_region
      %120 = dma.done [#allocation3], 16
    $region41: #{bert_net_forward.23} parent=1 // pred_fallthru
      _
    // Predicated region
    $region42: #{bert_net_forward.23} parent=1 // pred_check
      _
    $region43: #{bert_net_forward.23} parent=1 // pred_check_branch
      %122 = sbr.rel (0) target = $region45
    $region44: #{bert_net_forward.23} parent=1 // pred_region
      %123 = dma.done [#allocation6], 256
    $region45: #{bert_net_forward.23} parent=1 // pred_fallthru
      _
    // Predicated region
    $region46: #{bert_net_forward.23} parent=1 // pred_check
      _
    $region47: #{bert_net_forward.23} parent=1 // pred_check_branch
      %125 = sbr.rel (0) target = $region49
    $region48: #{bert_net_forward.23} parent=1 // pred_region
      %126 = dma.done [#allocation6], 16
    $region49: #{bert_net_forward.23} parent=1 // pred_fallthru
      _
    // Predicated region
    $region50: #{bert_net_forward.23} parent=1 // pred_check
      _
    $region51: #{bert_net_forward.23} parent=1 // pred_check_branch
      %128 = sbr.rel (0) target = $region53
    $region52: #{bert_net_forward.23} parent=1 // pred_region
      %129 = dma.done [#allocation9], 2048
    $region53: #{bert_net_forward.23} parent=1 // pred_fallthru
      _
    // Predicated region
    $region54: #{bert_net_forward.23} parent=1 // pred_check
      _
    $region55: #{bert_net_forward.23} parent=1 // pred_check_branch
      %131 = sbr.rel (0) target = $region57
    $region56: #{bert_net_forward.23} parent=1 // pred_region
      %132 = dma.done [#allocation9], 128
    $region57: #{bert_net_forward.23} parent=1 // pred_fallthru
      _
    // Predicated region
    $region58: #{bert_net_forward.23} parent=1 // pred_check
      _
    $region59: #{bert_net_forward.23} parent=1 // pred_check_branch
      %134 = sbr.rel (0) target = $region61
    $region60: #{bert_net_forward.23} parent=1 // pred_region
      %135 = dma.done [#allocation12], 16384
    $region61: #{bert_net_forward.23} parent=1 // pred_fallthru
      _
    // Predicated region
    $region62: #{bert_net_forward.23} parent=1 // pred_check
      _
    $region63: #{bert_net_forward.23} parent=1 // pred_check_branch
      %137 = sbr.rel (0) target = $region65
    $region64: #{bert_net_forward.23} parent=1 // pred_region
      %138 = dma.done [#allocation12], 32
    $region65: #{bert_net_forward.23} parent=1 // pred_fallthru
      _
    // Predicated region
    $region66: #{bert_net_forward.23} parent=1 // pred_check
      _
    $region67: #{bert_net_forward.23} parent=1 // pred_check_branch
      %140 = sbr.rel (0) target = $region69
    $region68: #{bert_net_forward.23} parent=1 // pred_region
      %141 = dma.done [#allocation15], 2048
    $region69: #{bert_net_forward.23} parent=1 // pred_fallthru
      _
    // Predicated region
    $region70: #{bert_net_forward.23} parent=1 // pred_check
      _
    $region71: #{bert_net_forward.23} parent=1 // pred_check_branch
      %143 = sbr.rel (0) target = $region73
    $region72: #{bert_net_forward.23} parent=1 // pred_region
      %144 = dma.done [#allocation15], 16
    $region73: #{bert_net_forward.23} parent=1 // pred_fallthru
      _
    %v146 = vld [vmem:[#allocation2] sm:$0x1]
    %v147 = vld [vmem:[#allocation5] sm:$0xf]
    %v148 = vld [vmem:[#allocation5 + $0x4] sm:$0xf]
    %v149 = vld [vmem:[#allocation5 + $0x8] sm:$0xf]
    %v150 = vld [vmem:[#allocation5 + $0xc] sm:$0xf]
    %v151 = vld [vmem:[#allocation7] sm:$0x1]
    %v153 = vlaneseq
    %v154 = vshrl.u32 %v153, 7
    %v155 = vsub.s32 0, %v154
    %v156 = vrot.slane %v151, %v155
    %v162 = vunpack.c.l.b16 %v147
    %v163 = vunpack.c.l.b16 %v148
    %v164 = vunpack.c.l.b16 %v149
    %v165 = vunpack.c.l.b16 %v150
    %v166 = vpack.c.b16 %v163, %v162
    %v167 = vpack.c.b16 %v165, %v164
    %vm170 = vcmask 261120
    %v172 = vsel %vm170, %v146, 0
    %174 = vmatprep.subr.bf16.mxu0 0
    %175 = vmatpush1.bf16.msra.mxu0 %v166
    %176 = vmatprep.subr.bf16.mxu0 0
    %177 = vmatpush1.bf16.msra.mxu0 %v167
    %178 = vmatprep.subr.bf16.mxu0 0
    %179 = vmatpush1.bf16.msra.mxu0 0
    %180 = vmatprep.subr.bf16.mxu0 0
    %181 = vmatpush1.bf16.msra.mxu0 0
    %182 = vmatprep.subr.bf16.mxu0 0
    %183 = vmatpush1.bf16.msra.mxu0 0
    %184 = vmatprep.subr.bf16.mxu0 0
    %185 = vmatpush1.bf16.msra.mxu0 0
    %186 = vmatprep.subr.bf16.mxu0 0
    %187 = vmatpush1.bf16.msra.mxu0 0
    %188 = vmatprep.subr.bf16.mxu0 0
    %189 = vmatpush1.bf16.msra.mxu0 0
    %190 = vmatprep.subr.bf16.mxu0 0
    %191 = vmatpush1.bf16.msra.mxu0 0
    %192 = vmatprep.subr.bf16.mxu0 0
    %193 = vmatpush1.bf16.msra.mxu0 0
    %194 = vmatprep.subr.bf16.mxu0 0
    %195 = vmatpush1.bf16.msra.mxu0 0
    %196 = vmatprep.subr.bf16.mxu0 0
    %197 = vmatpush1.bf16.msra.mxu0 0
    %198 = vmatprep.subr.bf16.mxu0 0
    %199 = vmatpush1.bf16.msra.mxu0 0
    %200 = vmatprep.subr.bf16.mxu0 0
    %201 = vmatpush1.bf16.msra.mxu0 0
    %202 = vmatprep.subr.bf16.mxu0 0
    %203 = vmatpush1.bf16.msra.mxu0 0
    %204 = vmatprep.subr.bf16.mxu0 0
    %205 = vmatpush1.bf16.msra.mxu0 0
    %206 = vmatprep.mubr.bf16.mxu0 0
    %207 = vmatmul.mubr.bf16.gmra.mrb[0].mxu0 %v172
    %v208 = vpop.f32.mrb[0].mxu0
    %v209 = vadd.f32 %v156, %v208
    %v210 = vpop.f32.mrb[0].mxu0
    %v211 = vpop.f32.mrb[0].mxu0
    %v212 = vpop.f32.mrb[0].mxu0
    %213 = vdwg.mxu0
    %v214 = vtanh.pop %v209
    %v215 = vpack.c.bf16 %v214, %v214
    %v216 = vld [vmem:[#allocation8] sm:$0xff]
    %v217 = vld [vmem:[#allocation8 + $0x8] sm:$0xff]
    %v218 = vld [vmem:[#allocation8 + $0x10] sm:$0xff]
    %v219 = vld [vmem:[#allocation8 + $0x18] sm:$0xff]
    %v220 = vld [vmem:[#allocation8 + $0x20] sm:$0xff]
    %v221 = vld [vmem:[#allocation8 + $0x28] sm:$0xff]
    %v222 = vld [vmem:[#allocation8 + $0x30] sm:$0xff]
    %v223 = vld [vmem:[#allocation8 + $0x38] sm:$0xff]
    %v224 = vld [vmem:[#allocation8 + $0x40] sm:$0xff]
    %v225 = vld [vmem:[#allocation8 + $0x48] sm:$0xff]
    %v226 = vld [vmem:[#allocation8 + $0x50] sm:$0xff]
    %v227 = vld [vmem:[#allocation8 + $0x58] sm:$0xff]
    %v228 = vld [vmem:[#allocation8 + $0x60] sm:$0xff]
    %v229 = vld [vmem:[#allocation8 + $0x68] sm:$0xff]
    %v230 = vld [vmem:[#allocation8 + $0x70] sm:$0xff]
    %v231 = vld [vmem:[#allocation8 + $0x78] sm:$0xff]
    %v232 = vld [vmem:[#allocation10] sm:$0xff]
    %v234 = vlaneseq
    %v235 = vshrl.u32 %v234, 7
    %v236 = vsub.s32 0, %v235
    %v237 = vrot.slane %v232, %v236
    %v238 = vlaneseq
    %v239 = vshrl.u32 %v238, 7
    %v240 = vsub.s32 1, %v239
    %v241 = vrot.slane %v232, %v240
    %v242 = vlaneseq
    %v243 = vshrl.u32 %v242, 7
    %v244 = vsub.s32 2, %v243
    %v245 = vrot.slane %v232, %v244
    %v246 = vlaneseq
    %v247 = vshrl.u32 %v246, 7
    %v248 = vsub.s32 3, %v247
    %v249 = vrot.slane %v232, %v248
    %v250 = vlaneseq
    %v251 = vshrl.u32 %v250, 7
    %v252 = vsub.s32 4, %v251
    %v253 = vrot.slane %v232, %v252
    %v254 = vlaneseq
    %v255 = vshrl.u32 %v254, 7
    %v256 = vsub.s32 5, %v255
    %v257 = vrot.slane %v232, %v256
    %v258 = vlaneseq
    %v259 = vshrl.u32 %v258, 7
    %v260 = vsub.s32 6, %v259
    %v261 = vrot.slane %v232, %v260
    %v262 = vlaneseq
    %v263 = vshrl.u32 %v262, 7
    %v264 = vsub.s32 7, %v263
    %v265 = vrot.slane %v232, %v264
    %v290 = vunpack.c.l.b16 %v216
    %v291 = vunpack.c.h.b16 %v216
    %v292 = vunpack.c.l.b16 %v217
    %v293 = vunpack.c.h.b16 %v217
    %v294 = vunpack.c.l.b16 %v218
    %v295 = vunpack.c.h.b16 %v218
    %v296 = vunpack.c.l.b16 %v219
    %v297 = vunpack.c.h.b16 %v219
    %v298 = vunpack.c.l.b16 %v220
    %v299 = vunpack.c.h.b16 %v220
    %v300 = vunpack.c.l.b16 %v221
    %v301 = vunpack.c.h.b16 %v221
    %v302 = vunpack.c.l.b16 %v222
    %v303 = vunpack.c.h.b16 %v222
    %v304 = vunpack.c.l.b16 %v223
    %v305 = vunpack.c.h.b16 %v223
    %v306 = vunpack.c.l.b16 %v224
    %v307 = vunpack.c.h.b16 %v224
    %v308 = vunpack.c.l.b16 %v225
    %v309 = vunpack.c.h.b16 %v225
    %v310 = vunpack.c.l.b16 %v226
    %v311 = vunpack.c.h.b16 %v226
    %v312 = vunpack.c.l.b16 %v227
    %v313 = vunpack.c.h.b16 %v227
    %v314 = vunpack.c.l.b16 %v228
    %v315 = vunpack.c.h.b16 %v228
    %v316 = vunpack.c.l.b16 %v229
    %v317 = vunpack.c.h.b16 %v229
    %v318 = vunpack.c.l.b16 %v230
    %v319 = vunpack.c.h.b16 %v230
    %v320 = vunpack.c.l.b16 %v231
    %v321 = vunpack.c.h.b16 %v231
    %v322 = vpack.c.b16 %v298, %v290
    %v323 = vpack.c.b16 %v299, %v291
    %v324 = vpack.c.b16 %v300, %v292
    %v325 = vpack.c.b16 %v301, %v293
    %v326 = vpack.c.b16 %v302, %v294
    %v327 = vpack.c.b16 %v303, %v295
    %v328 = vpack.c.b16 %v304, %v296
    %v329 = vpack.c.b16 %v305, %v297
    %v330 = vpack.c.b16 %v314, %v306
    %v331 = vpack.c.b16 %v315, %v307
    %v332 = vpack.c.b16 %v316, %v308
    %v333 = vpack.c.b16 %v317, %v309
    %v334 = vpack.c.b16 %v318, %v310
    %v335 = vpack.c.b16 %v319, %v311
    %v336 = vpack.c.b16 %v320, %v312
    %v337 = vpack.c.b16 %v321, %v313
    %v355 = vsel %vm170, %v215, 0
    %357 = vmatprep.subr.bf16.mxu0 %v323
    %358 = vmatpush1.bf16.msra.mxu0 %v322
    %359 = vmatprep.subr.bf16.mxu0 %v331
    %360 = vmatpush1.bf16.msra.mxu0 %v330
    %361 = vmatprep.subr.bf16.mxu0 0
    %362 = vmatpush1.bf16.msra.mxu0 0
    %363 = vmatprep.subr.bf16.mxu0 0
    %364 = vmatpush1.bf16.msra.mxu0 0
    %365 = vmatprep.subr.bf16.mxu0 0
    %366 = vmatpush1.bf16.msra.mxu0 0
    %367 = vmatprep.subr.bf16.mxu0 0
    %368 = vmatpush1.bf16.msra.mxu0 0
    %369 = vmatprep.subr.bf16.mxu0 0
    %370 = vmatpush1.bf16.msra.mxu0 0
    %371 = vmatprep.subr.bf16.mxu0 0
    %372 = vmatpush1.bf16.msra.mxu0 0
    %373 = vmatprep.subr.bf16.mxu0 0
    %374 = vmatpush1.bf16.msra.mxu0 0
    %375 = vmatprep.subr.bf16.mxu0 0
    %376 = vmatpush1.bf16.msra.mxu0 0
    %377 = vmatprep.subr.bf16.mxu0 0
    %378 = vmatpush1.bf16.msra.mxu0 0
    %379 = vmatprep.subr.bf16.mxu0 0
    %380 = vmatpush1.bf16.msra.mxu0 0
    %381 = vmatprep.subr.bf16.mxu0 0
    %382 = vmatpush1.bf16.msra.mxu0 0
    %383 = vmatprep.subr.bf16.mxu0 0
    %384 = vmatpush1.bf16.msra.mxu0 0
    %385 = vmatprep.subr.bf16.mxu0 0
    %386 = vmatpush1.bf16.msra.mxu0 0
    %387 = vmatprep.subr.bf16.mxu0 0
    %388 = vmatpush1.bf16.msra.mxu0 0
    %389 = vmatprep.mubr.bf16.mxu0 0
    %390 = vmatmul.mubr.bf16.gmra.mrb[0].mxu0 %v355
    %v391 = vpop.f32.mrb[0].mxu0
    %v392 = vadd.f32 %v237, %v391
    %v393 = vpop.f32.mrb[0].mxu0
    %v394 = vadd.f32 %v241, %v393
    %v395 = vpop.f32.mrb[0].mxu0
    %v396 = vpop.f32.mrb[0].mxu0
    %397 = vdwg.mxu0
    %398 = vmatprep.subr.bf16.mxu0 %v325
    %399 = vmatpush1.bf16.msra.mxu0 %v324
    %400 = vmatprep.subr.bf16.mxu0 %v333
    %401 = vmatpush1.bf16.msra.mxu0 %v332
    %402 = vmatprep.subr.bf16.mxu0 0
    %403 = vmatpush1.bf16.msra.mxu0 0
    %404 = vmatprep.subr.bf16.mxu0 0
    %405 = vmatpush1.bf16.msra.mxu0 0
    %406 = vmatprep.subr.bf16.mxu0 0
    %407 = vmatpush1.bf16.msra.mxu0 0
    %408 = vmatprep.subr.bf16.mxu0 0
    %409 = vmatpush1.bf16.msra.mxu0 0
    %410 = vmatprep.subr.bf16.mxu0 0
    %411 = vmatpush1.bf16.msra.mxu0 0
    %412 = vmatprep.subr.bf16.mxu0 0
    %413 = vmatpush1.bf16.msra.mxu0 0
    %414 = vmatprep.subr.bf16.mxu0 0
    %415 = vmatpush1.bf16.msra.mxu0 0
    %416 = vmatprep.subr.bf16.mxu0 0
    %417 = vmatpush1.bf16.msra.mxu0 0
    %418 = vmatprep.subr.bf16.mxu0 0
    %419 = vmatpush1.bf16.msra.mxu0 0
    %420 = vmatprep.subr.bf16.mxu0 0
    %421 = vmatpush1.bf16.msra.mxu0 0
    %422 = vmatprep.subr.bf16.mxu0 0
    %423 = vmatpush1.bf16.msra.mxu0 0
    %424 = vmatprep.subr.bf16.mxu0 0
    %425 = vmatpush1.bf16.msra.mxu0 0
    %426 = vmatprep.subr.bf16.mxu0 0
    %427 = vmatpush1.bf16.msra.mxu0 0
    %428 = vmatprep.subr.bf16.mxu0 0
    %429 = vmatpush1.bf16.msra.mxu0 0
    %430 = vmatprep.mubr.bf16.mxu0 0
    %431 = vmatmul.mubr.bf16.gmra.mrb[0].mxu0 %v355
    %v432 = vpop.f32.mrb[0].mxu0
    %v433 = vadd.f32 %v245, %v432
    %v434 = vpop.f32.mrb[0].mxu0
    %v435 = vadd.f32 %v249, %v434
    %v436 = vpop.f32.mrb[0].mxu0
    %v437 = vpop.f32.mrb[0].mxu0
    %438 = vdwg.mxu0
    %439 = vmatprep.subr.bf16.mxu0 %v327
    %440 = vmatpush1.bf16.msra.mxu0 %v326
    %441 = vmatprep.subr.bf16.mxu0 %v335
    %442 = vmatpush1.bf16.msra.mxu0 %v334
    %443 = vmatprep.subr.bf16.mxu0 0
    %444 = vmatpush1.bf16.msra.mxu0 0
    %445 = vmatprep.subr.bf16.mxu0 0
    %446 = vmatpush1.bf16.msra.mxu0 0
    %447 = vmatprep.subr.bf16.mxu0 0
    %448 = vmatpush1.bf16.msra.mxu0 0
    %449 = vmatprep.subr.bf16.mxu0 0
    %450 = vmatpush1.bf16.msra.mxu0 0
    %451 = vmatprep.subr.bf16.mxu0 0
    %452 = vmatpush1.bf16.msra.mxu0 0
    %453 = vmatprep.subr.bf16.mxu0 0
    %454 = vmatpush1.bf16.msra.mxu0 0
    %455 = vmatprep.subr.bf16.mxu0 0
    %456 = vmatpush1.bf16.msra.mxu0 0
    %457 = vmatprep.subr.bf16.mxu0 0
    %458 = vmatpush1.bf16.msra.mxu0 0
    %459 = vmatprep.subr.bf16.mxu0 0
    %460 = vmatpush1.bf16.msra.mxu0 0
    %461 = vmatprep.subr.bf16.mxu0 0
    %462 = vmatpush1.bf16.msra.mxu0 0
    %463 = vmatprep.subr.bf16.mxu0 0
    %464 = vmatpush1.bf16.msra.mxu0 0
    %465 = vmatprep.subr.bf16.mxu0 0
    %466 = vmatpush1.bf16.msra.mxu0 0
    %467 = vmatprep.subr.bf16.mxu0 0
    %468 = vmatpush1.bf16.msra.mxu0 0
    %469 = vmatprep.subr.bf16.mxu0 0
    %470 = vmatpush1.bf16.msra.mxu0 0
    %471 = vmatprep.mubr.bf16.mxu0 0
    %472 = vmatmul.mubr.bf16.gmra.mrb[0].mxu0 %v355
    %v473 = vpop.f32.mrb[0].mxu0
    %v474 = vadd.f32 %v253, %v473
    %v475 = vpop.f32.mrb[0].mxu0
    %v476 = vadd.f32 %v257, %v475
    %v477 = vpop.f32.mrb[0].mxu0
    %v478 = vpop.f32.mrb[0].mxu0
    %479 = vdwg.mxu0
    %480 = vmatprep.subr.bf16.mxu0 %v329
    %481 = vmatpush1.bf16.msra.mxu0 %v328
    %482 = vmatprep.subr.bf16.mxu0 %v337
    %483 = vmatpush1.bf16.msra.mxu0 %v336
    %484 = vmatprep.subr.bf16.mxu0 0
    %485 = vmatpush1.bf16.msra.mxu0 0
    %486 = vmatprep.subr.bf16.mxu0 0
    %487 = vmatpush1.bf16.msra.mxu0 0
    %488 = vmatprep.subr.bf16.mxu0 0
    %489 = vmatpush1.bf16.msra.mxu0 0
    %490 = vmatprep.subr.bf16.mxu0 0
    %491 = vmatpush1.bf16.msra.mxu0 0
    %492 = vmatprep.subr.bf16.mxu0 0
    %493 = vmatpush1.bf16.msra.mxu0 0
    %494 = vmatprep.subr.bf16.mxu0 0
    %495 = vmatpush1.bf16.msra.mxu0 0
    %496 = vmatprep.subr.bf16.mxu0 0
    %497 = vmatpush1.bf16.msra.mxu0 0
    %498 = vmatprep.subr.bf16.mxu0 0
    %499 = vmatpush1.bf16.msra.mxu0 0
    %500 = vmatprep.subr.bf16.mxu0 0
    %501 = vmatpush1.bf16.msra.mxu0 0
    %502 = vmatprep.subr.bf16.mxu0 0
    %503 = vmatpush1.bf16.msra.mxu0 0
    %504 = vmatprep.subr.bf16.mxu0 0
    %505 = vmatpush1.bf16.msra.mxu0 0
    %506 = vmatprep.subr.bf16.mxu0 0
    %507 = vmatpush1.bf16.msra.mxu0 0
    %508 = vmatprep.subr.bf16.mxu0 0
    %509 = vmatpush1.bf16.msra.mxu0 0
    %510 = vmatprep.subr.bf16.mxu0 0
    %511 = vmatpush1.bf16.msra.mxu0 0
    %512 = vmatprep.mubr.bf16.mxu0 0
    %513 = vmatmul.mubr.bf16.gmra.mrb[0].mxu0 %v355
    %v514 = vpop.f32.mrb[0].mxu0
    %v515 = vadd.f32 %v261, %v514
    %v516 = vpop.f32.mrb[0].mxu0
    %v517 = vadd.f32 %v265, %v516
    %v518 = vpop.f32.mrb[0].mxu0
    %v519 = vpop.f32.mrb[0].mxu0
    %520 = vdwg.mxu0
    %v521 = vmax.f32 %v392, 0.0
    %v522 = vmax.f32 %v394, 0.0
    %v523 = vmax.f32 %v433, 0.0
    %v524 = vmax.f32 %v435, 0.0
    %v525 = vmax.f32 %v474, 0.0
    %v526 = vmax.f32 %v476, 0.0
    %v527 = vmax.f32 %v515, 0.0
    %v528 = vmax.f32 %v517, 0.0
    %v529 = vpack.c.bf16 %v521, %v521
    %v530 = vpack.c.bf16 %v522, %v522
    %v531 = vpack.c.bf16 %v523, %v523
    %v532 = vpack.c.bf16 %v524, %v524
    %v533 = vpack.c.bf16 %v525, %v525
    %v534 = vpack.c.bf16 %v526, %v526
    %v535 = vpack.c.bf16 %v527, %v527
    %v536 = vpack.c.bf16 %v528, %v528
    %v537 = vld [vmem:[#allocation11] sm:$0xff]
    %v538 = vld [vmem:[#allocation11 + $0x8] sm:$0xff]
    %v539 = vld [vmem:[#allocation11 + $0x10] sm:$0xff]
    %v540 = vld [vmem:[#allocation11 + $0x18] sm:$0xff]
    %v541 = vld [vmem:[#allocation11 + $0x20] sm:$0xff]
    %v542 = vld [vmem:[#allocation11 + $0x28] sm:$0xff]
    %v543 = vld [vmem:[#allocation11 + $0x30] sm:$0xff]
    %v544 = vld [vmem:[#allocation11 + $0x38] sm:$0xff]
    %v545 = vld [vmem:[#allocation11 + $0x40] sm:$0xff]
    %v546 = vld [vmem:[#allocation11 + $0x48] sm:$0xff]
    %v547 = vld [vmem:[#allocation11 + $0x50] sm:$0xff]
    %v548 = vld [vmem:[#allocation11 + $0x58] sm:$0xff]
    %v549 = vld [vmem:[#allocation11 + $0x60] sm:$0xff]
    %v550 = vld [vmem:[#allocation11 + $0x68] sm:$0xff]
    %v551 = vld [vmem:[#allocation11 + $0x70] sm:$0xff]
    %v552 = vld [vmem:[#allocation11 + $0x78] sm:$0xff]
    %v553 = vld [vmem:[#allocation11 + $0x80] sm:$0xff]
    %v554 = vld [vmem:[#allocation11 + $0x88] sm:$0xff]
    %v555 = vld [vmem:[#allocation11 + $0x90] sm:$0xff]
    %v556 = vld [vmem:[#allocation11 + $0x98] sm:$0xff]
    %v557 = vld [vmem:[#allocation11 + $0xa0] sm:$0xff]
    %v558 = vld [vmem:[#allocation11 + $0xa8] sm:$0xff]
    %v559 = vld [vmem:[#allocation11 + $0xb0] sm:$0xff]
    %v560 = vld [vmem:[#allocation11 + $0xb8] sm:$0xff]
    %v561 = vld [vmem:[#allocation11 + $0xc0] sm:$0xff]
    %v562 = vld [vmem:[#allocation11 + $0xc8] sm:$0xff]
    %v563 = vld [vmem:[#allocation11 + $0xd0] sm:$0xff]
    %v564 = vld [vmem:[#allocation11 + $0xd8] sm:$0xff]
    %v565 = vld [vmem:[#allocation11 + $0xe0] sm:$0xff]
    %v566 = vld [vmem:[#allocation11 + $0xe8] sm:$0xff]
    %v567 = vld [vmem:[#allocation11 + $0xf0] sm:$0xff]
    %v568 = vld [vmem:[#allocation11 + $0xf8] sm:$0xff]
    %v569 = vld [vmem:[#allocation11 + $0x100] sm:$0xff]
    %v570 = vld [vmem:[#allocation11 + $0x108] sm:$0xff]
    %v571 = vld [vmem:[#allocation11 + $0x110] sm:$0xff]
    %v572 = vld [vmem:[#allocation11 + $0x118] sm:$0xff]
    %v573 = vld [vmem:[#allocation11 + $0x120] sm:$0xff]
    %v574 = vld [vmem:[#allocation11 + $0x128] sm:$0xff]
    %v575 = vld [vmem:[#allocation11 + $0x130] sm:$0xff]
    %v576 = vld [vmem:[#allocation11 + $0x138] sm:$0xff]
    %v577 = vld [vmem:[#allocation11 + $0x140] sm:$0xff]
    %v578 = vld [vmem:[#allocation11 + $0x148] sm:$0xff]
    %v579 = vld [vmem:[#allocation11 + $0x150] sm:$0xff]
    %v580 = vld [vmem:[#allocation11 + $0x158] sm:$0xff]
    %v581 = vld [vmem:[#allocation11 + $0x160] sm:$0xff]
    %v582 = vld [vmem:[#allocation11 + $0x168] sm:$0xff]
    %v583 = vld [vmem:[#allocation11 + $0x170] sm:$0xff]
    %v584 = vld [vmem:[#allocation11 + $0x178] sm:$0xff]
    %v585 = vld [vmem:[#allocation11 + $0x180] sm:$0xff]
    %v586 = vld [vmem:[#allocation11 + $0x188] sm:$0xff]
    %v587 = vld [vmem:[#allocation11 + $0x190] sm:$0xff]
    %v588 = vld [vmem:[#allocation11 + $0x198] sm:$0xff]
    %v589 = vld [vmem:[#allocation11 + $0x1a0] sm:$0xff]
    %v590 = vld [vmem:[#allocation11 + $0x1a8] sm:$0xff]
    %v591 = vld [vmem:[#allocation11 + $0x1b0] sm:$0xff]
    %v592 = vld [vmem:[#allocation11 + $0x1b8] sm:$0xff]
    %v593 = vld [vmem:[#allocation11 + $0x1c0] sm:$0xff]
    %v594 = vld [vmem:[#allocation11 + $0x1c8] sm:$0xff]
    %v595 = vld [vmem:[#allocation11 + $0x1d0] sm:$0xff]
    %v596 = vld [vmem:[#allocation11 + $0x1d8] sm:$0xff]
    %v597 = vld [vmem:[#allocation11 + $0x1e0] sm:$0xff]
    %v598 = vld [vmem:[#allocation11 + $0x1e8] sm:$0xff]
    %v599 = vld [vmem:[#allocation11 + $0x1f0] sm:$0xff]
    %v600 = vld [vmem:[#allocation11 + $0x1f8] sm:$0xff]
    %v601 = vld [vmem:[#allocation11 + $0x200] sm:$0xff]
    %v602 = vld [vmem:[#allocation11 + $0x208] sm:$0xff]
    %v603 = vld [vmem:[#allocation11 + $0x210] sm:$0xff]
    %v604 = vld [vmem:[#allocation11 + $0x218] sm:$0xff]
    %v605 = vld [vmem:[#allocation11 + $0x220] sm:$0xff]
    %v606 = vld [vmem:[#allocation11 + $0x228] sm:$0xff]
    %v607 = vld [vmem:[#allocation11 + $0x230] sm:$0xff]
    %v608 = vld [vmem:[#allocation11 + $0x238] sm:$0xff]
    %v609 = vld [vmem:[#allocation11 + $0x240] sm:$0xff]
    %v610 = vld [vmem:[#allocation11 + $0x248] sm:$0xff]
    %v611 = vld [vmem:[#allocation11 + $0x250] sm:$0xff]
    %v612 = vld [vmem:[#allocation11 + $0x258] sm:$0xff]
    %v613 = vld [vmem:[#allocation11 + $0x260] sm:$0xff]
    %v614 = vld [vmem:[#allocation11 + $0x268] sm:$0xff]
    %v615 = vld [vmem:[#allocation11 + $0x270] sm:$0xff]
    %v616 = vld [vmem:[#allocation11 + $0x278] sm:$0xff]
    %v617 = vld [vmem:[#allocation11 + $0x280] sm:$0xff]
    %v618 = vld [vmem:[#allocation11 + $0x288] sm:$0xff]
    %v619 = vld [vmem:[#allocation11 + $0x290] sm:$0xff]
    %v620 = vld [vmem:[#allocation11 + $0x298] sm:$0xff]
    %v621 = vld [vmem:[#allocation11 + $0x2a0] sm:$0xff]
    %v622 = vld [vmem:[#allocation11 + $0x2a8] sm:$0xff]
    %v623 = vld [vmem:[#allocation11 + $0x2b0] sm:$0xff]
    %v624 = vld [vmem:[#allocation11 + $0x2b8] sm:$0xff]
    %v625 = vld [vmem:[#allocation11 + $0x2c0] sm:$0xff]
    %v626 = vld [vmem:[#allocation11 + $0x2c8] sm:$0xff]
    %v627 = vld [vmem:[#allocation11 + $0x2d0] sm:$0xff]
    %v628 = vld [vmem:[#allocation11 + $0x2d8] sm:$0xff]
    %v629 = vld [vmem:[#allocation11 + $0x2e0] sm:$0xff]
    %v630 = vld [vmem:[#allocation11 + $0x2e8] sm:$0xff]
    %v631 = vld [vmem:[#allocation11 + $0x2f0] sm:$0xff]
    %v632 = vld [vmem:[#allocation11 + $0x2f8] sm:$0xff]
    %v633 = vld [vmem:[#allocation11 + $0x300] sm:$0xff]
    %v634 = vld [vmem:[#allocation11 + $0x308] sm:$0xff]
    %v635 = vld [vmem:[#allocation11 + $0x310] sm:$0xff]
    %v636 = vld [vmem:[#allocation11 + $0x318] sm:$0xff]
    %v637 = vld [vmem:[#allocation11 + $0x320] sm:$0xff]
    %v638 = vld [vmem:[#allocation11 + $0x328] sm:$0xff]
    %v639 = vld [vmem:[#allocation11 + $0x330] sm:$0xff]
    %v640 = vld [vmem:[#allocation11 + $0x338] sm:$0xff]
    %v641 = vld [vmem:[#allocation11 + $0x340] sm:$0xff]
    %v642 = vld [vmem:[#allocation11 + $0x348] sm:$0xff]
    %v643 = vld [vmem:[#allocation11 + $0x350] sm:$0xff]
    %v644 = vld [vmem:[#allocation11 + $0x358] sm:$0xff]
    %v645 = vld [vmem:[#allocation11 + $0x360] sm:$0xff]
    %v646 = vld [vmem:[#allocation11 + $0x368] sm:$0xff]
    %v647 = vld [vmem:[#allocation11 + $0x370] sm:$0xff]
    %v648 = vld [vmem:[#allocation11 + $0x378] sm:$0xff]
    %v649 = vld [vmem:[#allocation11 + $0x380] sm:$0xff]
    %v650 = vld [vmem:[#allocation11 + $0x388] sm:$0xff]
    %v651 = vld [vmem:[#allocation11 + $0x390] sm:$0xff]
    %v652 = vld [vmem:[#allocation11 + $0x398] sm:$0xff]
    %v653 = vld [vmem:[#allocation11 + $0x3a0] sm:$0xff]
    %v654 = vld [vmem:[#allocation11 + $0x3a8] sm:$0xff]
    %v655 = vld [vmem:[#allocation11 + $0x3b0] sm:$0xff]
    %v656 = vld [vmem:[#allocation11 + $0x3b8] sm:$0xff]
    %v657 = vld [vmem:[#allocation11 + $0x3c0] sm:$0xff]
    %v658 = vld [vmem:[#allocation11 + $0x3c8] sm:$0xff]
    %v659 = vld [vmem:[#allocation11 + $0x3d0] sm:$0xff]
    %v660 = vld [vmem:[#allocation11 + $0x3d8] sm:$0xff]
    %v661 = vld [vmem:[#allocation11 + $0x3e0] sm:$0xff]
    %v662 = vld [vmem:[#allocation11 + $0x3e8] sm:$0xff]
    %v663 = vld [vmem:[#allocation11 + $0x3f0] sm:$0xff]
    %v664 = vld [vmem:[#allocation11 + $0x3f8] sm:$0xff]
    %v665 = vld [vmem:[#allocation13] sm:$0x3]
    %v667 = vlaneseq
    %v668 = vshrl.u32 %v667, 7
    %v669 = vsub.s32 0, %v668
    %v670 = vrot.slane %v665, %v669
    %v671 = vlaneseq
    %v672 = vshrl.u32 %v671, 7
    %v673 = vsub.s32 1, %v672
    %v674 = vrot.slane %v665, %v673
    %v805 = vunpack.c.l.b16 %v537
    %v806 = vunpack.c.h.b16 %v537
    %v807 = vunpack.c.l.b16 %v538
    %v808 = vunpack.c.h.b16 %v538
    %v809 = vunpack.c.l.b16 %v539
    %v810 = vunpack.c.h.b16 %v539
    %v811 = vunpack.c.l.b16 %v540
    %v812 = vunpack.c.h.b16 %v540
    %v813 = vunpack.c.l.b16 %v541
    %v814 = vunpack.c.h.b16 %v541
    %v815 = vunpack.c.l.b16 %v542
    %v816 = vunpack.c.h.b16 %v542
    %v817 = vunpack.c.l.b16 %v543
    %v818 = vunpack.c.h.b16 %v543
    %v819 = vunpack.c.l.b16 %v544
    %v820 = vunpack.c.h.b16 %v544
    %v821 = vunpack.c.l.b16 %v545
    %v822 = vunpack.c.h.b16 %v545
    %v823 = vunpack.c.l.b16 %v546
    %v824 = vunpack.c.h.b16 %v546
    %v825 = vunpack.c.l.b16 %v547
    %v826 = vunpack.c.h.b16 %v547
    %v827 = vunpack.c.l.b16 %v548
    %v828 = vunpack.c.h.b16 %v548
    %v829 = vunpack.c.l.b16 %v549
    %v830 = vunpack.c.h.b16 %v549
    %v831 = vunpack.c.l.b16 %v550
    %v832 = vunpack.c.h.b16 %v550
    %v833 = vunpack.c.l.b16 %v551
    %v834 = vunpack.c.h.b16 %v551
    %v835 = vunpack.c.l.b16 %v552
    %v836 = vunpack.c.h.b16 %v552
    %v837 = vunpack.c.l.b16 %v553
    %v838 = vunpack.c.h.b16 %v553
    %v839 = vunpack.c.l.b16 %v554
    %v840 = vunpack.c.h.b16 %v554
    %v841 = vunpack.c.l.b16 %v555
    %v842 = vunpack.c.h.b16 %v555
    %v843 = vunpack.c.l.b16 %v556
    %v844 = vunpack.c.h.b16 %v556
    %v845 = vunpack.c.l.b16 %v557
    %v846 = vunpack.c.h.b16 %v557
    %v847 = vunpack.c.l.b16 %v558
    %v848 = vunpack.c.h.b16 %v558
    %v849 = vunpack.c.l.b16 %v559
    %v850 = vunpack.c.h.b16 %v559
    %v851 = vunpack.c.l.b16 %v560
    %v852 = vunpack.c.h.b16 %v560
    %v853 = vunpack.c.l.b16 %v561
    %v854 = vunpack.c.h.b16 %v561
    %v855 = vunpack.c.l.b16 %v562
    %v856 = vunpack.c.h.b16 %v562
    %v857 = vunpack.c.l.b16 %v563
    %v858 = vunpack.c.h.b16 %v563
    %v859 = vunpack.c.l.b16 %v564
    %v860 = vunpack.c.h.b16 %v564
    %v861 = vunpack.c.l.b16 %v565
    %v862 = vunpack.c.h.b16 %v565
    %v863 = vunpack.c.l.b16 %v566
    %v864 = vunpack.c.h.b16 %v566
    %v865 = vunpack.c.l.b16 %v567
    %v866 = vunpack.c.h.b16 %v567
    %v867 = vunpack.c.l.b16 %v568
    %v868 = vunpack.c.h.b16 %v568
    %v869 = vunpack.c.l.b16 %v569
    %v870 = vunpack.c.h.b16 %v569
    %v871 = vunpack.c.l.b16 %v570
    %v872 = vunpack.c.h.b16 %v570
    %v873 = vunpack.c.l.b16 %v571
    %v874 = vunpack.c.h.b16 %v571
    %v875 = vunpack.c.l.b16 %v572
    %v876 = vunpack.c.h.b16 %v572
    %v877 = vunpack.c.l.b16 %v573
    %v878 = vunpack.c.h.b16 %v573
    %v879 = vunpack.c.l.b16 %v574
    %v880 = vunpack.c.h.b16 %v574
    %v881 = vunpack.c.l.b16 %v575
    %v882 = vunpack.c.h.b16 %v575
    %v883 = vunpack.c.l.b16 %v576
    %v884 = vunpack.c.h.b16 %v576
    %v885 = vunpack.c.l.b16 %v577
    %v886 = vunpack.c.h.b16 %v577
    %v887 = vunpack.c.l.b16 %v578
    %v888 = vunpack.c.h.b16 %v578
    %v889 = vunpack.c.l.b16 %v579
    %v890 = vunpack.c.h.b16 %v579
    %v891 = vunpack.c.l.b16 %v580
    %v892 = vunpack.c.h.b16 %v580
    %v893 = vunpack.c.l.b16 %v581
    %v894 = vunpack.c.h.b16 %v581
    %v895 = vunpack.c.l.b16 %v582
    %v896 = vunpack.c.h.b16 %v582
    %v897 = vunpack.c.l.b16 %v583
    %v898 = vunpack.c.h.b16 %v583
    %v899 = vunpack.c.l.b16 %v584
    %v900 = vunpack.c.h.b16 %v584
    %v901 = vunpack.c.l.b16 %v585
    %v902 = vunpack.c.h.b16 %v585
    %v903 = vunpack.c.l.b16 %v586
    %v904 = vunpack.c.h.b16 %v586
    %v905 = vunpack.c.l.b16 %v587
    %v906 = vunpack.c.h.b16 %v587
    %v907 = vunpack.c.l.b16 %v588
    %v908 = vunpack.c.h.b16 %v588
    %v909 = vunpack.c.l.b16 %v589
    %v910 = vunpack.c.h.b16 %v589
    %v911 = vunpack.c.l.b16 %v590
    %v912 = vunpack.c.h.b16 %v590
    %v913 = vunpack.c.l.b16 %v591
    %v914 = vunpack.c.h.b16 %v591
    %v915 = vunpack.c.l.b16 %v592
    %v916 = vunpack.c.h.b16 %v592
    %v917 = vunpack.c.l.b16 %v593
    %v918 = vunpack.c.h.b16 %v593
    %v919 = vunpack.c.l.b16 %v594
    %v920 = vunpack.c.h.b16 %v594
    %v921 = vunpack.c.l.b16 %v595
    %v922 = vunpack.c.h.b16 %v595
    %v923 = vunpack.c.l.b16 %v596
    %v924 = vunpack.c.h.b16 %v596
    %v925 = vunpack.c.l.b16 %v597
    %v926 = vunpack.c.h.b16 %v597
    %v927 = vunpack.c.l.b16 %v598
    %v928 = vunpack.c.h.b16 %v598
    %v929 = vunpack.c.l.b16 %v599
    %v930 = vunpack.c.h.b16 %v599
    %v931 = vunpack.c.l.b16 %v600
    %v932 = vunpack.c.h.b16 %v600
    %v933 = vunpack.c.l.b16 %v601
    %v934 = vunpack.c.h.b16 %v601
    %v935 = vunpack.c.l.b16 %v602
    %v936 = vunpack.c.h.b16 %v602
    %v937 = vunpack.c.l.b16 %v603
    %v938 = vunpack.c.h.b16 %v603
    %v939 = vunpack.c.l.b16 %v604
    %v940 = vunpack.c.h.b16 %v604
    %v941 = vunpack.c.l.b16 %v605
    %v942 = vunpack.c.h.b16 %v605
    %v943 = vunpack.c.l.b16 %v606
    %v944 = vunpack.c.h.b16 %v606
    %v945 = vunpack.c.l.b16 %v607
    %v946 = vunpack.c.h.b16 %v607
    %v947 = vunpack.c.l.b16 %v608
    %v948 = vunpack.c.h.b16 %v608
    %v949 = vunpack.c.l.b16 %v609
    %v950 = vunpack.c.h.b16 %v609
    %v951 = vunpack.c.l.b16 %v610
    %v952 = vunpack.c.h.b16 %v610
    %v953 = vunpack.c.l.b16 %v611
    %v954 = vunpack.c.h.b16 %v611
    %v955 = vunpack.c.l.b16 %v612
    %v956 = vunpack.c.h.b16 %v612
    %v957 = vunpack.c.l.b16 %v613
    %v958 = vunpack.c.h.b16 %v613
    %v959 = vunpack.c.l.b16 %v614
    %v960 = vunpack.c.h.b16 %v614
    %v961 = vunpack.c.l.b16 %v615
    %v962 = vunpack.c.h.b16 %v615
    %v963 = vunpack.c.l.b16 %v616
    %v964 = vunpack.c.h.b16 %v616
    %v965 = vunpack.c.l.b16 %v617
    %v966 = vunpack.c.h.b16 %v617
    %v967 = vunpack.c.l.b16 %v618
    %v968 = vunpack.c.h.b16 %v618
    %v969 = vunpack.c.l.b16 %v619
    %v970 = vunpack.c.h.b16 %v619
    %v971 = vunpack.c.l.b16 %v620
    %v972 = vunpack.c.h.b16 %v620
    %v973 = vunpack.c.l.b16 %v621
    %v974 = vunpack.c.h.b16 %v621
    %v975 = vunpack.c.l.b16 %v622
    %v976 = vunpack.c.h.b16 %v622
    %v977 = vunpack.c.l.b16 %v623
    %v978 = vunpack.c.h.b16 %v623
    %v979 = vunpack.c.l.b16 %v624
    %v980 = vunpack.c.h.b16 %v624
    %v981 = vunpack.c.l.b16 %v625
    %v982 = vunpack.c.h.b16 %v625
    %v983 = vunpack.c.l.b16 %v626
    %v984 = vunpack.c.h.b16 %v626
    %v985 = vunpack.c.l.b16 %v627
    %v986 = vunpack.c.h.b16 %v627
    %v987 = vunpack.c.l.b16 %v628
    %v988 = vunpack.c.h.b16 %v628
    %v989 = vunpack.c.l.b16 %v629
    %v990 = vunpack.c.h.b16 %v629
    %v991 = vunpack.c.l.b16 %v630
    %v992 = vunpack.c.h.b16 %v630
    %v993 = vunpack.c.l.b16 %v631
    %v994 = vunpack.c.h.b16 %v631
    %v995 = vunpack.c.l.b16 %v632
    %v996 = vunpack.c.h.b16 %v632
    %v997 = vunpack.c.l.b16 %v633
    %v998 = vunpack.c.h.b16 %v633
    %v999 = vunpack.c.l.b16 %v634
    %v1000 = vunpack.c.h.b16 %v634
    %v1001 = vunpack.c.l.b16 %v635
    %v1002 = vunpack.c.h.b16 %v635
    %v1003 = vunpack.c.l.b16 %v636
    %v1004 = vunpack.c.h.b16 %v636
    %v1005 = vunpack.c.l.b16 %v637
    %v1006 = vunpack.c.h.b16 %v637
    %v1007 = vunpack.c.l.b16 %v638
    %v1008 = vunpack.c.h.b16 %v638
    %v1009 = vunpack.c.l.b16 %v639
    %v1010 = vunpack.c.h.b16 %v639
    %v1011 = vunpack.c.l.b16 %v640
    %v1012 = vunpack.c.h.b16 %v640
    %v1013 = vunpack.c.l.b16 %v641
    %v1014 = vunpack.c.h.b16 %v641
    %v1015 = vunpack.c.l.b16 %v642
    %v1016 = vunpack.c.h.b16 %v642
    %v1017 = vunpack.c.l.b16 %v643
    %v1018 = vunpack.c.h.b16 %v643
    %v1019 = vunpack.c.l.b16 %v644
    %v1020 = vunpack.c.h.b16 %v644
    %v1021 = vunpack.c.l.b16 %v645
    %v1022 = vunpack.c.h.b16 %v645
    %v1023 = vunpack.c.l.b16 %v646
    %v1024 = vunpack.c.h.b16 %v646
    %v1025 = vunpack.c.l.b16 %v647
    %v1026 = vunpack.c.h.b16 %v647
    %v1027 = vunpack.c.l.b16 %v648
    %v1028 = vunpack.c.h.b16 %v648
    %v1029 = vunpack.c.l.b16 %v649
    %v1030 = vunpack.c.h.b16 %v649
    %v1031 = vunpack.c.l.b16 %v650
    %v1032 = vunpack.c.h.b16 %v650
    %v1033 = vunpack.c.l.b16 %v651
    %v1034 = vunpack.c.h.b16 %v651
    %v1035 = vunpack.c.l.b16 %v652
    %v1036 = vunpack.c.h.b16 %v652
    %v1037 = vunpack.c.l.b16 %v653
    %v1038 = vunpack.c.h.b16 %v653
    %v1039 = vunpack.c.l.b16 %v654
    %v1040 = vunpack.c.h.b16 %v654
    %v1041 = vunpack.c.l.b16 %v655
    %v1042 = vunpack.c.h.b16 %v655
    %v1043 = vunpack.c.l.b16 %v656
    %v1044 = vunpack.c.h.b16 %v656
    %v1045 = vunpack.c.l.b16 %v657
    %v1046 = vunpack.c.h.b16 %v657
    %v1047 = vunpack.c.l.b16 %v658
    %v1048 = vunpack.c.h.b16 %v658
    %v1049 = vunpack.c.l.b16 %v659
    %v1050 = vunpack.c.h.b16 %v659
    %v1051 = vunpack.c.l.b16 %v660
    %v1052 = vunpack.c.h.b16 %v660
    %v1053 = vunpack.c.l.b16 %v661
    %v1054 = vunpack.c.h.b16 %v661
    %v1055 = vunpack.c.l.b16 %v662
    %v1056 = vunpack.c.h.b16 %v662
    %v1057 = vunpack.c.l.b16 %v663
    %v1058 = vunpack.c.h.b16 %v663
    %v1059 = vunpack.c.l.b16 %v664
    %v1060 = vunpack.c.h.b16 %v664
    %v1061 = vpack.c.b16 %v807, %v805
    %v1062 = vpack.c.b16 %v808, %v806
    %v1063 = vpack.c.b16 %v811, %v809
    %v1064 = vpack.c.b16 %v812, %v810
    %v1065 = vpack.c.b16 %v815, %v813
    %v1066 = vpack.c.b16 %v816, %v814
    %v1067 = vpack.c.b16 %v819, %v817
    %v1068 = vpack.c.b16 %v820, %v818
    %v1069 = vpack.c.b16 %v823, %v821
    %v1070 = vpack.c.b16 %v824, %v822
    %v1071 = vpack.c.b16 %v827, %v825
    %v1072 = vpack.c.b16 %v828, %v826
    %v1073 = vpack.c.b16 %v831, %v829
    %v1074 = vpack.c.b16 %v832, %v830
    %v1075 = vpack.c.b16 %v835, %v833
    %v1076 = vpack.c.b16 %v836, %v834
    %v1077 = vpack.c.b16 %v839, %v837
    %v1078 = vpack.c.b16 %v840, %v838
    %v1079 = vpack.c.b16 %v843, %v841
    %v1080 = vpack.c.b16 %v844, %v842
    %v1081 = vpack.c.b16 %v847, %v845
    %v1082 = vpack.c.b16 %v848, %v846
    %v1083 = vpack.c.b16 %v851, %v849
    %v1084 = vpack.c.b16 %v852, %v850
    %v1085 = vpack.c.b16 %v855, %v853
    %v1086 = vpack.c.b16 %v856, %v854
    %v1087 = vpack.c.b16 %v859, %v857
    %v1088 = vpack.c.b16 %v860, %v858
    %v1089 = vpack.c.b16 %v863, %v861
    %v1090 = vpack.c.b16 %v864, %v862
    %v1091 = vpack.c.b16 %v867, %v865
    %v1092 = vpack.c.b16 %v868, %v866
    %v1093 = vpack.c.b16 %v871, %v869
    %v1094 = vpack.c.b16 %v872, %v870
    %v1095 = vpack.c.b16 %v875, %v873
    %v1096 = vpack.c.b16 %v876, %v874
    %v1097 = vpack.c.b16 %v879, %v877
    %v1098 = vpack.c.b16 %v880, %v878
    %v1099 = vpack.c.b16 %v883, %v881
    %v1100 = vpack.c.b16 %v884, %v882
    %v1101 = vpack.c.b16 %v887, %v885
    %v1102 = vpack.c.b16 %v888, %v886
    %v1103 = vpack.c.b16 %v891, %v889
    %v1104 = vpack.c.b16 %v892, %v890
    %v1105 = vpack.c.b16 %v895, %v893
    %v1106 = vpack.c.b16 %v896, %v894
    %v1107 = vpack.c.b16 %v899, %v897
    %v1108 = vpack.c.b16 %v900, %v898
    %v1109 = vpack.c.b16 %v903, %v901
    %v1110 = vpack.c.b16 %v904, %v902
    %v1111 = vpack.c.b16 %v907, %v905
    %v1112 = vpack.c.b16 %v908, %v906
    %v1113 = vpack.c.b16 %v911, %v909
    %v1114 = vpack.c.b16 %v912, %v910
    %v1115 = vpack.c.b16 %v915, %v913
    %v1116 = vpack.c.b16 %v916, %v914
    %v1117 = vpack.c.b16 %v919, %v917
    %v1118 = vpack.c.b16 %v920, %v918
    %v1119 = vpack.c.b16 %v923, %v921
    %v1120 = vpack.c.b16 %v924, %v922
    %v1121 = vpack.c.b16 %v927, %v925
    %v1122 = vpack.c.b16 %v928, %v926
    %v1123 = vpack.c.b16 %v931, %v929
    %v1124 = vpack.c.b16 %v932, %v930
    %v1125 = vpack.c.b16 %v935, %v933
    %v1126 = vpack.c.b16 %v936, %v934
    %v1127 = vpack.c.b16 %v939, %v937
    %v1128 = vpack.c.b16 %v940, %v938
    %v1129 = vpack.c.b16 %v943, %v941
    %v1130 = vpack.c.b16 %v944, %v942
    %v1131 = vpack.c.b16 %v947, %v945
    %v1132 = vpack.c.b16 %v948, %v946
    %v1133 = vpack.c.b16 %v951, %v949
    %v1134 = vpack.c.b16 %v952, %v950
    %v1135 = vpack.c.b16 %v955, %v953
    %v1136 = vpack.c.b16 %v956, %v954
    %v1137 = vpack.c.b16 %v959, %v957
    %v1138 = vpack.c.b16 %v960, %v958
    %v1139 = vpack.c.b16 %v963, %v961
    %v1140 = vpack.c.b16 %v964, %v962
    %v1141 = vpack.c.b16 %v967, %v965
    %v1142 = vpack.c.b16 %v968, %v966
    %v1143 = vpack.c.b16 %v971, %v969
    %v1144 = vpack.c.b16 %v972, %v970
    %v1145 = vpack.c.b16 %v975, %v973
    %v1146 = vpack.c.b16 %v976, %v974
    %v1147 = vpack.c.b16 %v979, %v977
    %v1148 = vpack.c.b16 %v980, %v978
    %v1149 = vpack.c.b16 %v983, %v981
    %v1150 = vpack.c.b16 %v984, %v982
    %v1151 = vpack.c.b16 %v987, %v985
    %v1152 = vpack.c.b16 %v988, %v986
    %v1153 = vpack.c.b16 %v991, %v989
    %v1154 = vpack.c.b16 %v992, %v990
    %v1155 = vpack.c.b16 %v995, %v993
    %v1156 = vpack.c.b16 %v996, %v994
    %v1157 = vpack.c.b16 %v999, %v997
    %v1158 = vpack.c.b16 %v1000, %v998
    %v1159 = vpack.c.b16 %v1003, %v1001
    %v1160 = vpack.c.b16 %v1004, %v1002
    %v1161 = vpack.c.b16 %v1007, %v1005
    %v1162 = vpack.c.b16 %v1008, %v1006
    %v1163 = vpack.c.b16 %v1011, %v1009
    %v1164 = vpack.c.b16 %v1012, %v1010
    %v1165 = vpack.c.b16 %v1015, %v1013
    %v1166 = vpack.c.b16 %v1016, %v1014
    %v1167 = vpack.c.b16 %v1019, %v1017
    %v1168 = vpack.c.b16 %v1020, %v1018
    %v1169 = vpack.c.b16 %v1023, %v1021
    %v1170 = vpack.c.b16 %v1024, %v1022
    %v1171 = vpack.c.b16 %v1027, %v1025
    %v1172 = vpack.c.b16 %v1028, %v1026
    %v1173 = vpack.c.b16 %v1031, %v1029
    %v1174 = vpack.c.b16 %v1032, %v1030
    %v1175 = vpack.c.b16 %v1035, %v1033
    %v1176 = vpack.c.b16 %v1036, %v1034
    %v1177 = vpack.c.b16 %v1039, %v1037
    %v1178 = vpack.c.b16 %v1040, %v1038
    %v1179 = vpack.c.b16 %v1043, %v1041
    %v1180 = vpack.c.b16 %v1044, %v1042
    %v1181 = vpack.c.b16 %v1047, %v1045
    %v1182 = vpack.c.b16 %v1048, %v1046
    %v1183 = vpack.c.b16 %v1051, %v1049
    %v1184 = vpack.c.b16 %v1052, %v1050
    %v1185 = vpack.c.b16 %v1055, %v1053
    %v1186 = vpack.c.b16 %v1056, %v1054
    %v1187 = vpack.c.b16 %v1059, %v1057
    %v1188 = vpack.c.b16 %v1060, %v1058
    %1317 = vmatprep.subr.bf16.mxu0 %v1062
    %1318 = vmatpush1.bf16.msra.mxu0 %v1061
    %1319 = vmatprep.subr.bf16.mxu0 %v1064
    %1320 = vmatpush1.bf16.msra.mxu0 %v1063
    %1321 = vmatprep.subr.bf16.mxu0 %v1066
    %1322 = vmatpush1.bf16.msra.mxu0 %v1065
    %1323 = vmatprep.subr.bf16.mxu0 %v1068
    %1324 = vmatpush1.bf16.msra.mxu0 %v1067
    %1325 = vmatprep.subr.bf16.mxu0 %v1070
    %1326 = vmatpush1.bf16.msra.mxu0 %v1069
    %1327 = vmatprep.subr.bf16.mxu0 %v1072
    %1328 = vmatpush1.bf16.msra.mxu0 %v1071
    %1329 = vmatprep.subr.bf16.mxu0 %v1074
    %1330 = vmatpush1.bf16.msra.mxu0 %v1073
    %1331 = vmatprep.subr.bf16.mxu0 %v1076
    %1332 = vmatpush1.bf16.msra.mxu0 %v1075
    %1333 = vmatprep.subr.bf16.mxu0 %v1078
    %1334 = vmatpush1.bf16.msra.mxu0 %v1077
    %1335 = vmatprep.subr.bf16.mxu0 %v1080
    %1336 = vmatpush1.bf16.msra.mxu0 %v1079
    %1337 = vmatprep.subr.bf16.mxu0 %v1082
    %1338 = vmatpush1.bf16.msra.mxu0 %v1081
    %1339 = vmatprep.subr.bf16.mxu0 %v1084
    %1340 = vmatpush1.bf16.msra.mxu0 %v1083
    %1341 = vmatprep.subr.bf16.mxu0 %v1086
    %1342 = vmatpush1.bf16.msra.mxu0 %v1085
    %1343 = vmatprep.subr.bf16.mxu0 %v1088
    %1344 = vmatpush1.bf16.msra.mxu0 %v1087
    %1345 = vmatprep.subr.bf16.mxu0 %v1090
    %1346 = vmatpush1.bf16.msra.mxu0 %v1089
    %1347 = vmatprep.subr.bf16.mxu0 %v1092
    %1348 = vmatpush1.bf16.msra.mxu0 %v1091
    %1349 = vmatprep.mubr.bf16.mxu0 %v530
    %1350 = vmatmul.mubr.bf16.gmra.mrb[0].mxu0 %v529
    %v1351 = vpop.f32.mrb[0].mxu0
    %v1352 = vadd.f32 %v670, %v1351
    %v1353 = vpop.f32.mrb[0].mxu0
    %v1354 = vadd.f32 %v674, %v1353
    %v1355 = vpop.f32.mrb[0].mxu0
    %v1356 = vpop.f32.mrb[0].mxu0
    %1357 = vdwg.mxu0
    %1358 = vmatprep.subr.bf16.mxu0 %v1094
    %1359 = vmatpush1.bf16.msra.mxu0 %v1093
    %1360 = vmatprep.subr.bf16.mxu0 %v1096
    %1361 = vmatpush1.bf16.msra.mxu0 %v1095
    %1362 = vmatprep.subr.bf16.mxu0 %v1098
    %1363 = vmatpush1.bf16.msra.mxu0 %v1097
    %1364 = vmatprep.subr.bf16.mxu0 %v1100
    %1365 = vmatpush1.bf16.msra.mxu0 %v1099
    %1366 = vmatprep.subr.bf16.mxu0 %v1102
    %1367 = vmatpush1.bf16.msra.mxu0 %v1101
    %1368 = vmatprep.subr.bf16.mxu0 %v1104
    %1369 = vmatpush1.bf16.msra.mxu0 %v1103
    %1370 = vmatprep.subr.bf16.mxu0 %v1106
    %1371 = vmatpush1.bf16.msra.mxu0 %v1105
    %1372 = vmatprep.subr.bf16.mxu0 %v1108
    %1373 = vmatpush1.bf16.msra.mxu0 %v1107
    %1374 = vmatprep.subr.bf16.mxu0 %v1110
    %1375 = vmatpush1.bf16.msra.mxu0 %v1109
    %1376 = vmatprep.subr.bf16.mxu0 %v1112
    %1377 = vmatpush1.bf16.msra.mxu0 %v1111
    %1378 = vmatprep.subr.bf16.mxu0 %v1114
    %1379 = vmatpush1.bf16.msra.mxu0 %v1113
    %1380 = vmatprep.subr.bf16.mxu0 %v1116
    %1381 = vmatpush1.bf16.msra.mxu0 %v1115
    %1382 = vmatprep.subr.bf16.mxu0 %v1118
    %1383 = vmatpush1.bf16.msra.mxu0 %v1117
    %1384 = vmatprep.subr.bf16.mxu0 %v1120
    %1385 = vmatpush1.bf16.msra.mxu0 %v1119
    %1386 = vmatprep.subr.bf16.mxu0 %v1122
    %1387 = vmatpush1.bf16.msra.mxu0 %v1121
    %1388 = vmatprep.subr.bf16.mxu0 %v1124
    %1389 = vmatpush1.bf16.msra.mxu0 %v1123
    %1390 = vmatprep.mubr.bf16.mxu0 %v532
    %1391 = vmatmul.mubr.bf16.gmra.mrb[0].mxu0 %v531
    %v1392 = vpop.f32.mrb[0].mxu0
    %v1393 = vadd.f32 %v1352, %v1392
    %v1394 = vpop.f32.mrb[0].mxu0
    %v1395 = vadd.f32 %v1354, %v1394
    %v1396 = vpop.f32.mrb[0].mxu0
    %v1397 = vpop.f32.mrb[0].mxu0
    %1398 = vdwg.mxu0
    %1399 = vmatprep.subr.bf16.mxu0 %v1126
    %1400 = vmatpush1.bf16.msra.mxu0 %v1125
    %1401 = vmatprep.subr.bf16.mxu0 %v1128
    %1402 = vmatpush1.bf16.msra.mxu0 %v1127
    %1403 = vmatprep.subr.bf16.mxu0 %v1130
    %1404 = vmatpush1.bf16.msra.mxu0 %v1129
    %1405 = vmatprep.subr.bf16.mxu0 %v1132
    %1406 = vmatpush1.bf16.msra.mxu0 %v1131
    %1407 = vmatprep.subr.bf16.mxu0 %v1134
    %1408 = vmatpush1.bf16.msra.mxu0 %v1133
    %1409 = vmatprep.subr.bf16.mxu0 %v1136
    %1410 = vmatpush1.bf16.msra.mxu0 %v1135
    %1411 = vmatprep.subr.bf16.mxu0 %v1138
    %1412 = vmatpush1.bf16.msra.mxu0 %v1137
    %1413 = vmatprep.subr.bf16.mxu0 %v1140
    %1414 = vmatpush1.bf16.msra.mxu0 %v1139
    %1415 = vmatprep.subr.bf16.mxu0 %v1142
    %1416 = vmatpush1.bf16.msra.mxu0 %v1141
    %1417 = vmatprep.subr.bf16.mxu0 %v1144
    %1418 = vmatpush1.bf16.msra.mxu0 %v1143
    %1419 = vmatprep.subr.bf16.mxu0 %v1146
    %1420 = vmatpush1.bf16.msra.mxu0 %v1145
    %1421 = vmatprep.subr.bf16.mxu0 %v1148
    %1422 = vmatpush1.bf16.msra.mxu0 %v1147
    %1423 = vmatprep.subr.bf16.mxu0 %v1150
    %1424 = vmatpush1.bf16.msra.mxu0 %v1149
    %1425 = vmatprep.subr.bf16.mxu0 %v1152
    %1426 = vmatpush1.bf16.msra.mxu0 %v1151
    %1427 = vmatprep.subr.bf16.mxu0 %v1154
    %1428 = vmatpush1.bf16.msra.mxu0 %v1153
    %1429 = vmatprep.subr.bf16.mxu0 %v1156
    %1430 = vmatpush1.bf16.msra.mxu0 %v1155
    %1431 = vmatprep.mubr.bf16.mxu0 %v534
    %1432 = vmatmul.mubr.bf16.gmra.mrb[0].mxu0 %v533
    %v1433 = vpop.f32.mrb[0].mxu0
    %v1434 = vadd.f32 %v1393, %v1433
    %v1435 = vpop.f32.mrb[0].mxu0
    %v1436 = vadd.f32 %v1395, %v1435
    %v1437 = vpop.f32.mrb[0].mxu0
    %v1438 = vpop.f32.mrb[0].mxu0
    %1439 = vdwg.mxu0
    %1440 = vmatprep.subr.bf16.mxu0 %v1158
    %1441 = vmatpush1.bf16.msra.mxu0 %v1157
    %1442 = vmatprep.subr.bf16.mxu0 %v1160
    %1443 = vmatpush1.bf16.msra.mxu0 %v1159
    %1444 = vmatprep.subr.bf16.mxu0 %v1162
    %1445 = vmatpush1.bf16.msra.mxu0 %v1161
    %1446 = vmatprep.subr.bf16.mxu0 %v1164
    %1447 = vmatpush1.bf16.msra.mxu0 %v1163
    %1448 = vmatprep.subr.bf16.mxu0 %v1166
    %1449 = vmatpush1.bf16.msra.mxu0 %v1165
    %1450 = vmatprep.subr.bf16.mxu0 %v1168
    %1451 = vmatpush1.bf16.msra.mxu0 %v1167
    %1452 = vmatprep.subr.bf16.mxu0 %v1170
    %1453 = vmatpush1.bf16.msra.mxu0 %v1169
    %1454 = vmatprep.subr.bf16.mxu0 %v1172
    %1455 = vmatpush1.bf16.msra.mxu0 %v1171
    %1456 = vmatprep.subr.bf16.mxu0 %v1174
    %1457 = vmatpush1.bf16.msra.mxu0 %v1173
    %1458 = vmatprep.subr.bf16.mxu0 %v1176
    %1459 = vmatpush1.bf16.msra.mxu0 %v1175
    %1460 = vmatprep.subr.bf16.mxu0 %v1178
    %1461 = vmatpush1.bf16.msra.mxu0 %v1177
    %1462 = vmatprep.subr.bf16.mxu0 %v1180
    %1463 = vmatpush1.bf16.msra.mxu0 %v1179
    %1464 = vmatprep.subr.bf16.mxu0 %v1182
    %1465 = vmatpush1.bf16.msra.mxu0 %v1181
    %1466 = vmatprep.subr.bf16.mxu0 %v1184
    %1467 = vmatpush1.bf16.msra.mxu0 %v1183
    %1468 = vmatprep.subr.bf16.mxu0 %v1186
    %1469 = vmatpush1.bf16.msra.mxu0 %v1185
    %1470 = vmatprep.subr.bf16.mxu0 %v1188
    %1471 = vmatpush1.bf16.msra.mxu0 %v1187
    %1472 = vmatprep.mubr.bf16.mxu0 %v536
    %1473 = vmatmul.mubr.bf16.gmra.mrb[0].mxu0 %v535
    %v1474 = vpop.f32.mrb[0].mxu0
    %v1475 = vadd.f32 %v1434, %v1474
    %v1476 = vpop.f32.mrb[0].mxu0
    %v1477 = vadd.f32 %v1436, %v1476
    %v1478 = vpop.f32.mrb[0].mxu0
    %v1479 = vpop.f32.mrb[0].mxu0
    %1480 = vdwg.mxu0
    %v1481 = vmax.f32 %v1475, 0.0
    %v1482 = vmax.f32 %v1477, 0.0
    %v1483 = vpack.c.bf16 %v1481, %v1481
    %v1484 = vpack.c.bf16 %v1482, %v1482
    %v1485 = vld [vmem:[#allocation14] sm:$0xf]
    %v1486 = vld [vmem:[#allocation14 + $0x4] sm:$0xf]
    %v1487 = vld [vmem:[#allocation14 + $0x8] sm:$0xf]
    %v1488 = vld [vmem:[#allocation14 + $0xc] sm:$0xf]
    %v1489 = vld [vmem:[#allocation14 + $0x10] sm:$0xf]
    %v1490 = vld [vmem:[#allocation14 + $0x14] sm:$0xf]
    %v1491 = vld [vmem:[#allocation14 + $0x18] sm:$0xf]
    %v1492 = vld [vmem:[#allocation14 + $0x1c] sm:$0xf]
    %v1493 = vld [vmem:[#allocation14 + $0x20] sm:$0xf]
    %v1494 = vld [vmem:[#allocation14 + $0x24] sm:$0xf]
    %v1495 = vld [vmem:[#allocation14 + $0x28] sm:$0xf]
    %v1496 = vld [vmem:[#allocation14 + $0x2c] sm:$0xf]
    %v1497 = vld [vmem:[#allocation14 + $0x30] sm:$0xf]
    %v1498 = vld [vmem:[#allocation14 + $0x34] sm:$0xf]
    %v1499 = vld [vmem:[#allocation14 + $0x38] sm:$0xf]
    %v1500 = vld [vmem:[#allocation14 + $0x3c] sm:$0xf]
    %v1501 = vld [vmem:[#allocation14 + $0x40] sm:$0xf]
    %v1502 = vld [vmem:[#allocation14 + $0x44] sm:$0xf]
    %v1503 = vld [vmem:[#allocation14 + $0x48] sm:$0xf]
    %v1504 = vld [vmem:[#allocation14 + $0x4c] sm:$0xf]
    %v1505 = vld [vmem:[#allocation14 + $0x50] sm:$0xf]
    %v1506 = vld [vmem:[#allocation14 + $0x54] sm:$0xf]
    %v1507 = vld [vmem:[#allocation14 + $0x58] sm:$0xf]
    %v1508 = vld [vmem:[#allocation14 + $0x5c] sm:$0xf]
    %v1509 = vld [vmem:[#allocation14 + $0x60] sm:$0xf]
    %v1510 = vld [vmem:[#allocation14 + $0x64] sm:$0xf]
    %v1511 = vld [vmem:[#allocation14 + $0x68] sm:$0xf]
    %v1512 = vld [vmem:[#allocation14 + $0x6c] sm:$0xf]
    %v1513 = vld [vmem:[#allocation14 + $0x70] sm:$0xf]
    %v1514 = vld [vmem:[#allocation14 + $0x74] sm:$0xf]
    %v1515 = vld [vmem:[#allocation14 + $0x78] sm:$0xf]
    %v1516 = vld [vmem:[#allocation14 + $0x7c] sm:$0xf]
    %v1517 = vld [vmem:[#allocation16] sm:$0x1]
    %v1519 = vlaneseq
    %v1520 = vshrl.u32 %v1519, 7
    %v1521 = vsub.s32 0, %v1520
    %v1522 = vrot.slane %v1517, %v1521
    %v1556 = vunpack.c.l.b16 %v1485
    %v1557 = vunpack.c.l.b16 %v1486
    %v1558 = vunpack.c.l.b16 %v1487
    %v1559 = vunpack.c.l.b16 %v1488
    %v1560 = vunpack.c.l.b16 %v1489
    %v1561 = vunpack.c.l.b16 %v1490
    %v1562 = vunpack.c.l.b16 %v1491
    %v1563 = vunpack.c.l.b16 %v1492
    %v1564 = vunpack.c.l.b16 %v1493
    %v1565 = vunpack.c.l.b16 %v1494
    %v1566 = vunpack.c.l.b16 %v1495
    %v1567 = vunpack.c.l.b16 %v1496
    %v1568 = vunpack.c.l.b16 %v1497
    %v1569 = vunpack.c.l.b16 %v1498
    %v1570 = vunpack.c.l.b16 %v1499
    %v1571 = vunpack.c.l.b16 %v1500
    %v1572 = vunpack.c.l.b16 %v1501
    %v1573 = vunpack.c.l.b16 %v1502
    %v1574 = vunpack.c.l.b16 %v1503
    %v1575 = vunpack.c.l.b16 %v1504
    %v1576 = vunpack.c.l.b16 %v1505
    %v1577 = vunpack.c.l.b16 %v1506
    %v1578 = vunpack.c.l.b16 %v1507
    %v1579 = vunpack.c.l.b16 %v1508
    %v1580 = vunpack.c.l.b16 %v1509
    %v1581 = vunpack.c.l.b16 %v1510
    %v1582 = vunpack.c.l.b16 %v1511
    %v1583 = vunpack.c.l.b16 %v1512
    %v1584 = vunpack.c.l.b16 %v1513
    %v1585 = vunpack.c.l.b16 %v1514
    %v1586 = vunpack.c.l.b16 %v1515
    %v1587 = vunpack.c.l.b16 %v1516
    %v1588 = vpack.c.b16 %v1557, %v1556
    %v1589 = vpack.c.b16 %v1559, %v1558
    %v1590 = vpack.c.b16 %v1561, %v1560
    %v1591 = vpack.c.b16 %v1563, %v1562
    %v1592 = vpack.c.b16 %v1565, %v1564
    %v1593 = vpack.c.b16 %v1567, %v1566
    %v1594 = vpack.c.b16 %v1569, %v1568
    %v1595 = vpack.c.b16 %v1571, %v1570
    %v1596 = vpack.c.b16 %v1573, %v1572
    %v1597 = vpack.c.b16 %v1575, %v1574
    %v1598 = vpack.c.b16 %v1577, %v1576
    %v1599 = vpack.c.b16 %v1579, %v1578
    %v1600 = vpack.c.b16 %v1581, %v1580
    %v1601 = vpack.c.b16 %v1583, %v1582
    %v1602 = vpack.c.b16 %v1585, %v1584
    %v1603 = vpack.c.b16 %v1587, %v1586
    %1620 = vmatprep.subr.bf16.mxu0 0
    %1621 = vmatpush1.bf16.msra.mxu0 %v1588
    %1622 = vmatprep.subr.bf16.mxu0 0
    %1623 = vmatpush1.bf16.msra.mxu0 %v1589
    %1624 = vmatprep.subr.bf16.mxu0 0
    %1625 = vmatpush1.bf16.msra.mxu0 %v1590
    %1626 = vmatprep.subr.bf16.mxu0 0
    %1627 = vmatpush1.bf16.msra.mxu0 %v1591
    %1628 = vmatprep.subr.bf16.mxu0 0
    %1629 = vmatpush1.bf16.msra.mxu0 %v1592
    %1630 = vmatprep.subr.bf16.mxu0 0
    %1631 = vmatpush1.bf16.msra.mxu0 %v1593
    %1632 = vmatprep.subr.bf16.mxu0 0
    %1633 = vmatpush1.bf16.msra.mxu0 %v1594
    %1634 = vmatprep.subr.bf16.mxu0 0
    %1635 = vmatpush1.bf16.msra.mxu0 %v1595
    %1636 = vmatprep.subr.bf16.mxu0 0
    %1637 = vmatpush1.bf16.msra.mxu0 %v1596
    %1638 = vmatprep.subr.bf16.mxu0 0
    %1639 = vmatpush1.bf16.msra.mxu0 %v1597
    %1640 = vmatprep.subr.bf16.mxu0 0
    %1641 = vmatpush1.bf16.msra.mxu0 %v1598
    %1642 = vmatprep.subr.bf16.mxu0 0
    %1643 = vmatpush1.bf16.msra.mxu0 %v1599
    %1644 = vmatprep.subr.bf16.mxu0 0
    %1645 = vmatpush1.bf16.msra.mxu0 %v1600
    %1646 = vmatprep.subr.bf16.mxu0 0
    %1647 = vmatpush1.bf16.msra.mxu0 %v1601
    %1648 = vmatprep.subr.bf16.mxu0 0
    %1649 = vmatpush1.bf16.msra.mxu0 %v1602
    %1650 = vmatprep.subr.bf16.mxu0 0
    %1651 = vmatpush1.bf16.msra.mxu0 %v1603
    %1652 = vmatprep.mubr.bf16.mxu0 %v1484
    %1653 = vmatmul.mubr.bf16.gmra.mrb[0].mxu0 %v1483
    %v1654 = vpop.f32.mrb[0].mxu0
    %v1655 = vadd.f32 %v1522, %v1654
    %v1656 = vpop.f32.mrb[0].mxu0
    %v1657 = vpop.f32.mrb[0].mxu0
    %v1658 = vpop.f32.mrb[0].mxu0
    %1659 = vdwg.mxu0
    %1660 = vst [vmem:[#allocation17] sm:$0x3] %v1655
    // Predicated region
    $region74: #{bert_net_forward.23} parent=1 // pred_check
      _
    $region75: #{bert_net_forward.23} parent=1 // pred_check_branch
      %1662 = sbr.rel (0) target = $region77
    $region76: #{bert_net_forward.23} parent=1 // pred_region
      %s1664 = ssub.s32 32, 32
      %1665 = vsyncadd [#allocation4], %s1664
      %s1667 = sshll.u32 [#allocation17], 4
      %s1668 = int_to_ptr.vmem [resolvable:$true] %s1667
      %1670 = dma.vmem_to_hbm [thread:$0]  %s1668, 32, %s9, [#allocation4]
    $region77: #{bert_net_forward.23} parent=1 // pred_fallthru
      _
    // Predicated region
    $region78: #{bert_net_forward.23} parent=1 // pred_check
      _
    $region79: #{bert_net_forward.23} parent=1 // pred_check_branch
      %1672 = sbr.rel (0) target = $region81
    $region80: #{bert_net_forward.23} parent=1 // pred_region
      %1673 = dma.done [#allocation4], 32
    $region81: #{bert_net_forward.23} parent=1 // pred_fallthru
      _
    %1674 = vsyncpa [#allocation3], 1
    %1675 = vsyncpa [#allocation6], 1
    %1676 = vsyncpa [#allocation9], 1
    %1677 = vsyncpa [#allocation12], 1
    %1678 = vsyncpa [#allocation15], 1
    %1679 = vsyncpa [#allocation4], 1

</llo_original>
